<compile_context>
chip_gen: v5e
topology: v5e:2x2
jax: 0.10.0
libtpu: 0.0.40
codegen_flags: <defaults>
</compile_context>

<pallas_src>
import functools

import jax
import jax.numpy as jnp
from jax import lax
from jax.experimental import pallas as pl
from jax.experimental.pallas import tpu as pltpu


def _grvq_kernel(x_ref, wd_ref, wg_ref, hsq_ref, *out_refs,
                 groups, num_quantizers, codebook_size, dim,
                 emit_residuals, lane_dense_idx, matmul_dtype):
    """Fused grouped residual-VQ chain for one tile of flattened tokens.

    x_ref   : (TN, dim)          f32  input tile (dim = groups * Dg)
    wd_ref  : (Q, dim, G*C)      matmul_dtype  block-diag codebook^T (search)
    wg_ref  : (Q, G*C, dim)      f32  block-diag codebook (gather)
    hsq_ref : (Q, 1, G*C)        f32  0.5 * ||e||^2 per code
    outputs : quant (TN, dim), indices (G*Q, TN) or (TN, G*Q),
              [residuals (Q-1, TN, dim)], loss partials (1, 8, 128)
    """
    if emit_residuals:
        quant_ref, ind_ref, resid_ref, loss_ref = out_refs
    else:
        quant_ref, ind_ref, loss_ref = out_refs
        resid_ref = None

    G, Q, C = groups, num_quantizers, codebook_size
    GC = G * C
    Dg = dim // G
    TN = x_ref.shape[0]

    x = x_ref[...]                                           # (TN, dim) f32
    residual = x
    iota_gc = lax.broadcasted_iota(jnp.int32, (TN, GC), 1)   # global code column
    # loss-partial packing masks (one (8,128) slab per tile, lane col = q*G+g)
    row_i = lax.broadcasted_iota(jnp.int32, (8, 128), 0)
    lane_i = lax.broadcasted_iota(jnp.int32, (8, 128), 1)
    loss_acc = jnp.zeros((8, 128), jnp.float32)

    for q in range(Q):
        if emit_residuals and q > 0:
            # residual entering quantizer q (residual_0 == x is spliced in by the
            # wrapper -> no HBM write for it)
            resid_ref[q - 1] = residual

        # ---- nearest-code search: one block-diagonal matmul on the MXU -------
        scores = lax.dot_general(
            residual.astype(matmul_dtype), wd_ref[q],
            (((1,), (0,)), ((), ())),
            preferred_element_type=jnp.float32)              # (TN, GC)
        dist = hsq_ref[q] - scores        # 0.5||e||^2 - r.e : same argmin as L2

        onehot = jnp.zeros((TN, GC), jnp.float32)
        for g in range(G):
            col = q * G + g
            dg = dist[:, g * C:(g + 1) * C]                              # (TN, C)
            idx = jnp.argmin(dg, axis=1, keepdims=True).astype(jnp.int32)
            if lane_dense_idx:
                ind_ref[col, :] = idx[:, 0]     # lane-dense row store, immediate
            else:
                ind_ref[:, col] = idx[:, 0]
            # exactly one hot column inside group g's block of the G*C space
            onehot = onehot + (iota_gc == (idx + g * C)).astype(jnp.float32)

        # ---- gather codes + residual update (exact f32 block-diag matmul) ----
        quant = lax.dot_general(onehot, wg_ref[q], (((1,), (0,)), ((), ())),
                                preferred_element_type=jnp.float32)  # (TN, dim)
        new_residual = residual - quant

        # ---- per-(g, q) commit-loss partial sums for this tile ---------------
        for g in range(G):
            col = q * G + g
            d = new_residual[:, g * Dg:(g + 1) * Dg]
            lsum = jnp.sum(d * d)
            sel = ((row_i == (col // 128)) &
                   (lane_i == (col % 128))).astype(jnp.float32)
            loss_acc = loss_acc + sel * lsum

        residual = new_residual

    # quantized_out = sum_q quant_q = x - final residual
    quant_ref[...] = (x - residual).astype(quant_ref.dtype)
    loss_ref[0] = loss_acc


def _vmem_capacity_bytes():
    try:
        return int(pltpu.get_tpu_info().vmem_capacity_bytes)
    except Exception:
        return 64 << 20   # conservative fallback: v7x per-core VMEM


def _vmem_bytes_estimate(tn, *, dim, G, Q, C, emit_residuals, mm_itemsize,
                         single_buffer_codebook):
    GC, f32 = G * C, 4
    nbuf = 1 if single_buffer_codebook else 2
    wd = nbuf * Q * dim * GC * mm_itemsize
    wg = nbuf * Q * GC * dim * f32
    hs = nbuf * Q * GC * f32
    # x in + quant out + (Q-1) residual slabs, each double-buffered
    io = 2 * tn * dim * f32 * (2 + ((Q - 1) if emit_residuals else 0))
    idx = 2 * tn * G * Q * 4
    loss = 2 * 8 * 128 * f32
    work = (4 * tn * GC + 6 * tn * dim) * f32
    return wd + wg + hs + io + idx + loss + work + (64 << 10)


def _pick_tile_n(total, requested, est_fn, budget):
    """Largest multiple-of-8 divisor of total (prefer 128-aligned) within budget."""
    cands = [d for d in range(min(requested, total), 7, -1)
             if total % d == 0 and d % 8 == 0]
    if not cands:
        raise ValueError(
            f"B*N={total} has no tile size that is a multiple of 8; pad the input.")
    lane_ok = [d for d in cands if d % 128 == 0 or d == total]
    for d in lane_ok + cands:
        if est_fn(d) <= budget:
            return d
    return cands[-1]   # best effort


def grouped_residual_vq(x, codebooks, *, tile_n=512, return_all_residuals=True,
                        matmul_dtype=jnp.bfloat16, single_buffer_codebook=True):
    """Forward pass of GroupedResidualVQ (eval-mode semantics, no projections).

    x         : (B, N, dim) float
    codebooks : (groups, num_quantizers, codebook_size, dim // groups) float
    returns (quantized, all_indices, commit_losses[, all_residuals])
      quantized     : (B, N, dim) f32
      all_indices   : (groups, B, N, num_quantizers) int32
      commit_losses : (groups, 1, num_quantizers) f32
      all_residuals : tuple per group of (num_quantizers, B, N, dim // groups)
    """
    B, N, dim = x.shape
    G, Q, C, Dg = codebooks.shape
    assert dim == G * Dg, "dim must equal groups * dim_per_group"
    assert G * Q <= 1024, "too many (group, quantizer) pairs for loss packing"
    BN = B * N
    GC = G * C
    emit_res = return_all_residuals and Q > 1

    mm_itemsize = jnp.dtype(matmul_dtype).itemsize
    vmem_cap = _vmem_capacity_bytes()
    budget = vmem_cap - (8 << 20)                      # ~56 MiB on v7x, 120 on v5e/v6e
    est_fn = functools.partial(
        _vmem_bytes_estimate, dim=dim, G=G, Q=Q, C=C, emit_residuals=emit_res,
        mm_itemsize=mm_itemsize, single_buffer_codebook=single_buffer_codebook)
    tn = _pick_tile_n(BN, tile_n, est_fn, budget)
    num_tiles = BN // tn
    lane_dense_pref = (tn % 128 == 0) or (tn == BN)

    x_flat = x.reshape(BN, dim).astype(jnp.float32)
    cb = codebooks.astype(jnp.float32)

    # Block-diagonal codebook weights:
    #   wd[q, g*Dg:(g+1)*Dg, g*C:(g+1)*C] = cb[g, q].T   (search, matmul_dtype)
    #   wg[q, g*C:(g+1)*C, g*Dg:(g+1)*Dg] = cb[g, q]     (gather, f32)
    wd = jnp.zeros((Q, dim, GC), jnp.float32)
    wg = jnp.zeros((Q, GC, dim), jnp.float32)
    for g in range(G):
        wd = wd.at[:, g * Dg:(g + 1) * Dg, g * C:(g + 1) * C].set(
            jnp.transpose(cb[g], (0, 2, 1)))
        wg = wg.at[:, g * C:(g + 1) * C, g * Dg:(g + 1) * Dg].set(cb[g])
    hsq = jnp.transpose(0.5 * jnp.sum(cb * cb, axis=-1), (1, 0, 2)).reshape(Q, 1, GC)
    wd = wd.astype(matmul_dtype)

    vmem_est = est_fn(tn)
    vmem_limit = int(min(max(vmem_est * 5 // 4 + (2 << 20), 32 << 20),
                         vmem_cap - (4 << 20)))
    compiler_params = pltpu.CompilerParams(
        dimension_semantics=("parallel",),        # per-tile outputs -> megacore OK
        vmem_limit_bytes=vmem_limit)

    def _attempt(single_buffer, lane_dense):
        kernel = functools.partial(
            _grvq_kernel, groups=G, num_quantizers=Q, codebook_size=C, dim=dim,
            emit_residuals=emit_res, lane_dense_idx=lane_dense,
            matmul_dtype=matmul_dtype)

        def const_spec(shape):
            idx_map = lambda i: (0,) * len(shape)
            if single_buffer:
                return pl.BlockSpec(shape, idx_map, pipeline_mode=pl.Buffered(1))
            return pl.BlockSpec(shape, idx_map)

        in_specs = [
            pl.BlockSpec((tn, dim), lambda i: (i, 0)),
            const_spec((Q, dim, GC)),
            const_spec((Q, GC, dim)),
            const_spec((Q, 1, GC)),
        ]
        out_shape = [jax.ShapeDtypeStruct((BN, dim), jnp.float32)]
        out_specs = [pl.BlockSpec((tn, dim), lambda i: (i, 0))]
        if lane_dense:
            out_shape.append(jax.ShapeDtypeStruct((G * Q, BN), jnp.int32))
            out_specs.append(pl.BlockSpec((G * Q, tn), lambda i: (0, i)))
        else:
            out_shape.append(jax.ShapeDtypeStruct((BN, G * Q), jnp.int32))
            out_specs.append(pl.BlockSpec((tn, G * Q), lambda i: (i, 0)))
        if emit_res:
            out_shape.append(jax.ShapeDtypeStruct((Q - 1, BN, dim), jnp.float32))
            out_specs.append(pl.BlockSpec((Q - 1, tn, dim), lambda i: (0, i, 0)))
        # per-tile commit-loss partial sums (reduced outside the kernel)
        out_shape.append(jax.ShapeDtypeStruct((num_tiles, 8, 128), jnp.float32))
        out_specs.append(pl.BlockSpec((1, 8, 128), lambda i: (i, 0, 0)))

        grid_spec = pltpu.PrefetchScalarGridSpec(
            num_scalar_prefetch=0, grid=(num_tiles,),
            in_specs=in_specs, out_specs=out_specs)
        res = pl.pallas_call(kernel, out_shape=tuple(out_shape),
                             grid_spec=grid_spec,
                             compiler_params=compiler_params)(x_flat, wd, wg, hsq)
        jax.block_until_ready(res)
        return res

    # Preferred config first; fall back if this jax/libtpu build rejects
    # Buffered(1) single-buffering or the lane-dense index relayout.
    configs = []
    if single_buffer_codebook:
        configs.append((True, lane_dense_pref))
    configs.append((False, lane_dense_pref))
    if lane_dense_pref:
        configs.append((False, False))
    outs, used_lane_dense, last_err = None, lane_dense_pref, None
    for sb, ld in configs:
        try:
            outs = _attempt(sb, ld)
            used_lane_dense = ld
            break
        except Exception as e:   # pragma: no cover - config fallback
            last_err = e
    if outs is None:
        raise last_err

    if emit_res:
        quant, inds, resid, loss_part = outs
    else:
        quant, inds, loss_part = outs
        resid = None

    quantized = quant.reshape(B, N, dim)
    if used_lane_dense:
        all_indices = jnp.transpose(inds.reshape(Q, G, B, N), (1, 2, 3, 0))
    else:
        all_indices = jnp.transpose(inds.reshape(B, N, Q, G), (3, 0, 1, 2))

    inv_count = 1.0 / float(BN * Dg)
    loss_flat = loss_part.sum(axis=0).reshape(-1)[:G * Q]           # col = q*G + g
    losses = jnp.transpose(loss_flat.reshape(Q, G)) * inv_count     # (G, Q)
    commit_losses = losses[:, None, :]                               # (G, 1, Q)

    if not return_all_residuals:
        return quantized, all_indices, commit_losses

    if Q > 1:
        r_full = jnp.concatenate([x_flat[None], resid], axis=0)     # (Q, BN, dim)
    else:
        r_full = x_flat[None]
    r_full = r_full.reshape(Q, B, N, G, Dg)
    all_residuals = tuple(r_full[:, :, :, g, :] for g in range(G))
    return quantized, all_indices, commit_losses, all_residuals


def _ref_forward(x, codebooks):
    """Pure-JAX reference of the same forward pass (f32 everywhere)."""
    G, Q, C, Dg = codebooks.shape
    B, N, dim = x.shape
    xg = x.reshape(B, N, G, Dg)
    quants, inds, losses, resids = [], [], [], []
    for g in range(G):
        residual = xg[:, :, g, :]
        qout = jnp.zeros_like(residual)
        gi, gl, gr = [], [], []
        for q in range(Q):
            gr.append(residual)
            e = codebooks[g, q]
            d = (-2.0 * jnp.einsum('bnd,cd->bnc', residual, e)
                 + jnp.sum(e * e, -1)[None, None, :])
            idx = jnp.argmin(d, -1)
            quant = e[idx]
            gl.append(jnp.mean((quant - residual) ** 2))
            gi.append(idx)
            qout = qout + quant
            residual = residual - quant
        quants.append(qout)
        inds.append(jnp.stack(gi, -1))
        losses.append(jnp.stack(gl)[None, :])
        resids.append(jnp.stack(gr))
    return (jnp.concatenate(quants, -1), jnp.stack(inds),
            jnp.stack(losses), tuple(resids))


if __name__ == "__main__":
    key = jax.random.PRNGKey(0)
    k_x, k_cb = jax.random.split(key)

    B, N, dim = 2, 64, 64
    groups, num_quantizers, codebook_size = 2, 2, 64
    Dg = dim // groups

    x = jax.random.normal(k_x, (B, N, dim), dtype=jnp.float32)
    codebooks = jax.random.normal(
        k_cb, (groups, num_quantizers, codebook_size, Dg), dtype=jnp.float32)

    # ---- exact-parity path (f32 distance matmul) vs the pure-JAX reference ----
    quantized, all_indices, commit_losses, all_residuals = grouped_residual_vq(
        x, codebooks, matmul_dtype=jnp.float32)
    jax.block_until_ready(quantized)

    rq, ri, rl, rr = _ref_forward(x, codebooks)
    assert quantized.shape == (B, N, dim)
    assert all_indices.shape == (groups, B, N, num_quantizers)
    assert commit_losses.shape == (groups, 1, num_quantizers)
    assert jnp.allclose(quantized, rq, atol=1e-4, rtol=1e-4)
    assert jnp.all(all_indices == ri)
    assert jnp.allclose(commit_losses, rl, atol=1e-5, rtol=1e-4)
    for got, want in zip(all_residuals, rr):
        assert jnp.allclose(got, want, atol=1e-4, rtol=1e-4)

    # ---- fast path: default bf16 MXU search, no residual write-back ----------
    q2, i2, l2 = grouped_residual_vq(x, codebooks, return_all_residuals=False)
    jax.block_until_ready(q2)
    assert q2.shape == (B, N, dim)
    assert i2.shape == (groups, B, N, num_quantizers) and i2.dtype == jnp.int32
    assert bool(jnp.all((i2 >= 0) & (i2 < codebook_size)))
    assert bool(jnp.all(jnp.isfinite(l2)))
    # bf16 scores may flip near-tie argmins vs f32, so check internal consistency:
    # quantized must equal the sum of the codes addressed by the returned indices.
    recon = []
    for g in range(groups):
        codes = jnp.stack(
            [codebooks[g, q][i2[g, ..., q]] for q in range(num_quantizers)], 0)
        recon.append(codes.sum(0))
    recon = jnp.concatenate(recon, axis=-1)
    assert jnp.allclose(q2, recon, atol=1e-4, rtol=1e-4)

    print("KERNEL_OK")
</pallas_src>

<mosaic_0001>
module attributes {stable_mosaic.version = 11 : i64} {
  func.func @_grvq_kernel(%arg0: i32, %arg1: memref<128x64xf32, #tpu.memory_space<vmem>>, %arg2: memref<2x64x128xf32, #tpu.memory_space<vmem>>, %arg3: memref<2x128x64xf32, #tpu.memory_space<vmem>>, %arg4: memref<2x1x128xf32, #tpu.memory_space<vmem>>, %arg5: memref<128x64xf32, #tpu.memory_space<vmem>>, %arg6: memref<4x128xi32, #tpu.memory_space<vmem>>, %arg7: memref<1x128x64xf32, #tpu.memory_space<vmem>>, %arg8: memref<1x8x128xf32, #tpu.memory_space<vmem>>) attributes {dimension_semantics = [#tpu.dimension_semantics<parallel>], iteration_bounds = array<i64: 1>, scalar_prefetch = 0 : i64, scratch_operands = 0 : i64, tpu.core_type = #tpu.core_type<tc>, window_params = [{transform_indices = @transform_0, window_bounds = array<i64: 128, 64>}, {pipeline_mode = #tpu.pipeline_mode<synchronous>, transform_indices = @transform_1, window_bounds = array<i64: 2, 64, 128>}, {pipeline_mode = #tpu.pipeline_mode<synchronous>, transform_indices = @transform_2, window_bounds = array<i64: 2, 128, 64>}, {pipeline_mode = #tpu.pipeline_mode<synchronous>, transform_indices = @transform_3, window_bounds = array<i64: 2, 1, 128>}, {transform_indices = @transform_4, window_bounds = array<i64: 128, 64>}, {transform_indices = @transform_5, window_bounds = array<i64: 4, 128>}, {transform_indices = @transform_6, window_bounds = array<i64: 1, 128, 64>}, {transform_indices = @transform_7, window_bounds = array<i64: 1, 8, 128>}]} {
    %c0 = arith.constant 0 : index
    %c0_0 = arith.constant 0 : index
    %0 = vector.load %arg1[%c0, %c0_0] : memref<128x64xf32, #tpu.memory_space<vmem>>, vector<128x64xf32>
    %1 = tpu.iota {dimensions = array<i32: 1>} : vector<128x128xi32>
    %2 = tpu.iota {dimensions = array<i32: 0>} : vector<8x128xi32>
    %3 = tpu.iota {dimensions = array<i32: 1>} : vector<8x128xi32>
    %cst = arith.constant 0.000000e+00 : f32
    %4 = vector.broadcast %cst : f32 to vector<8x128xf32>
    %c0_1 = arith.constant 0 : index
    %c0_2 = arith.constant 0 : index
    %c0_3 = arith.constant 0 : index
    %5 = vector.load %arg2[%c0_1, %c0_2, %c0_3] : memref<2x64x128xf32, #tpu.memory_space<vmem>>, vector<1x64x128xf32>
    %6 = vector.shape_cast %5 : vector<1x64x128xf32> to vector<64x128xf32>
    %cst_4 = arith.constant dense<0.000000e+00> : vector<128x128xf32>
    %7 = tpu.matmul %0, %6, %cst_4 {dimension_numbers = #tpu.dot_dimension_numbers<[1], [0], [0], [1], [0, 0, 1, 1], [], []>} : vector<128x64xf32>, vector<64x128xf32>, vector<128x128xf32> -> vector<128x128xf32>
    %c0_5 = arith.constant 0 : index
    %c0_6 = arith.constant 0 : index
    %c0_7 = arith.constant 0 : index
    %8 = vector.load %arg4[%c0_5, %c0_6, %c0_7] : memref<2x1x128xf32, #tpu.memory_space<vmem>>, vector<1x1x128xf32>
    %9 = vector.shape_cast %8 : vector<1x1x128xf32> to vector<1x128xf32>
    %10 = vector.broadcast %9 : vector<1x128xf32> to vector<128x128xf32>
    %11 = arith.subf %10, %7 : vector<128x128xf32>
    %cst_8 = arith.constant 0.000000e+00 : f32
    %12 = vector.broadcast %cst_8 : f32 to vector<128x128xf32>
    %13 = vector.extract_strided_slice %11 {offsets = [0, 0], sizes = [128, 64], strides = [1, 1]} : vector<128x128xf32> to vector<128x64xf32>
    %14 = tpu.reduce_index %13 {axis = 1 : i32, kind = #tpu.reduction_kind<arg_min>} : vector<128x64xf32> -> vector<128xi32>
    %15 = vector.shape_cast %14 : vector<128xi32> to vector<128x1xi32>
    %16 = vector.shape_cast %15 : vector<128x1xi32> to vector<128xi32>
    %c0_9 = arith.constant 0 : index
    %c0_10 = arith.constant 0 : index
    %17 = vector.load %arg6[%c0_9, %c0_10] : memref<4x128xi32, #tpu.memory_space<vmem>>, vector<1x128xi32>
    %18 = vector.shape_cast %17 : vector<1x128xi32> to vector<128xi32>
    %19 = vector.shape_cast %16 : vector<128xi32> to vector<1x128xi32>
    tpu.vector_store %arg6[%c0_9, %c0_10], %19 {strides = array<i32>} : memref<4x128xi32, #tpu.memory_space<vmem>>, vector<1x128xi32>,
    %c0_i32 = arith.constant 0 : i32
    %20 = vector.broadcast %c0_i32 : i32 to vector<128x1xi32>
    %21 = arith.addi %15, %20 : vector<128x1xi32>
    %22 = vector.broadcast %21 : vector<128x1xi32> to vector<128x128xi32>
    %23 = arith.cmpi eq, %1, %22 : vector<128x128xi32>
    %24 = arith.extui %23 : vector<128x128xi1> to vector<128x128xi32>
    %25 = arith.sitofp %24 : vector<128x128xi32> to vector<128x128xf32>
    %26 = arith.addf %12, %25 : vector<128x128xf32>
    %27 = vector.extract_strided_slice %11 {offsets = [0, 64], sizes = [128, 64], strides = [1, 1]} : vector<128x128xf32> to vector<128x64xf32>
    %28 = tpu.reduce_index %27 {axis = 1 : i32, kind = #tpu.reduction_kind<arg_min>} : vector<128x64xf32> -> vector<128xi32>
    %29 = vector.shape_cast %28 : vector<128xi32> to vector<128x1xi32>
    %30 = vector.shape_cast %29 : vector<128x1xi32> to vector<128xi32>
    %c1 = arith.constant 1 : index
    %c0_11 = arith.constant 0 : index
    %31 = vector.load %arg6[%c1, %c0_11] : memref<4x128xi32, #tpu.memory_space<vmem>>, vector<1x128xi32>
    %32 = vector.shape_cast %31 : vector<1x128xi32> to vector<128xi32>
    %33 = vector.shape_cast %30 : vector<128xi32> to vector<1x128xi32>
    tpu.vector_store %arg6[%c1, %c0_11], %33 {strides = array<i32>} : memref<4x128xi32, #tpu.memory_space<vmem>>, vector<1x128xi32>,
    %c64_i32 = arith.constant 64 : i32
    %34 = vector.broadcast %c64_i32 : i32 to vector<128x1xi32>
    %35 = arith.addi %29, %34 : vector<128x1xi32>
    %36 = vector.broadcast %35 : vector<128x1xi32> to vector<128x128xi32>
    %37 = arith.cmpi eq, %1, %36 : vector<128x128xi32>
    %38 = arith.extui %37 : vector<128x128xi1> to vector<128x128xi32>
    %39 = arith.sitofp %38 : vector<128x128xi32> to vector<128x128xf32>
    %40 = arith.addf %26, %39 : vector<128x128xf32>
    %c0_12 = arith.constant 0 : index
    %c0_13 = arith.constant 0 : index
    %c0_14 = arith.constant 0 : index
    %41 = vector.load %arg3[%c0_12, %c0_13, %c0_14] : memref<2x128x64xf32, #tpu.memory_space<vmem>>, vector<1x128x64xf32>
    %42 = vector.shape_cast %41 : vector<1x128x64xf32> to vector<128x64xf32>
    %cst_15 = arith.constant dense<0.000000e+00> : vector<128x64xf32>
    %43 = tpu.matmul %40, %42, %cst_15 {dimension_numbers = #tpu.dot_dimension_numbers<[1], [0], [0], [1], [0, 0, 1, 1], [], []>} : vector<128x128xf32>, vector<128x64xf32>, vector<128x64xf32> -> vector<128x64xf32>
    %44 = arith.subf %0, %43 : vector<128x64xf32>
    %45 = vector.extract_strided_slice %44 {offsets = [0, 0], sizes = [128, 32], strides = [1, 1]} : vector<128x64xf32> to vector<128x32xf32>
    %46 = arith.mulf %45, %45 : vector<128x32xf32>
    %47 = vector.shape_cast %46 : vector<128x32xf32> to vector<1x128x32xf32>
    %cst_16 = arith.constant dense<0.000000e+00> : vector<1xf32>
    %48 = vector.multi_reduction <add>, %47, %cst_16 [1, 2] : vector<1x128x32xf32> to vector<1xf32>
    %49 = vector.shape_cast %48 : vector<1xf32> to vector<1x1x1xf32>
    %50 = vector.extract %49[0, 0, 0] : f32 from vector<1x1x1xf32>
    %c0_i32_17 = arith.constant 0 : i32
    %51 = vector.broadcast %c0_i32_17 : i32 to vector<8x128xi32>
    %52 = arith.cmpi eq, %2, %51 : vector<8x128xi32>
    %c0_i32_18 = arith.constant 0 : i32
    %53 = vector.broadcast %c0_i32_18 : i32 to vector<8x128xi32>
    %54 = arith.cmpi eq, %3, %53 : vector<8x128xi32>
    %55 = arith.andi %52, %54 : vector<8x128xi1>
    %56 = arith.extui %55 : vector<8x128xi1> to vector<8x128xi32>
    %57 = arith.sitofp %56 : vector<8x128xi32> to vector<8x128xf32>
    %58 = vector.broadcast %50 : f32 to vector<8x128xf32>
    %59 = arith.mulf %57, %58 : vector<8x128xf32>
    %60 = arith.addf %4, %59 : vector<8x128xf32>
    %61 = vector.extract_strided_slice %44 {offsets = [0, 32], sizes = [128, 32], strides = [1, 1]} : vector<128x64xf32> to vector<128x32xf32>
    %62 = arith.mulf %61, %61 : vector<128x32xf32>
    %63 = vector.shape_cast %62 : vector<128x32xf32> to vector<1x128x32xf32>
    %cst_19 = arith.constant dense<0.000000e+00> : vector<1xf32>
    %64 = vector.multi_reduction <add>, %63, %cst_19 [1, 2] : vector<1x128x32xf32> to vector<1xf32>
    %65 = vector.shape_cast %64 : vector<1xf32> to vector<1x1x1xf32>
    %66 = vector.extract %65[0, 0, 0] : f32 from vector<1x1x1xf32>
    %c0_i32_20 = arith.constant 0 : i32
    %67 = vector.broadcast %c0_i32_20 : i32 to vector<8x128xi32>
    %68 = arith.cmpi eq, %2, %67 : vector<8x128xi32>
    %c1_i32 = arith.constant 1 : i32
    %69 = vector.broadcast %c1_i32 : i32 to vector<8x128xi32>
    %70 = arith.cmpi eq, %3, %69 : vector<8x128xi32>
    %71 = arith.andi %68, %70 : vector<8x128xi1>
    %72 = arith.extui %71 : vector<8x128xi1> to vector<8x128xi32>
    %73 = arith.sitofp %72 : vector<8x128xi32> to vector<8x128xf32>
    %74 = vector.broadcast %66 : f32 to vector<8x128xf32>
    %75 = arith.mulf %73, %74 : vector<8x128xf32>
    %76 = arith.addf %60, %75 : vector<8x128xf32>
    %c0_21 = arith.constant 0 : index
    %c0_22 = arith.constant 0 : index
    %c0_23 = arith.constant 0 : index
    %77 = vector.load %arg7[%c0_21, %c0_22, %c0_23] : memref<1x128x64xf32, #tpu.memory_space<vmem>>, vector<1x128x64xf32>
    %78 = vector.shape_cast %77 : vector<1x128x64xf32> to vector<128x64xf32>
    %79 = vector.shape_cast %44 : vector<128x64xf32> to vector<1x128x64xf32>
    tpu.vector_store %arg7[%c0_21, %c0_22, %c0_23], %79 {strides = array<i32>} : memref<1x128x64xf32, #tpu.memory_space<vmem>>, vector<1x128x64xf32>,
    %c1_24 = arith.constant 1 : index
    %c0_25 = arith.constant 0 : index
    %c0_26 = arith.constant 0 : index
    %80 = vector.load %arg2[%c1_24, %c0_25, %c0_26] : memref<2x64x128xf32, #tpu.memory_space<vmem>>, vector<1x64x128xf32>
    %81 = vector.shape_cast %80 : vector<1x64x128xf32> to vector<64x128xf32>
    %cst_27 = arith.constant dense<0.000000e+00> : vector<128x128xf32>
    %82 = tpu.matmul %44, %81, %cst_27 {dimension_numbers = #tpu.dot_dimension_numbers<[1], [0], [0], [1], [0, 0, 1, 1], [], []>} : vector<128x64xf32>, vector<64x128xf32>, vector<128x128xf32> -> vector<128x128xf32>
    %c1_28 = arith.constant 1 : index
    %c0_29 = arith.constant 0 : index
    %c0_30 = arith.constant 0 : index
    %83 = vector.load %arg4[%c1_28, %c0_29, %c0_30] : memref<2x1x128xf32, #tpu.memory_space<vmem>>, vector<1x1x128xf32>
    %84 = vector.shape_cast %83 : vector<1x1x128xf32> to vector<1x128xf32>
    %85 = vector.broadcast %84 : vector<1x128xf32> to vector<128x128xf32>
    %86 = arith.subf %85, %82 : vector<128x128xf32>
    %cst_31 = arith.constant 0.000000e+00 : f32
    %87 = vector.broadcast %cst_31 : f32 to vector<128x128xf32>
    %88 = vector.extract_strided_slice %86 {offsets = [0, 0], sizes = [128, 64], strides = [1, 1]} : vector<128x128xf32> to vector<128x64xf32>
    %89 = tpu.reduce_index %88 {axis = 1 : i32, kind = #tpu.reduction_kind<arg_min>} : vector<128x64xf32> -> vector<128xi32>
    %90 = vector.shape_cast %89 : vector<128xi32> to vector<128x1xi32>
    %91 = vector.shape_cast %90 : vector<128x1xi32> to vector<128xi32>
    %c2 = arith.constant 2 : index
    %c0_32 = arith.constant 0 : index
    %92 = vector.load %arg6[%c2, %c0_32] : memref<4x128xi32, #tpu.memory_space<vmem>>, vector<1x128xi32>
    %93 = vector.shape_cast %92 : vector<1x128xi32> to vector<128xi32>
    %94 = vector.shape_cast %91 : vector<128xi32> to vector<1x128xi32>
    tpu.vector_store %arg6[%c2, %c0_32], %94 {strides = array<i32>} : memref<4x128xi32, #tpu.memory_space<vmem>>, vector<1x128xi32>,
    %c0_i32_33 = arith.constant 0 : i32
    %95 = vector.broadcast %c0_i32_33 : i32 to vector<128x1xi32>
    %96 = arith.addi %90, %95 : vector<128x1xi32>
    %97 = vector.broadcast %96 : vector<128x1xi32> to vector<128x128xi32>
    %98 = arith.cmpi eq, %1, %97 : vector<128x128xi32>
    %99 = arith.extui %98 : vector<128x128xi1> to vector<128x128xi32>
    %100 = arith.sitofp %99 : vector<128x128xi32> to vector<128x128xf32>
    %101 = arith.addf %87, %100 : vector<128x128xf32>
    %102 = vector.extract_strided_slice %86 {offsets = [0, 64], sizes = [128, 64], strides = [1, 1]} : vector<128x128xf32> to vector<128x64xf32>
    %103 = tpu.reduce_index %102 {axis = 1 : i32, kind = #tpu.reduction_kind<arg_min>} : vector<128x64xf32> -> vector<128xi32>
    %104 = vector.shape_cast %103 : vector<128xi32> to vector<128x1xi32>
    %105 = vector.shape_cast %104 : vector<128x1xi32> to vector<128xi32>
    %c3 = arith.constant 3 : index
    %c0_34 = arith.constant 0 : index
    %106 = vector.load %arg6[%c3, %c0_34] : memref<4x128xi32, #tpu.memory_space<vmem>>, vector<1x128xi32>
    %107 = vector.shape_cast %106 : vector<1x128xi32> to vector<128xi32>
    %108 = vector.shape_cast %105 : vector<128xi32> to vector<1x128xi32>
    tpu.vector_store %arg6[%c3, %c0_34], %108 {strides = array<i32>} : memref<4x128xi32, #tpu.memory_space<vmem>>, vector<1x128xi32>,
    %c64_i32_35 = arith.constant 64 : i32
    %109 = vector.broadcast %c64_i32_35 : i32 to vector<128x1xi32>
    %110 = arith.addi %104, %109 : vector<128x1xi32>
    %111 = vector.broadcast %110 : vector<128x1xi32> to vector<128x128xi32>
    %112 = arith.cmpi eq, %1, %111 : vector<128x128xi32>
    %113 = arith.extui %112 : vector<128x128xi1> to vector<128x128xi32>
    %114 = arith.sitofp %113 : vector<128x128xi32> to vector<128x128xf32>
    %115 = arith.addf %101, %114 : vector<128x128xf32>
    %c1_36 = arith.constant 1 : index
    %c0_37 = arith.constant 0 : index
    %c0_38 = arith.constant 0 : index
    %116 = vector.load %arg3[%c1_36, %c0_37, %c0_38] : memref<2x128x64xf32, #tpu.memory_space<vmem>>, vector<1x128x64xf32>
    %117 = vector.shape_cast %116 : vector<1x128x64xf32> to vector<128x64xf32>
    %cst_39 = arith.constant dense<0.000000e+00> : vector<128x64xf32>
    %118 = tpu.matmul %115, %117, %cst_39 {dimension_numbers = #tpu.dot_dimension_numbers<[1], [0], [0], [1], [0, 0, 1, 1], [], []>} : vector<128x128xf32>, vector<128x64xf32>, vector<128x64xf32> -> vector<128x64xf32>
    %119 = arith.subf %44, %118 : vector<128x64xf32>
    %120 = vector.extract_strided_slice %119 {offsets = [0, 0], sizes = [128, 32], strides = [1, 1]} : vector<128x64xf32> to vector<128x32xf32>
    %121 = arith.mulf %120, %120 : vector<128x32xf32>
    %122 = vector.shape_cast %121 : vector<128x32xf32> to vector<1x128x32xf32>
    %cst_40 = arith.constant dense<0.000000e+00> : vector<1xf32>
    %123 = vector.multi_reduction <add>, %122, %cst_40 [1, 2] : vector<1x128x32xf32> to vector<1xf32>
    %124 = vector.shape_cast %123 : vector<1xf32> to vector<1x1x1xf32>
    %125 = vector.extract %124[0, 0, 0] : f32 from vector<1x1x1xf32>
    %c0_i32_41 = arith.constant 0 : i32
    %126 = vector.broadcast %c0_i32_41 : i32 to vector<8x128xi32>
    %127 = arith.cmpi eq, %2, %126 : vector<8x128xi32>
    %c2_i32 = arith.constant 2 : i32
    %128 = vector.broadcast %c2_i32 : i32 to vector<8x128xi32>
    %129 = arith.cmpi eq, %3, %128 : vector<8x128xi32>
    %130 = arith.andi %127, %129 : vector<8x128xi1>
    %131 = arith.extui %130 : vector<8x128xi1> to vector<8x128xi32>
    %132 = arith.sitofp %131 : vector<8x128xi32> to vector<8x128xf32>
    %133 = vector.broadcast %125 : f32 to vector<8x128xf32>
    %134 = arith.mulf %132, %133 : vector<8x128xf32>
    %135 = arith.addf %76, %134 : vector<8x128xf32>
    %136 = vector.extract_strided_slice %119 {offsets = [0, 32], sizes = [128, 32], strides = [1, 1]} : vector<128x64xf32> to vector<128x32xf32>
    %137 = arith.mulf %136, %136 : vector<128x32xf32>
    %138 = vector.shape_cast %137 : vector<128x32xf32> to vector<1x128x32xf32>
    %cst_42 = arith.constant dense<0.000000e+00> : vector<1xf32>
    %139 = vector.multi_reduction <add>, %138, %cst_42 [1, 2] : vector<1x128x32xf32> to vector<1xf32>
    %140 = vector.shape_cast %139 : vector<1xf32> to vector<1x1x1xf32>
    %141 = vector.extract %140[0, 0, 0] : f32 from vector<1x1x1xf32>
    %c0_i32_43 = arith.constant 0 : i32
    %142 = vector.broadcast %c0_i32_43 : i32 to vector<8x128xi32>
    %143 = arith.cmpi eq, %2, %142 : vector<8x128xi32>
    %c3_i32 = arith.constant 3 : i32
    %144 = vector.broadcast %c3_i32 : i32 to vector<8x128xi32>
    %145 = arith.cmpi eq, %3, %144 : vector<8x128xi32>
    %146 = arith.andi %143, %145 : vector<8x128xi1>
    %147 = arith.extui %146 : vector<8x128xi1> to vector<8x128xi32>
    %148 = arith.sitofp %147 : vector<8x128xi32> to vector<8x128xf32>
    %149 = vector.broadcast %141 : f32 to vector<8x128xf32>
    %150 = arith.mulf %148, %149 : vector<8x128xf32>
    %151 = arith.addf %135, %150 : vector<8x128xf32>
    %152 = arith.subf %0, %119 : vector<128x64xf32>
    %c0_44 = arith.constant 0 : index
    %c0_45 = arith.constant 0 : index
    %153 = vector.load %arg5[%c0_44, %c0_45] : memref<128x64xf32, #tpu.memory_space<vmem>>, vector<128x64xf32>
    tpu.vector_store %arg5[%c0_44, %c0_45], %152 {strides = array<i32>} : memref<128x64xf32, #tpu.memory_space<vmem>>, vector<128x64xf32>,
    %c0_46 = arith.constant 0 : index
    %c0_47 = arith.constant 0 : index
    %c0_48 = arith.constant 0 : index
    %154 = vector.load %arg8[%c0_46, %c0_47, %c0_48] : memref<1x8x128xf32, #tpu.memory_space<vmem>>, vector<1x8x128xf32>
    %155 = vector.shape_cast %154 : vector<1x8x128xf32> to vector<8x128xf32>
    %156 = vector.shape_cast %151 : vector<8x128xf32> to vector<1x8x128xf32>
    tpu.vector_store %arg8[%c0_46, %c0_47, %c0_48], %156 {strides = array<i32>} : memref<1x8x128xf32, #tpu.memory_space<vmem>>, vector<1x8x128xf32>,
    return
  }
  func.func @transform_0(%arg0: i32) -> (i32, i32) {
    %c0_i32 = arith.constant 0 : i32
    %c0_i32_0 = arith.constant 0 : i32
    return %arg0, %c0_i32 : i32, i32
  }
  func.func @transform_1(%arg0: i32) -> (i32, i32, i32) {
    %c0_i32 = arith.constant 0 : i32
    %c0_i32_0 = arith.constant 0 : i32
    %c0_i32_1 = arith.constant 0 : i32
    %c0_i32_2 = arith.constant 0 : i32
    return %c0_i32, %c0_i32_0, %c0_i32_1 : i32, i32, i32
  }
  func.func @transform_2(%arg0: i32) -> (i32, i32, i32) {
    %c0_i32 = arith.constant 0 : i32
    %c0_i32_0 = arith.constant 0 : i32
    %c0_i32_1 = arith.constant 0 : i32
    %c0_i32_2 = arith.constant 0 : i32
    return %c0_i32, %c0_i32_0, %c0_i32_1 : i32, i32, i32
  }
  func.func @transform_3(%arg0: i32) -> (i32, i32, i32) {
    %c0_i32 = arith.constant 0 : i32
    %c0_i32_0 = arith.constant 0 : i32
    %c0_i32_1 = arith.constant 0 : i32
    %c0_i32_2 = arith.constant 0 : i32
    return %c0_i32, %c0_i32_0, %c0_i32_1 : i32, i32, i32
  }
  func.func @transform_4(%arg0: i32) -> (i32, i32) {
    %c0_i32 = arith.constant 0 : i32
    %c0_i32_0 = arith.constant 0 : i32
    return %arg0, %c0_i32 : i32, i32
  }
  func.func @transform_5(%arg0: i32) -> (i32, i32) {
    %c0_i32 = arith.constant 0 : i32
    %c0_i32_0 = arith.constant 0 : i32
    return %c0_i32, %arg0 : i32, i32
  }
  func.func @transform_6(%arg0: i32) -> (i32, i32, i32) {
    %c0_i32 = arith.constant 0 : i32
    %c0_i32_0 = arith.constant 0 : i32
    %c0_i32_1 = arith.constant 0 : i32
    return %c0_i32, %arg0, %c0_i32_0 : i32, i32, i32
  }
  func.func @transform_7(%arg0: i32) -> (i32, i32, i32) {
    %c0_i32 = arith.constant 0 : i32
    %c0_i32_0 = arith.constant 0 : i32
    %c0_i32_1 = arith.constant 0 : i32
    return %arg0, %c0_i32, %c0_i32_0 : i32, i32, i32
  }
}

module attributes {stable_mosaic.version = 11 : i64} {
  func.func @_grvq_kernel(%arg0: i32, %arg1: memref<128x64xf32, #tpu.memory_space<vmem>>, %arg2: memref<2x64x128xf32, #tpu.memory_space<vmem>>, %arg3: memref<2x128x64xf32, #tpu.memory_space<vmem>>, %arg4: memref<2x1x128xf32, #tpu.memory_space<vmem>>, %arg5: memref<128x64xf32, #tpu.memory_space<vmem>>, %arg6: memref<4x128xi32, #tpu.memory_space<vmem>>, %arg7: memref<1x128x64xf32, #tpu.memory_space<vmem>>, %arg8: memref<1x8x128xf32, #tpu.memory_space<vmem>>) attributes {dimension_semantics = [#tpu.dimension_semantics<parallel>], iteration_bounds = array<i64: 1>, scalar_prefetch = 0 : i64, scratch_operands = 0 : i64, tpu.core_type = #tpu.core_type<tc>, window_params = [{transform_indices = @transform_0, window_bounds = array<i64: 128, 64>}, {pipeline_mode = #tpu.pipeline_mode<synchronous>, transform_indices = @transform_1, window_bounds = array<i64: 2, 64, 128>}, {pipeline_mode = #tpu.pipeline_mode<synchronous>, transform_indices = @transform_2, window_bounds = array<i64: 2, 128, 64>}, {pipeline_mode = #tpu.pipeline_mode<synchronous>, transform_indices = @transform_3, window_bounds = array<i64: 2, 1, 128>}, {transform_indices = @transform_4, window_bounds = array<i64: 128, 64>}, {transform_indices = @transform_5, window_bounds = array<i64: 4, 128>}, {transform_indices = @transform_6, window_bounds = array<i64: 1, 128, 64>}, {transform_indices = @transform_7, window_bounds = array<i64: 1, 8, 128>}]} {
    %c0 = arith.constant 0 : index
    %c0_0 = arith.constant 0 : index
    %0 = vector.load %arg1[%c0, %c0_0] : memref<128x64xf32, #tpu.memory_space<vmem>>, vector<128x64xf32>
    %1 = tpu.iota {dimensions = array<i32: 1>} : vector<128x128xi32>
    %2 = tpu.iota {dimensions = array<i32: 0>} : vector<8x128xi32>
    %3 = tpu.iota {dimensions = array<i32: 1>} : vector<8x128xi32>
    %cst = arith.constant 0.000000e+00 : f32
    %4 = vector.broadcast %cst : f32 to vector<8x128xf32>
    %c0_1 = arith.constant 0 : index
    %c0_2 = arith.constant 0 : index
    %c0_3 = arith.constant 0 : index
    %5 = vector.load %arg2[%c0_1, %c0_2, %c0_3] : memref<2x64x128xf32, #tpu.memory_space<vmem>>, vector<1x64x128xf32>
    %6 = vector.shape_cast %5 : vector<1x64x128xf32> to vector<64x128xf32>
    %cst_4 = arith.constant dense<0.000000e+00> : vector<128x128xf32>
    %7 = tpu.matmul %0, %6, %cst_4 {dimension_numbers = #tpu.dot_dimension_numbers<[1], [0], [0], [1], [0, 0, 1, 1], [], []>} : vector<128x64xf32>, vector<64x128xf32>, vector<128x128xf32> -> vector<128x128xf32>
    %c0_5 = arith.constant 0 : index
    %c0_6 = arith.constant 0 : index
    %c0_7 = arith.constant 0 : index
    %8 = vector.load %arg4[%c0_5, %c0_6, %c0_7] : memref<2x1x128xf32, #tpu.memory_space<vmem>>, vector<1x1x128xf32>
    %9 = vector.shape_cast %8 : vector<1x1x128xf32> to vector<1x128xf32>
    %10 = vector.broadcast %9 : vector<1x128xf32> to vector<128x128xf32>
    %11 = arith.subf %10, %7 : vector<128x128xf32>
    %cst_8 = arith.constant 0.000000e+00 : f32
    %12 = vector.broadcast %cst_8 : f32 to vector<128x128xf32>
    %13 = vector.extract_strided_slice %11 {offsets = [0, 0], sizes = [128, 64], strides = [1, 1]} : vector<128x128xf32> to vector<128x64xf32>
    %14 = tpu.reduce_index %13 {axis = 1 : i32, kind = #tpu.reduction_kind<arg_min>} : vector<128x64xf32> -> vector<128xi32>
    %15 = vector.shape_cast %14 : vector<128xi32> to vector<128x1xi32>
    %16 = vector.shape_cast %15 : vector<128x1xi32> to vector<128xi32>
    %c0_9 = arith.constant 0 : index
    %c0_10 = arith.constant 0 : index
    %17 = vector.load %arg6[%c0_9, %c0_10] : memref<4x128xi32, #tpu.memory_space<vmem>>, vector<1x128xi32>
    %18 = vector.shape_cast %17 : vector<1x128xi32> to vector<128xi32>
    %19 = vector.shape_cast %16 : vector<128xi32> to vector<1x128xi32>
    tpu.vector_store %arg6[%c0_9, %c0_10], %19 {strides = array<i32>} : memref<4x128xi32, #tpu.memory_space<vmem>>, vector<1x128xi32>,
    %c0_i32 = arith.constant 0 : i32
    %20 = vector.broadcast %c0_i32 : i32 to vector<128x1xi32>
    %21 = arith.addi %15, %20 : vector<128x1xi32>
    %22 = vector.broadcast %21 : vector<128x1xi32> to vector<128x128xi32>
    %23 = arith.cmpi eq, %1, %22 : vector<128x128xi32>
    %24 = arith.extui %23 : vector<128x128xi1> to vector<128x128xi32>
    %25 = arith.sitofp %24 : vector<128x128xi32> to vector<128x128xf32>
    %26 = arith.addf %12, %25 : vector<128x128xf32>
    %27 = vector.extract_strided_slice %11 {offsets = [0, 64], sizes = [128, 64], strides = [1, 1]} : vector<128x128xf32> to vector<128x64xf32>
    %28 = tpu.reduce_index %27 {axis = 1 : i32, kind = #tpu.reduction_kind<arg_min>} : vector<128x64xf32> -> vector<128xi32>
    %29 = vector.shape_cast %28 : vector<128xi32> to vector<128x1xi32>
    %30 = vector.shape_cast %29 : vector<128x1xi32> to vector<128xi32>
    %c1 = arith.constant 1 : index
    %c0_11 = arith.constant 0 : index
    %31 = vector.load %arg6[%c1, %c0_11] : memref<4x128xi32, #tpu.memory_space<vmem>>, vector<1x128xi32>
    %32 = vector.shape_cast %31 : vector<1x128xi32> to vector<128xi32>
    %33 = vector.shape_cast %30 : vector<128xi32> to vector<1x128xi32>
    tpu.vector_store %arg6[%c1, %c0_11], %33 {strides = array<i32>} : memref<4x128xi32, #tpu.memory_space<vmem>>, vector<1x128xi32>,
    %c64_i32 = arith.constant 64 : i32
    %34 = vector.broadcast %c64_i32 : i32 to vector<128x1xi32>
    %35 = arith.addi %29, %34 : vector<128x1xi32>
    %36 = vector.broadcast %35 : vector<128x1xi32> to vector<128x128xi32>
    %37 = arith.cmpi eq, %1, %36 : vector<128x128xi32>
    %38 = arith.extui %37 : vector<128x128xi1> to vector<128x128xi32>
    %39 = arith.sitofp %38 : vector<128x128xi32> to vector<128x128xf32>
    %40 = arith.addf %26, %39 : vector<128x128xf32>
    %c0_12 = arith.constant 0 : index
    %c0_13 = arith.constant 0 : index
    %c0_14 = arith.constant 0 : index
    %41 = vector.load %arg3[%c0_12, %c0_13, %c0_14] : memref<2x128x64xf32, #tpu.memory_space<vmem>>, vector<1x128x64xf32>
    %42 = vector.shape_cast %41 : vector<1x128x64xf32> to vector<128x64xf32>
    %cst_15 = arith.constant dense<0.000000e+00> : vector<128x64xf32>
    %43 = tpu.matmul %40, %42, %cst_15 {dimension_numbers = #tpu.dot_dimension_numbers<[1], [0], [0], [1], [0, 0, 1, 1], [], []>} : vector<128x128xf32>, vector<128x64xf32>, vector<128x64xf32> -> vector<128x64xf32>
    %44 = arith.subf %0, %43 : vector<128x64xf32>
    %45 = vector.extract_strided_slice %44 {offsets = [0, 0], sizes = [128, 32], strides = [1, 1]} : vector<128x64xf32> to vector<128x32xf32>
    %46 = arith.mulf %45, %45 : vector<128x32xf32>
    %47 = vector.shape_cast %46 : vector<128x32xf32> to vector<1x128x32xf32>
    %cst_16 = arith.constant dense<0.000000e+00> : vector<1xf32>
    %48 = vector.multi_reduction <add>, %47, %cst_16 [1, 2] : vector<1x128x32xf32> to vector<1xf32>
    %49 = vector.shape_cast %48 : vector<1xf32> to vector<1x1x1xf32>
    %50 = vector.extract %49[0, 0, 0] : f32 from vector<1x1x1xf32>
    %c0_i32_17 = arith.constant 0 : i32
    %51 = vector.broadcast %c0_i32_17 : i32 to vector<8x128xi32>
    %52 = arith.cmpi eq, %2, %51 : vector<8x128xi32>
    %c0_i32_18 = arith.constant 0 : i32
    %53 = vector.broadcast %c0_i32_18 : i32 to vector<8x128xi32>
    %54 = arith.cmpi eq, %3, %53 : vector<8x128xi32>
    %55 = arith.andi %52, %54 : vector<8x128xi1>
    %56 = arith.extui %55 : vector<8x128xi1> to vector<8x128xi32>
    %57 = arith.sitofp %56 : vector<8x128xi32> to vector<8x128xf32>
    %58 = vector.broadcast %50 : f32 to vector<8x128xf32>
    %59 = arith.mulf %57, %58 : vector<8x128xf32>
    %60 = arith.addf %4, %59 : vector<8x128xf32>
    %61 = vector.extract_strided_slice %44 {offsets = [0, 32], sizes = [128, 32], strides = [1, 1]} : vector<128x64xf32> to vector<128x32xf32>
    %62 = arith.mulf %61, %61 : vector<128x32xf32>
    %63 = vector.shape_cast %62 : vector<128x32xf32> to vector<1x128x32xf32>
    %cst_19 = arith.constant dense<0.000000e+00> : vector<1xf32>
    %64 = vector.multi_reduction <add>, %63, %cst_19 [1, 2] : vector<1x128x32xf32> to vector<1xf32>
    %65 = vector.shape_cast %64 : vector<1xf32> to vector<1x1x1xf32>
    %66 = vector.extract %65[0, 0, 0] : f32 from vector<1x1x1xf32>
    %c0_i32_20 = arith.constant 0 : i32
    %67 = vector.broadcast %c0_i32_20 : i32 to vector<8x128xi32>
    %68 = arith.cmpi eq, %2, %67 : vector<8x128xi32>
    %c1_i32 = arith.constant 1 : i32
    %69 = vector.broadcast %c1_i32 : i32 to vector<8x128xi32>
    %70 = arith.cmpi eq, %3, %69 : vector<8x128xi32>
    %71 = arith.andi %68, %70 : vector<8x128xi1>
    %72 = arith.extui %71 : vector<8x128xi1> to vector<8x128xi32>
    %73 = arith.sitofp %72 : vector<8x128xi32> to vector<8x128xf32>
    %74 = vector.broadcast %66 : f32 to vector<8x128xf32>
    %75 = arith.mulf %73, %74 : vector<8x128xf32>
    %76 = arith.addf %60, %75 : vector<8x128xf32>
    %c0_21 = arith.constant 0 : index
    %c0_22 = arith.constant 0 : index
    %c0_23 = arith.constant 0 : index
    %77 = vector.load %arg7[%c0_21, %c0_22, %c0_23] : memref<1x128x64xf32, #tpu.memory_space<vmem>>, vector<1x128x64xf32>
    %78 = vector.shape_cast %77 : vector<1x128x64xf32> to vector<128x64xf32>
    %79 = vector.shape_cast %44 : vector<128x64xf32> to vector<1x128x64xf32>
    tpu.vector_store %arg7[%c0_21, %c0_22, %c0_23], %79 {strides = array<i32>} : memref<1x128x64xf32, #tpu.memory_space<vmem>>, vector<1x128x64xf32>,
    %c1_24 = arith.constant 1 : index
    %c0_25 = arith.constant 0 : index
    %c0_26 = arith.constant 0 : index
    %80 = vector.load %arg2[%c1_24, %c0_25, %c0_26] : memref<2x64x128xf32, #tpu.memory_space<vmem>>, vector<1x64x128xf32>
    %81 = vector.shape_cast %80 : vector<1x64x128xf32> to vector<64x128xf32>
    %cst_27 = arith.constant dense<0.000000e+00> : vector<128x128xf32>
    %82 = tpu.matmul %44, %81, %cst_27 {dimension_numbers = #tpu.dot_dimension_numbers<[1], [0], [0], [1], [0, 0, 1, 1], [], []>} : vector<128x64xf32>, vector<64x128xf32>, vector<128x128xf32> -> vector<128x128xf32>
    %c1_28 = arith.constant 1 : index
    %c0_29 = arith.constant 0 : index
    %c0_30 = arith.constant 0 : index
    %83 = vector.load %arg4[%c1_28, %c0_29, %c0_30] : memref<2x1x128xf32, #tpu.memory_space<vmem>>, vector<1x1x128xf32>
    %84 = vector.shape_cast %83 : vector<1x1x128xf32> to vector<1x128xf32>
    %85 = vector.broadcast %84 : vector<1x128xf32> to vector<128x128xf32>
    %86 = arith.subf %85, %82 : vector<128x128xf32>
    %cst_31 = arith.constant 0.000000e+00 : f32
    %87 = vector.broadcast %cst_31 : f32 to vector<128x128xf32>
    %88 = vector.extract_strided_slice %86 {offsets = [0, 0], sizes = [128, 64], strides = [1, 1]} : vector<128x128xf32> to vector<128x64xf32>
    %89 = tpu.reduce_index %88 {axis = 1 : i32, kind = #tpu.reduction_kind<arg_min>} : vector<128x64xf32> -> vector<128xi32>
    %90 = vector.shape_cast %89 : vector<128xi32> to vector<128x1xi32>
    %91 = vector.shape_cast %90 : vector<128x1xi32> to vector<128xi32>
    %c2 = arith.constant 2 : index
    %c0_32 = arith.constant 0 : index
    %92 = vector.load %arg6[%c2, %c0_32] : memref<4x128xi32, #tpu.memory_space<vmem>>, vector<1x128xi32>
    %93 = vector.shape_cast %92 : vector<1x128xi32> to vector<128xi32>
    %94 = vector.shape_cast %91 : vector<128xi32> to vector<1x128xi32>
    tpu.vector_store %arg6[%c2, %c0_32], %94 {strides = array<i32>} : memref<4x128xi32, #tpu.memory_space<vmem>>, vector<1x128xi32>,
    %c0_i32_33 = arith.constant 0 : i32
    %95 = vector.broadcast %c0_i32_33 : i32 to vector<128x1xi32>
    %96 = arith.addi %90, %95 : vector<128x1xi32>
    %97 = vector.broadcast %96 : vector<128x1xi32> to vector<128x128xi32>
    %98 = arith.cmpi eq, %1, %97 : vector<128x128xi32>
    %99 = arith.extui %98 : vector<128x128xi1> to vector<128x128xi32>
    %100 = arith.sitofp %99 : vector<128x128xi32> to vector<128x128xf32>
    %101 = arith.addf %87, %100 : vector<128x128xf32>
    %102 = vector.extract_strided_slice %86 {offsets = [0, 64], sizes = [128, 64], strides = [1, 1]} : vector<128x128xf32> to vector<128x64xf32>
    %103 = tpu.reduce_index %102 {axis = 1 : i32, kind = #tpu.reduction_kind<arg_min>} : vector<128x64xf32> -> vector<128xi32>
    %104 = vector.shape_cast %103 : vector<128xi32> to vector<128x1xi32>
    %105 = vector.shape_cast %104 : vector<128x1xi32> to vector<128xi32>
    %c3 = arith.constant 3 : index
    %c0_34 = arith.constant 0 : index
    %106 = vector.load %arg6[%c3, %c0_34] : memref<4x128xi32, #tpu.memory_space<vmem>>, vector<1x128xi32>
    %107 = vector.shape_cast %106 : vector<1x128xi32> to vector<128xi32>
    %108 = vector.shape_cast %105 : vector<128xi32> to vector<1x128xi32>
    tpu.vector_store %arg6[%c3, %c0_34], %108 {strides = array<i32>} : memref<4x128xi32, #tpu.memory_space<vmem>>, vector<1x128xi32>,
    %c64_i32_35 = arith.constant 64 : i32
    %109 = vector.broadcast %c64_i32_35 : i32 to vector<128x1xi32>
    %110 = arith.addi %104, %109 : vector<128x1xi32>
    %111 = vector.broadcast %110 : vector<128x1xi32> to vector<128x128xi32>
    %112 = arith.cmpi eq, %1, %111 : vector<128x128xi32>
    %113 = arith.extui %112 : vector<128x128xi1> to vector<128x128xi32>
    %114 = arith.sitofp %113 : vector<128x128xi32> to vector<128x128xf32>
    %115 = arith.addf %101, %114 : vector<128x128xf32>
    %c1_36 = arith.constant 1 : index
    %c0_37 = arith.constant 0 : index
    %c0_38 = arith.constant 0 : index
    %116 = vector.load %arg3[%c1_36, %c0_37, %c0_38] : memref<2x128x64xf32, #tpu.memory_space<vmem>>, vector<1x128x64xf32>
    %117 = vector.shape_cast %116 : vector<1x128x64xf32> to vector<128x64xf32>
    %cst_39 = arith.constant dense<0.000000e+00> : vector<128x64xf32>
    %118 = tpu.matmul %115, %117, %cst_39 {dimension_numbers = #tpu.dot_dimension_numbers<[1], [0], [0], [1], [0, 0, 1, 1], [], []>} : vector<128x128xf32>, vector<128x64xf32>, vector<128x64xf32> -> vector<128x64xf32>
    %119 = arith.subf %44, %118 : vector<128x64xf32>
    %120 = vector.extract_strided_slice %119 {offsets = [0, 0], sizes = [128, 32], strides = [1, 1]} : vector<128x64xf32> to vector<128x32xf32>
    %121 = arith.mulf %120, %120 : vector<128x32xf32>
    %122 = vector.shape_cast %121 : vector<128x32xf32> to vector<1x128x32xf32>
    %cst_40 = arith.constant dense<0.000000e+00> : vector<1xf32>
    %123 = vector.multi_reduction <add>, %122, %cst_40 [1, 2] : vector<1x128x32xf32> to vector<1xf32>
    %124 = vector.shape_cast %123 : vector<1xf32> to vector<1x1x1xf32>
    %125 = vector.extract %124[0, 0, 0] : f32 from vector<1x1x1xf32>
    %c0_i32_41 = arith.constant 0 : i32
    %126 = vector.broadcast %c0_i32_41 : i32 to vector<8x128xi32>
    %127 = arith.cmpi eq, %2, %126 : vector<8x128xi32>
    %c2_i32 = arith.constant 2 : i32
    %128 = vector.broadcast %c2_i32 : i32 to vector<8x128xi32>
    %129 = arith.cmpi eq, %3, %128 : vector<8x128xi32>
    %130 = arith.andi %127, %129 : vector<8x128xi1>
    %131 = arith.extui %130 : vector<8x128xi1> to vector<8x128xi32>
    %132 = arith.sitofp %131 : vector<8x128xi32> to vector<8x128xf32>
    %133 = vector.broadcast %125 : f32 to vector<8x128xf32>
    %134 = arith.mulf %132, %133 : vector<8x128xf32>
    %135 = arith.addf %76, %134 : vector<8x128xf32>
    %136 = vector.extract_strided_slice %119 {offsets = [0, 32], sizes = [128, 32], strides = [1, 1]} : vector<128x64xf32> to vector<128x32xf32>
    %137 = arith.mulf %136, %136 : vector<128x32xf32>
    %138 = vector.shape_cast %137 : vector<128x32xf32> to vector<1x128x32xf32>
    %cst_42 = arith.constant dense<0.000000e+00> : vector<1xf32>
    %139 = vector.multi_reduction <add>, %138, %cst_42 [1, 2] : vector<1x128x32xf32> to vector<1xf32>
    %140 = vector.shape_cast %139 : vector<1xf32> to vector<1x1x1xf32>
    %141 = vector.extract %140[0, 0, 0] : f32 from vector<1x1x1xf32>
    %c0_i32_43 = arith.constant 0 : i32
    %142 = vector.broadcast %c0_i32_43 : i32 to vector<8x128xi32>
    %143 = arith.cmpi eq, %2, %142 : vector<8x128xi32>
    %c3_i32 = arith.constant 3 : i32
    %144 = vector.broadcast %c3_i32 : i32 to vector<8x128xi32>
    %145 = arith.cmpi eq, %3, %144 : vector<8x128xi32>
    %146 = arith.andi %143, %145 : vector<8x128xi1>
    %147 = arith.extui %146 : vector<8x128xi1> to vector<8x128xi32>
    %148 = arith.sitofp %147 : vector<8x128xi32> to vector<8x128xf32>
    %149 = vector.broadcast %141 : f32 to vector<8x128xf32>
    %150 = arith.mulf %148, %149 : vector<8x128xf32>
    %151 = arith.addf %135, %150 : vector<8x128xf32>
    %152 = arith.subf %0, %119 : vector<128x64xf32>
    %c0_44 = arith.constant 0 : index
    %c0_45 = arith.constant 0 : index
    %153 = vector.load %arg5[%c0_44, %c0_45] : memref<128x64xf32, #tpu.memory_space<vmem>>, vector<128x64xf32>
    tpu.vector_store %arg5[%c0_44, %c0_45], %152 {strides = array<i32>} : memref<128x64xf32, #tpu.memory_space<vmem>>, vector<128x64xf32>,
    %c0_46 = arith.constant 0 : index
    %c0_47 = arith.constant 0 : index
    %c0_48 = arith.constant 0 : index
    %154 = vector.load %arg8[%c0_46, %c0_47, %c0_48] : memref<1x8x128xf32, #tpu.memory_space<vmem>>, vector<1x8x128xf32>
    %155 = vector.shape_cast %154 : vector<1x8x128xf32> to vector<8x128xf32>
    %156 = vector.shape_cast %151 : vector<8x128xf32> to vector<1x8x128xf32>
    tpu.vector_store %arg8[%c0_46, %c0_47, %c0_48], %156 {strides = array<i32>} : memref<1x8x128xf32, #tpu.memory_space<vmem>>, vector<1x8x128xf32>,
    return
  }
  func.func @transform_0(%arg0: i32) -> (i32, i32) {
    %c0_i32 = arith.constant 0 : i32
    %c0_i32_0 = arith.constant 0 : i32
    return %arg0, %c0_i32 : i32, i32
  }
  func.func @transform_1(%arg0: i32) -> (i32, i32, i32) {
    %c0_i32 = arith.constant 0 : i32
    %c0_i32_0 = arith.constant 0 : i32
    %c0_i32_1 = arith.constant 0 : i32
    %c0_i32_2 = arith.constant 0 : i32
    return %c0_i32, %c0_i32_0, %c0_i32_1 : i32, i32, i32
  }
  func.func @transform_2(%arg0: i32) -> (i32, i32, i32) {
    %c0_i32 = arith.constant 0 : i32
    %c0_i32_0 = arith.constant 0 : i32
    %c0_i32_1 = arith.constant 0 : i32
    %c0_i32_2 = arith.constant 0 : i32
    return %c0_i32, %c0_i32_0, %c0_i32_1 : i32, i32, i32
  }
  func.func @transform_3(%arg0: i32) -> (i32, i32, i32) {
    %c0_i32 = arith.constant 0 : i32
    %c0_i32_0 = arith.constant 0 : i32
    %c0_i32_1 = arith.constant 0 : i32
    %c0_i32_2 = arith.constant 0 : i32
    return %c0_i32, %c0_i32_0, %c0_i32_1 : i32, i32, i32
  }
  func.func @transform_4(%arg0: i32) -> (i32, i32) {
    %c0_i32 = arith.constant 0 : i32
    %c0_i32_0 = arith.constant 0 : i32
    return %arg0, %c0_i32 : i32, i32
  }
  func.func @transform_5(%arg0: i32) -> (i32, i32) {
    %c0_i32 = arith.constant 0 : i32
    %c0_i32_0 = arith.constant 0 : i32
    return %c0_i32, %arg0 : i32, i32
  }
  func.func @transform_6(%arg0: i32) -> (i32, i32, i32) {
    %c0_i32 = arith.constant 0 : i32
    %c0_i32_0 = arith.constant 0 : i32
    %c0_i32_1 = arith.constant 0 : i32
    return %c0_i32, %arg0, %c0_i32_0 : i32, i32, i32
  }
  func.func @transform_7(%arg0: i32) -> (i32, i32, i32) {
    %c0_i32 = arith.constant 0 : i32
    %c0_i32_0 = arith.constant 0 : i32
    %c0_i32_1 = arith.constant 0 : i32
    return %arg0, %c0_i32, %c0_i32_0 : i32, i32, i32
  }
}

module attributes {stable_mosaic.version = 11 : i64} {
  func.func @_grvq_kernel(%arg0: i32, %arg1: memref<128x64xf32, #tpu.memory_space<vmem>>, %arg2: memref<2x64x128xf32, #tpu.memory_space<vmem>>, %arg3: memref<2x128x64xf32, #tpu.memory_space<vmem>>, %arg4: memref<2x1x128xf32, #tpu.memory_space<vmem>>, %arg5: memref<128x64xf32, #tpu.memory_space<vmem>>, %arg6: memref<128x4xi32, #tpu.memory_space<vmem>>, %arg7: memref<1x128x64xf32, #tpu.memory_space<vmem>>, %arg8: memref<1x8x128xf32, #tpu.memory_space<vmem>>) attributes {dimension_semantics = [#tpu.dimension_semantics<parallel>], iteration_bounds = array<i64: 1>, scalar_prefetch = 0 : i64, scratch_operands = 0 : i64, tpu.core_type = #tpu.core_type<tc>, window_params = [{transform_indices = @transform_0, window_bounds = array<i64: 128, 64>}, {pipeline_mode = #tpu.pipeline_mode<synchronous>, transform_indices = @transform_1, window_bounds = array<i64: 2, 64, 128>}, {pipeline_mode = #tpu.pipeline_mode<synchronous>, transform_indices = @transform_2, window_bounds = array<i64: 2, 128, 64>}, {pipeline_mode = #tpu.pipeline_mode<synchronous>, transform_indices = @transform_3, window_bounds = array<i64: 2, 1, 128>}, {transform_indices = @transform_4, window_bounds = array<i64: 128, 64>}, {transform_indices = @transform_5, window_bounds = array<i64: 128, 4>}, {transform_indices = @transform_6, window_bounds = array<i64: 1, 128, 64>}, {transform_indices = @transform_7, window_bounds = array<i64: 1, 8, 128>}]} {
    %c0 = arith.constant 0 : index
    %c0_0 = arith.constant 0 : index
    %0 = vector.load %arg1[%c0, %c0_0] : memref<128x64xf32, #tpu.memory_space<vmem>>, vector<128x64xf32>
    %1 = tpu.iota {dimensions = array<i32: 1>} : vector<128x128xi32>
    %2 = tpu.iota {dimensions = array<i32: 0>} : vector<8x128xi32>
    %3 = tpu.iota {dimensions = array<i32: 1>} : vector<8x128xi32>
    %cst = arith.constant 0.000000e+00 : f32
    %4 = vector.broadcast %cst : f32 to vector<8x128xf32>
    %c0_1 = arith.constant 0 : index
    %c0_2 = arith.constant 0 : index
    %c0_3 = arith.constant 0 : index
    %5 = vector.load %arg2[%c0_1, %c0_2, %c0_3] : memref<2x64x128xf32, #tpu.memory_space<vmem>>, vector<1x64x128xf32>
    %6 = vector.shape_cast %5 : vector<1x64x128xf32> to vector<64x128xf32>
    %cst_4 = arith.constant dense<0.000000e+00> : vector<128x128xf32>
    %7 = tpu.matmul %0, %6, %cst_4 {dimension_numbers = #tpu.dot_dimension_numbers<[1], [0], [0], [1], [0, 0, 1, 1], [], []>} : vector<128x64xf32>, vector<64x128xf32>, vector<128x128xf32> -> vector<128x128xf32>
    %c0_5 = arith.constant 0 : index
    %c0_6 = arith.constant 0 : index
    %c0_7 = arith.constant 0 : index
    %8 = vector.load %arg4[%c0_5, %c0_6, %c0_7] : memref<2x1x128xf32, #tpu.memory_space<vmem>>, vector<1x1x128xf32>
    %9 = vector.shape_cast %8 : vector<1x1x128xf32> to vector<1x128xf32>
    %10 = vector.broadcast %9 : vector<1x128xf32> to vector<128x128xf32>
    %11 = arith.subf %10, %7 : vector<128x128xf32>
    %cst_8 = arith.constant 0.000000e+00 : f32
    %12 = vector.broadcast %cst_8 : f32 to vector<128x128xf32>
    %13 = vector.extract_strided_slice %11 {offsets = [0, 0], sizes = [128, 64], strides = [1, 1]} : vector<128x128xf32> to vector<128x64xf32>
    %14 = tpu.reduce_index %13 {axis = 1 : i32, kind = #tpu.reduction_kind<arg_min>} : vector<128x64xf32> -> vector<128xi32>
    %15 = vector.shape_cast %14 : vector<128xi32> to vector<128x1xi32>
    %16 = vector.shape_cast %15 : vector<128x1xi32> to vector<128xi32>
    %c0_9 = arith.constant 0 : index
    %c0_10 = arith.constant 0 : index
    %17 = vector.load %arg6[%c0_9, %c0_10] : memref<128x4xi32, #tpu.memory_space<vmem>>, vector<128x1xi32>
    %18 = vector.shape_cast %17 : vector<128x1xi32> to vector<128xi32>
    %19 = vector.shape_cast %16 : vector<128xi32> to vector<128x1xi32>
    tpu.vector_store %arg6[%c0_9, %c0_10], %19 {strides = array<i32>} : memref<128x4xi32, #tpu.memory_space<vmem>>, vector<128x1xi32>,
    %c0_i32 = arith.constant 0 : i32
    %20 = vector.broadcast %c0_i32 : i32 to vector<128x1xi32>
    %21 = arith.addi %15, %20 : vector<128x1xi32>
    %22 = vector.broadcast %21 : vector<128x1xi32> to vector<128x128xi32>
    %23 = arith.cmpi eq, %1, %22 : vector<128x128xi32>
    %24 = arith.extui %23 : vector<128x128xi1> to vector<128x128xi32>
    %25 = arith.sitofp %24 : vector<128x128xi32> to vector<128x128xf32>
    %26 = arith.addf %12, %25 : vector<128x128xf32>
    %27 = vector.extract_strided_slice %11 {offsets = [0, 64], sizes = [128, 64], strides = [1, 1]} : vector<128x128xf32> to vector<128x64xf32>
    %28 = tpu.reduce_index %27 {axis = 1 : i32, kind = #tpu.reduction_kind<arg_min>} : vector<128x64xf32> -> vector<128xi32>
    %29 = vector.shape_cast %28 : vector<128xi32> to vector<128x1xi32>
    %30 = vector.shape_cast %29 : vector<128x1xi32> to vector<128xi32>
    %c0_11 = arith.constant 0 : index
    %c1 = arith.constant 1 : index
    %31 = vector.load %arg6[%c0_11, %c1] : memref<128x4xi32, #tpu.memory_space<vmem>>, vector<128x1xi32>
    %32 = vector.shape_cast %31 : vector<128x1xi32> to vector<128xi32>
    %33 = vector.shape_cast %30 : vector<128xi32> to vector<128x1xi32>
    tpu.vector_store %arg6[%c0_11, %c1], %33 {strides = array<i32>} : memref<128x4xi32, #tpu.memory_space<vmem>>, vector<128x1xi32>,
    %c64_i32 = arith.constant 64 : i32
    %34 = vector.broadcast %c64_i32 : i32 to vector<128x1xi32>
    %35 = arith.addi %29, %34 : vector<128x1xi32>
    %36 = vector.broadcast %35 : vector<128x1xi32> to vector<128x128xi32>
    %37 = arith.cmpi eq, %1, %36 : vector<128x128xi32>
    %38 = arith.extui %37 : vector<128x128xi1> to vector<128x128xi32>
    %39 = arith.sitofp %38 : vector<128x128xi32> to vector<128x128xf32>
    %40 = arith.addf %26, %39 : vector<128x128xf32>
    %c0_12 = arith.constant 0 : index
    %c0_13 = arith.constant 0 : index
    %c0_14 = arith.constant 0 : index
    %41 = vector.load %arg3[%c0_12, %c0_13, %c0_14] : memref<2x128x64xf32, #tpu.memory_space<vmem>>, vector<1x128x64xf32>
    %42 = vector.shape_cast %41 : vector<1x128x64xf32> to vector<128x64xf32>
    %cst_15 = arith.constant dense<0.000000e+00> : vector<128x64xf32>
    %43 = tpu.matmul %40, %42, %cst_15 {dimension_numbers = #tpu.dot_dimension_numbers<[1], [0], [0], [1], [0, 0, 1, 1], [], []>} : vector<128x128xf32>, vector<128x64xf32>, vector<128x64xf32> -> vector<128x64xf32>
    %44 = arith.subf %0, %43 : vector<128x64xf32>
    %45 = vector.extract_strided_slice %44 {offsets = [0, 0], sizes = [128, 32], strides = [1, 1]} : vector<128x64xf32> to vector<128x32xf32>
    %46 = arith.mulf %45, %45 : vector<128x32xf32>
    %47 = vector.shape_cast %46 : vector<128x32xf32> to vector<1x128x32xf32>
    %cst_16 = arith.constant dense<0.000000e+00> : vector<1xf32>
    %48 = vector.multi_reduction <add>, %47, %cst_16 [1, 2] : vector<1x128x32xf32> to vector<1xf32>
    %49 = vector.shape_cast %48 : vector<1xf32> to vector<1x1x1xf32>
    %50 = vector.extract %49[0, 0, 0] : f32 from vector<1x1x1xf32>
    %c0_i32_17 = arith.constant 0 : i32
    %51 = vector.broadcast %c0_i32_17 : i32 to vector<8x128xi32>
    %52 = arith.cmpi eq, %2, %51 : vector<8x128xi32>
    %c0_i32_18 = arith.constant 0 : i32
    %53 = vector.broadcast %c0_i32_18 : i32 to vector<8x128xi32>
    %54 = arith.cmpi eq, %3, %53 : vector<8x128xi32>
    %55 = arith.andi %52, %54 : vector<8x128xi1>
    %56 = arith.extui %55 : vector<8x128xi1> to vector<8x128xi32>
    %57 = arith.sitofp %56 : vector<8x128xi32> to vector<8x128xf32>
    %58 = vector.broadcast %50 : f32 to vector<8x128xf32>
    %59 = arith.mulf %57, %58 : vector<8x128xf32>
    %60 = arith.addf %4, %59 : vector<8x128xf32>
    %61 = vector.extract_strided_slice %44 {offsets = [0, 32], sizes = [128, 32], strides = [1, 1]} : vector<128x64xf32> to vector<128x32xf32>
    %62 = arith.mulf %61, %61 : vector<128x32xf32>
    %63 = vector.shape_cast %62 : vector<128x32xf32> to vector<1x128x32xf32>
    %cst_19 = arith.constant dense<0.000000e+00> : vector<1xf32>
    %64 = vector.multi_reduction <add>, %63, %cst_19 [1, 2] : vector<1x128x32xf32> to vector<1xf32>
    %65 = vector.shape_cast %64 : vector<1xf32> to vector<1x1x1xf32>
    %66 = vector.extract %65[0, 0, 0] : f32 from vector<1x1x1xf32>
    %c0_i32_20 = arith.constant 0 : i32
    %67 = vector.broadcast %c0_i32_20 : i32 to vector<8x128xi32>
    %68 = arith.cmpi eq, %2, %67 : vector<8x128xi32>
    %c1_i32 = arith.constant 1 : i32
    %69 = vector.broadcast %c1_i32 : i32 to vector<8x128xi32>
    %70 = arith.cmpi eq, %3, %69 : vector<8x128xi32>
    %71 = arith.andi %68, %70 : vector<8x128xi1>
    %72 = arith.extui %71 : vector<8x128xi1> to vector<8x128xi32>
    %73 = arith.sitofp %72 : vector<8x128xi32> to vector<8x128xf32>
    %74 = vector.broadcast %66 : f32 to vector<8x128xf32>
    %75 = arith.mulf %73, %74 : vector<8x128xf32>
    %76 = arith.addf %60, %75 : vector<8x128xf32>
    %c0_21 = arith.constant 0 : index
    %c0_22 = arith.constant 0 : index
    %c0_23 = arith.constant 0 : index
    %77 = vector.load %arg7[%c0_21, %c0_22, %c0_23] : memref<1x128x64xf32, #tpu.memory_space<vmem>>, vector<1x128x64xf32>
    %78 = vector.shape_cast %77 : vector<1x128x64xf32> to vector<128x64xf32>
    %79 = vector.shape_cast %44 : vector<128x64xf32> to vector<1x128x64xf32>
    tpu.vector_store %arg7[%c0_21, %c0_22, %c0_23], %79 {strides = array<i32>} : memref<1x128x64xf32, #tpu.memory_space<vmem>>, vector<1x128x64xf32>,
    %c1_24 = arith.constant 1 : index
    %c0_25 = arith.constant 0 : index
    %c0_26 = arith.constant 0 : index
    %80 = vector.load %arg2[%c1_24, %c0_25, %c0_26] : memref<2x64x128xf32, #tpu.memory_space<vmem>>, vector<1x64x128xf32>
    %81 = vector.shape_cast %80 : vector<1x64x128xf32> to vector<64x128xf32>
    %cst_27 = arith.constant dense<0.000000e+00> : vector<128x128xf32>
    %82 = tpu.matmul %44, %81, %cst_27 {dimension_numbers = #tpu.dot_dimension_numbers<[1], [0], [0], [1], [0, 0, 1, 1], [], []>} : vector<128x64xf32>, vector<64x128xf32>, vector<128x128xf32> -> vector<128x128xf32>
    %c1_28 = arith.constant 1 : index
    %c0_29 = arith.constant 0 : index
    %c0_30 = arith.constant 0 : index
    %83 = vector.load %arg4[%c1_28, %c0_29, %c0_30] : memref<2x1x128xf32, #tpu.memory_space<vmem>>, vector<1x1x128xf32>
    %84 = vector.shape_cast %83 : vector<1x1x128xf32> to vector<1x128xf32>
    %85 = vector.broadcast %84 : vector<1x128xf32> to vector<128x128xf32>
    %86 = arith.subf %85, %82 : vector<128x128xf32>
    %cst_31 = arith.constant 0.000000e+00 : f32
    %87 = vector.broadcast %cst_31 : f32 to vector<128x128xf32>
    %88 = vector.extract_strided_slice %86 {offsets = [0, 0], sizes = [128, 64], strides = [1, 1]} : vector<128x128xf32> to vector<128x64xf32>
    %89 = tpu.reduce_index %88 {axis = 1 : i32, kind = #tpu.reduction_kind<arg_min>} : vector<128x64xf32> -> vector<128xi32>
    %90 = vector.shape_cast %89 : vector<128xi32> to vector<128x1xi32>
    %91 = vector.shape_cast %90 : vector<128x1xi32> to vector<128xi32>
    %c0_32 = arith.constant 0 : index
    %c2 = arith.constant 2 : index
    %92 = vector.load %arg6[%c0_32, %c2] : memref<128x4xi32, #tpu.memory_space<vmem>>, vector<128x1xi32>
    %93 = vector.shape_cast %92 : vector<128x1xi32> to vector<128xi32>
    %94 = vector.shape_cast %91 : vector<128xi32> to vector<128x1xi32>
    tpu.vector_store %arg6[%c0_32, %c2], %94 {strides = array<i32>} : memref<128x4xi32, #tpu.memory_space<vmem>>, vector<128x1xi32>,
    %c0_i32_33 = arith.constant 0 : i32
    %95 = vector.broadcast %c0_i32_33 : i32 to vector<128x1xi32>
    %96 = arith.addi %90, %95 : vector<128x1xi32>
    %97 = vector.broadcast %96 : vector<128x1xi32> to vector<128x128xi32>
    %98 = arith.cmpi eq, %1, %97 : vector<128x128xi32>
    %99 = arith.extui %98 : vector<128x128xi1> to vector<128x128xi32>
    %100 = arith.sitofp %99 : vector<128x128xi32> to vector<128x128xf32>
    %101 = arith.addf %87, %100 : vector<128x128xf32>
    %102 = vector.extract_strided_slice %86 {offsets = [0, 64], sizes = [128, 64], strides = [1, 1]} : vector<128x128xf32> to vector<128x64xf32>
    %103 = tpu.reduce_index %102 {axis = 1 : i32, kind = #tpu.reduction_kind<arg_min>} : vector<128x64xf32> -> vector<128xi32>
    %104 = vector.shape_cast %103 : vector<128xi32> to vector<128x1xi32>
    %105 = vector.shape_cast %104 : vector<128x1xi32> to vector<128xi32>
    %c0_34 = arith.constant 0 : index
    %c3 = arith.constant 3 : index
    %106 = vector.load %arg6[%c0_34, %c3] : memref<128x4xi32, #tpu.memory_space<vmem>>, vector<128x1xi32>
    %107 = vector.shape_cast %106 : vector<128x1xi32> to vector<128xi32>
    %108 = vector.shape_cast %105 : vector<128xi32> to vector<128x1xi32>
    tpu.vector_store %arg6[%c0_34, %c3], %108 {strides = array<i32>} : memref<128x4xi32, #tpu.memory_space<vmem>>, vector<128x1xi32>,
    %c64_i32_35 = arith.constant 64 : i32
    %109 = vector.broadcast %c64_i32_35 : i32 to vector<128x1xi32>
    %110 = arith.addi %104, %109 : vector<128x1xi32>
    %111 = vector.broadcast %110 : vector<128x1xi32> to vector<128x128xi32>
    %112 = arith.cmpi eq, %1, %111 : vector<128x128xi32>
    %113 = arith.extui %112 : vector<128x128xi1> to vector<128x128xi32>
    %114 = arith.sitofp %113 : vector<128x128xi32> to vector<128x128xf32>
    %115 = arith.addf %101, %114 : vector<128x128xf32>
    %c1_36 = arith.constant 1 : index
    %c0_37 = arith.constant 0 : index
    %c0_38 = arith.constant 0 : index
    %116 = vector.load %arg3[%c1_36, %c0_37, %c0_38] : memref<2x128x64xf32, #tpu.memory_space<vmem>>, vector<1x128x64xf32>
    %117 = vector.shape_cast %116 : vector<1x128x64xf32> to vector<128x64xf32>
    %cst_39 = arith.constant dense<0.000000e+00> : vector<128x64xf32>
    %118 = tpu.matmul %115, %117, %cst_39 {dimension_numbers = #tpu.dot_dimension_numbers<[1], [0], [0], [1], [0, 0, 1, 1], [], []>} : vector<128x128xf32>, vector<128x64xf32>, vector<128x64xf32> -> vector<128x64xf32>
    %119 = arith.subf %44, %118 : vector<128x64xf32>
    %120 = vector.extract_strided_slice %119 {offsets = [0, 0], sizes = [128, 32], strides = [1, 1]} : vector<128x64xf32> to vector<128x32xf32>
    %121 = arith.mulf %120, %120 : vector<128x32xf32>
    %122 = vector.shape_cast %121 : vector<128x32xf32> to vector<1x128x32xf32>
    %cst_40 = arith.constant dense<0.000000e+00> : vector<1xf32>
    %123 = vector.multi_reduction <add>, %122, %cst_40 [1, 2] : vector<1x128x32xf32> to vector<1xf32>
    %124 = vector.shape_cast %123 : vector<1xf32> to vector<1x1x1xf32>
    %125 = vector.extract %124[0, 0, 0] : f32 from vector<1x1x1xf32>
    %c0_i32_41 = arith.constant 0 : i32
    %126 = vector.broadcast %c0_i32_41 : i32 to vector<8x128xi32>
    %127 = arith.cmpi eq, %2, %126 : vector<8x128xi32>
    %c2_i32 = arith.constant 2 : i32
    %128 = vector.broadcast %c2_i32 : i32 to vector<8x128xi32>
    %129 = arith.cmpi eq, %3, %128 : vector<8x128xi32>
    %130 = arith.andi %127, %129 : vector<8x128xi1>
    %131 = arith.extui %130 : vector<8x128xi1> to vector<8x128xi32>
    %132 = arith.sitofp %131 : vector<8x128xi32> to vector<8x128xf32>
    %133 = vector.broadcast %125 : f32 to vector<8x128xf32>
    %134 = arith.mulf %132, %133 : vector<8x128xf32>
    %135 = arith.addf %76, %134 : vector<8x128xf32>
    %136 = vector.extract_strided_slice %119 {offsets = [0, 32], sizes = [128, 32], strides = [1, 1]} : vector<128x64xf32> to vector<128x32xf32>
    %137 = arith.mulf %136, %136 : vector<128x32xf32>
    %138 = vector.shape_cast %137 : vector<128x32xf32> to vector<1x128x32xf32>
    %cst_42 = arith.constant dense<0.000000e+00> : vector<1xf32>
    %139 = vector.multi_reduction <add>, %138, %cst_42 [1, 2] : vector<1x128x32xf32> to vector<1xf32>
    %140 = vector.shape_cast %139 : vector<1xf32> to vector<1x1x1xf32>
    %141 = vector.extract %140[0, 0, 0] : f32 from vector<1x1x1xf32>
    %c0_i32_43 = arith.constant 0 : i32
    %142 = vector.broadcast %c0_i32_43 : i32 to vector<8x128xi32>
    %143 = arith.cmpi eq, %2, %142 : vector<8x128xi32>
    %c3_i32 = arith.constant 3 : i32
    %144 = vector.broadcast %c3_i32 : i32 to vector<8x128xi32>
    %145 = arith.cmpi eq, %3, %144 : vector<8x128xi32>
    %146 = arith.andi %143, %145 : vector<8x128xi1>
    %147 = arith.extui %146 : vector<8x128xi1> to vector<8x128xi32>
    %148 = arith.sitofp %147 : vector<8x128xi32> to vector<8x128xf32>
    %149 = vector.broadcast %141 : f32 to vector<8x128xf32>
    %150 = arith.mulf %148, %149 : vector<8x128xf32>
    %151 = arith.addf %135, %150 : vector<8x128xf32>
    %152 = arith.subf %0, %119 : vector<128x64xf32>
    %c0_44 = arith.constant 0 : index
    %c0_45 = arith.constant 0 : index
    %153 = vector.load %arg5[%c0_44, %c0_45] : memref<128x64xf32, #tpu.memory_space<vmem>>, vector<128x64xf32>
    tpu.vector_store %arg5[%c0_44, %c0_45], %152 {strides = array<i32>} : memref<128x64xf32, #tpu.memory_space<vmem>>, vector<128x64xf32>,
    %c0_46 = arith.constant 0 : index
    %c0_47 = arith.constant 0 : index
    %c0_48 = arith.constant 0 : index
    %154 = vector.load %arg8[%c0_46, %c0_47, %c0_48] : memref<1x8x128xf32, #tpu.memory_space<vmem>>, vector<1x8x128xf32>
    %155 = vector.shape_cast %154 : vector<1x8x128xf32> to vector<8x128xf32>
    %156 = vector.shape_cast %151 : vector<8x128xf32> to vector<1x8x128xf32>
    tpu.vector_store %arg8[%c0_46, %c0_47, %c0_48], %156 {strides = array<i32>} : memref<1x8x128xf32, #tpu.memory_space<vmem>>, vector<1x8x128xf32>,
    return
  }
  func.func @transform_0(%arg0: i32) -> (i32, i32) {
    %c0_i32 = arith.constant 0 : i32
    %c0_i32_0 = arith.constant 0 : i32
    return %arg0, %c0_i32 : i32, i32
  }
  func.func @transform_1(%arg0: i32) -> (i32, i32, i32) {
    %c0_i32 = arith.constant 0 : i32
    %c0_i32_0 = arith.constant 0 : i32
    %c0_i32_1 = arith.constant 0 : i32
    %c0_i32_2 = arith.constant 0 : i32
    return %c0_i32, %c0_i32_0, %c0_i32_1 : i32, i32, i32
  }
  func.func @transform_2(%arg0: i32) -> (i32, i32, i32) {
    %c0_i32 = arith.constant 0 : i32
    %c0_i32_0 = arith.constant 0 : i32
    %c0_i32_1 = arith.constant 0 : i32
    %c0_i32_2 = arith.constant 0 : i32
    return %c0_i32, %c0_i32_0, %c0_i32_1 : i32, i32, i32
  }
  func.func @transform_3(%arg0: i32) -> (i32, i32, i32) {
    %c0_i32 = arith.constant 0 : i32
    %c0_i32_0 = arith.constant 0 : i32
    %c0_i32_1 = arith.constant 0 : i32
    %c0_i32_2 = arith.constant 0 : i32
    return %c0_i32, %c0_i32_0, %c0_i32_1 : i32, i32, i32
  }
  func.func @transform_4(%arg0: i32) -> (i32, i32) {
    %c0_i32 = arith.constant 0 : i32
    %c0_i32_0 = arith.constant 0 : i32
    return %arg0, %c0_i32 : i32, i32
  }
  func.func @transform_5(%arg0: i32) -> (i32, i32) {
    %c0_i32 = arith.constant 0 : i32
    %c0_i32_0 = arith.constant 0 : i32
    return %arg0, %c0_i32 : i32, i32
  }
  func.func @transform_6(%arg0: i32) -> (i32, i32, i32) {
    %c0_i32 = arith.constant 0 : i32
    %c0_i32_0 = arith.constant 0 : i32
    %c0_i32_1 = arith.constant 0 : i32
    return %c0_i32, %arg0, %c0_i32_0 : i32, i32, i32
  }
  func.func @transform_7(%arg0: i32) -> (i32, i32, i32) {
    %c0_i32 = arith.constant 0 : i32
    %c0_i32_0 = arith.constant 0 : i32
    %c0_i32_1 = arith.constant 0 : i32
    return %arg0, %c0_i32, %c0_i32_0 : i32, i32, i32
  }
}

</mosaic_0001>

<llo_original>
// kernel: tpu_custom_call.1
$region0: #{tpu_custom_call.1}
  #allocation0 [shape = 'u32[]', space=smem, size = 0x4, offset = 0x4, fixed_abs, tag = 'smem constant byte address 0x4 - core index']
  #allocation1 [shape = 'u32[72,128]{1,0:T(1,128)}', space=vmem, size = 0x9000, scoped, tag = 'internal scratch']
  %s0 = inlined_call_operand.vmem [shape: f32[128,64], index: 0, kind: input, shape index: {}]
  %s1 = inlined_call_operand.vmem [shape: f32[2,64,128], index: 1, kind: input, shape index: {}]
  %s2 = inlined_call_operand.vmem [shape: f32[2,128,64], index: 2, kind: input, shape index: {}]
  %s3 = inlined_call_operand.vmem [shape: f32[2,1,128], index: 3, kind: input, shape index: {}]
  %s4 = inlined_call_operand.vmem [shape: f32[128,64], index: 4, kind: output, shape index: {0}]
  %s5 = inlined_call_operand.hbm [shape: s32[4,128], index: 5, kind: output, shape index: {1}]
  %s6 = inlined_call_operand.vmem [shape: f32[1,128,64], index: 6, kind: output, shape index: {2}]
  %s7 = inlined_call_operand.hbm [shape: f32[1,8,128], index: 7, kind: output, shape index: {3}]
  %8 = xla_tuple %s4, %s5, %s6, %s7
  %s9 = sld [smem:[#allocation0]]
  $region50: #{tpu_custom_call.1} parent=0
    _
  %s11 = ssub.s32 1, %s9
  %s12 = scalar_select 0, %s11, %s9
  $region1: #{tpu_custom_call.1} parent=0
    #allocation2 [shape = 'u8[2048]{0}', space=vmem, size = 0x800, scoped, tag = 'output window, operand 1, single buffered']
    #allocation3 [shape = 's32[1]{0}', space=sflag, size = 0x4, scoped, tag = 'scoped memory for tpu_custom_call.1']
    #allocation4 [shape = 'u8[4096]{0}', space=vmem, size = 0x1000, scoped, tag = 'output window, operand 3, single buffered']
    #allocation5 [shape = 's32[1]{0}', space=sflag, size = 0x4, scoped, tag = 'scoped memory for tpu_custom_call.1']
    %13 = vsyncpa [#allocation3], 0
    %14 = vsyncpa [#allocation5], 0
    // Predicated region
    $region2: #{tpu_custom_call.1} parent=1 // pred_check
      _
    $region3: #{tpu_custom_call.1} parent=1 // pred_check_branch
      %16 = sbr.rel (0) target = $region5
    $region4: #{tpu_custom_call.1} parent=1 // pred_region
      _
    $region5: #{tpu_custom_call.1} parent=1 // pred_fallthru
      _
    // Predicated region
    $region6: #{tpu_custom_call.1} parent=1 // pred_check
      _
    $region7: #{tpu_custom_call.1} parent=1 // pred_check_branch
      %18 = sbr.rel (0) target = $region9
    $region8: #{tpu_custom_call.1} parent=1 // pred_region
      _
    $region9: #{tpu_custom_call.1} parent=1 // pred_fallthru
      _
    // Predicated region
    $region10: #{tpu_custom_call.1} parent=1 // pred_check
      _
    $region11: #{tpu_custom_call.1} parent=1 // pred_check_branch
      %20 = sbr.rel (0) target = $region13
    $region12: #{tpu_custom_call.1} parent=1 // pred_region
      _
    $region13: #{tpu_custom_call.1} parent=1 // pred_fallthru
      _
    // Predicated region
    $region14: #{tpu_custom_call.1} parent=1 // pred_check
      _
    $region15: #{tpu_custom_call.1} parent=1 // pred_check_branch
      %22 = sbr.rel (0) target = $region17
    $region16: #{tpu_custom_call.1} parent=1 // pred_region
      _
    $region17: #{tpu_custom_call.1} parent=1 // pred_fallthru
      _
    %v23 = vld [vmem:[%s0] sm:$0xff]
    %v24 = vld [vmem:[%s0 + $0x8] sm:$0xff]
    %v25 = vld [vmem:[%s0 + $0x10] sm:$0xff]
    %v26 = vld [vmem:[%s0 + $0x18] sm:$0xff]
    %v27 = vld [vmem:[%s0 + $0x20] sm:$0xff]
    %v28 = vld [vmem:[%s0 + $0x28] sm:$0xff]
    %v29 = vld [vmem:[%s0 + $0x30] sm:$0xff]
    %v30 = vld [vmem:[%s0 + $0x38] sm:$0xff]
    %v31 = vld [vmem:[%s0 + $0x40] sm:$0xff]
    %v32 = vld [vmem:[%s0 + $0x48] sm:$0xff]
    %v33 = vld [vmem:[%s0 + $0x50] sm:$0xff]
    %v34 = vld [vmem:[%s0 + $0x58] sm:$0xff]
    %v35 = vld [vmem:[%s0 + $0x60] sm:$0xff]
    %v36 = vld [vmem:[%s0 + $0x68] sm:$0xff]
    %v37 = vld [vmem:[%s0 + $0x70] sm:$0xff]
    %v38 = vld [vmem:[%s0 + $0x78] sm:$0xff]
    %v39 = vlaneseq
    %v40 = vand.u32 %v39, 127
    %v41 = vlaneseq
    %v42 = vshrl.u32 %v41, 7
    %v43 = vld [vmem:[%s1] sm:$0xff]
    %v44 = vld [vmem:[%s1 + $0x8] sm:$0xff]
    %v45 = vld [vmem:[%s1 + $0x10] sm:$0xff]
    %v46 = vld [vmem:[%s1 + $0x18] sm:$0xff]
    %v47 = vld [vmem:[%s1 + $0x20] sm:$0xff]
    %v48 = vld [vmem:[%s1 + $0x28] sm:$0xff]
    %v49 = vld [vmem:[%s1 + $0x30] sm:$0xff]
    %v50 = vld [vmem:[%s1 + $0x38] sm:$0xff]
    %vm51 = vcmask 523264
    %v53 = vsel %vm51, %v23, 0
    %v56 = vsel %vm51, %v24, 0
    %v59 = vsel %vm51, %v25, 0
    %v62 = vsel %vm51, %v26, 0
    %v65 = vsel %vm51, %v27, 0
    %v68 = vsel %vm51, %v28, 0
    %v71 = vsel %vm51, %v29, 0
    %v74 = vsel %vm51, %v30, 0
    %v77 = vsel %vm51, %v31, 0
    %v80 = vsel %vm51, %v32, 0
    %v83 = vsel %vm51, %v33, 0
    %v86 = vsel %vm51, %v34, 0
    %v89 = vsel %vm51, %v35, 0
    %v92 = vsel %vm51, %v36, 0
    %v95 = vsel %vm51, %v37, 0
    %v98 = vsel %vm51, %v38, 0
    %100 = vmatpush.msra.mxu0 0.0
    %101 = vmatpush.msra.mxu0 0.0
    %102 = vmatpush.msra.mxu0 0.0
    %103 = vmatpush.msra.mxu0 0.0
    %104 = vmatpush.msra.mxu0 0.0
    %105 = vmatpush.msra.mxu0 0.0
    %106 = vmatpush.msra.mxu0 0.0
    %107 = vmatpush.msra.mxu0 0.0
    %108 = vmatpush.msra.mxu0 %v50
    %109 = vmatpush.msra.mxu0 %v49
    %110 = vmatpush.msra.mxu0 %v48
    %111 = vmatpush.msra.mxu0 %v47
    %112 = vmatpush.msra.mxu0 %v46
    %113 = vmatpush.msra.mxu0 %v45
    %114 = vmatpush.msra.mxu0 %v44
    %115 = vmatpush.msra.mxu0 %v43
    %116 = vmatmul.f32.gmra.mxu0 %v53
    %v117 = vpop.f32.mrf.mxu0
    %v118 = vadd.f32 0.0, %v117
    %119 = vmatmul.f32.gmra.mxu0 %v56
    %v120 = vpop.f32.mrf.mxu0
    %v121 = vadd.f32 0.0, %v120
    %122 = vmatmul.f32.gmra.mxu0 %v59
    %v123 = vpop.f32.mrf.mxu0
    %v124 = vadd.f32 0.0, %v123
    %125 = vmatmul.f32.gmra.mxu0 %v62
    %v126 = vpop.f32.mrf.mxu0
    %v127 = vadd.f32 0.0, %v126
    %128 = vmatmul.f32.gmra.mxu0 %v65
    %v129 = vpop.f32.mrf.mxu0
    %v130 = vadd.f32 0.0, %v129
    %131 = vmatmul.f32.gmra.mxu0 %v68
    %v132 = vpop.f32.mrf.mxu0
    %v133 = vadd.f32 0.0, %v132
    %134 = vmatmul.f32.gmra.mxu0 %v71
    %v135 = vpop.f32.mrf.mxu0
    %v136 = vadd.f32 0.0, %v135
    %137 = vmatmul.f32.gmra.mxu0 %v74
    %v138 = vpop.f32.mrf.mxu0
    %v139 = vadd.f32 0.0, %v138
    %140 = vmatmul.f32.gmra.mxu0 %v77
    %v141 = vpop.f32.mrf.mxu0
    %v142 = vadd.f32 0.0, %v141
    %143 = vmatmul.f32.gmra.mxu0 %v80
    %v144 = vpop.f32.mrf.mxu0
    %v145 = vadd.f32 0.0, %v144
    %146 = vmatmul.f32.gmra.mxu0 %v83
    %v147 = vpop.f32.mrf.mxu0
    %v148 = vadd.f32 0.0, %v147
    %149 = vmatmul.f32.gmra.mxu0 %v86
    %v150 = vpop.f32.mrf.mxu0
    %v151 = vadd.f32 0.0, %v150
    %152 = vmatmul.f32.gmra.mxu0 %v89
    %v153 = vpop.f32.mrf.mxu0
    %v154 = vadd.f32 0.0, %v153
    %155 = vmatmul.f32.gmra.mxu0 %v92
    %v156 = vpop.f32.mrf.mxu0
    %v157 = vadd.f32 0.0, %v156
    %158 = vmatmul.f32.gmra.mxu0 %v95
    %v159 = vpop.f32.mrf.mxu0
    %v160 = vadd.f32 0.0, %v159
    %161 = vmatmul.f32.gmra.mxu0 %v98
    %v162 = vpop.f32.mrf.mxu0
    %v163 = vadd.f32 0.0, %v162
    %164 = vdwg.mxu0
    %v165 = vld [vmem:[%s3] sm:$0x1]
    %v167 = vperm.slane %v165, 0
    %v169 = vsub.f32 %v167, %v118
    %v170 = vsub.f32 %v167, %v121
    %v171 = vsub.f32 %v167, %v124
    %v172 = vsub.f32 %v167, %v127
    %v173 = vsub.f32 %v167, %v130
    %v174 = vsub.f32 %v167, %v133
    %v175 = vsub.f32 %v167, %v136
    %v176 = vsub.f32 %v167, %v139
    %v177 = vsub.f32 %v167, %v142
    %v178 = vsub.f32 %v167, %v145
    %v179 = vsub.f32 %v167, %v148
    %v180 = vsub.f32 %v167, %v151
    %v181 = vsub.f32 %v167, %v154
    %v182 = vsub.f32 %v167, %v157
    %v183 = vsub.f32 %v167, %v160
    %v184 = vsub.f32 %v167, %v163
    %v185 = vsel %vm51, %v169, inf
    %186 = vmin.index.xlane.f32.xlu0 %v185
    %v187 = vpop.xlane.xlu0 %186
    %v188 = vsel %vm51, %v170, inf
    %189 = vmin.index.xlane.f32.xlu0 %v188
    %v190 = vpop.xlane.xlu0 %189
    %v191 = vsel %vm51, %v171, inf
    %192 = vmin.index.xlane.f32.xlu0 %v191
    %v193 = vpop.xlane.xlu0 %192
    %v194 = vsel %vm51, %v172, inf
    %195 = vmin.index.xlane.f32.xlu0 %v194
    %v196 = vpop.xlane.xlu0 %195
    %v197 = vsel %vm51, %v173, inf
    %198 = vmin.index.xlane.f32.xlu0 %v197
    %v199 = vpop.xlane.xlu0 %198
    %v200 = vsel %vm51, %v174, inf
    %201 = vmin.index.xlane.f32.xlu0 %v200
    %v202 = vpop.xlane.xlu0 %201
    %v203 = vsel %vm51, %v175, inf
    %204 = vmin.index.xlane.f32.xlu0 %v203
    %v205 = vpop.xlane.xlu0 %204
    %v206 = vsel %vm51, %v176, inf
    %207 = vmin.index.xlane.f32.xlu0 %v206
    %v208 = vpop.xlane.xlu0 %207
    %v209 = vsel %vm51, %v177, inf
    %210 = vmin.index.xlane.f32.xlu0 %v209
    %v211 = vpop.xlane.xlu0 %210
    %v212 = vsel %vm51, %v178, inf
    %213 = vmin.index.xlane.f32.xlu0 %v212
    %v214 = vpop.xlane.xlu0 %213
    %v215 = vsel %vm51, %v179, inf
    %216 = vmin.index.xlane.f32.xlu0 %v215
    %v217 = vpop.xlane.xlu0 %216
    %v218 = vsel %vm51, %v180, inf
    %219 = vmin.index.xlane.f32.xlu0 %v218
    %v220 = vpop.xlane.xlu0 %219
    %v221 = vsel %vm51, %v181, inf
    %222 = vmin.index.xlane.f32.xlu0 %v221
    %v223 = vpop.xlane.xlu0 %222
    %v224 = vsel %vm51, %v182, inf
    %225 = vmin.index.xlane.f32.xlu0 %v224
    %v226 = vpop.xlane.xlu0 %225
    %v227 = vsel %vm51, %v183, inf
    %228 = vmin.index.xlane.f32.xlu0 %v227
    %v229 = vpop.xlane.xlu0 %228
    %v230 = vsel %vm51, %v184, inf
    %231 = vmin.index.xlane.f32.xlu0 %v230
    %v232 = vpop.xlane.xlu0 %231
    %v233 = vperm.slane %v187, %v40
    %v234 = vadd.s32 %v40, 4294967288
    %v235 = vperm.slane %v190, %v234
    %vm236 = vcmask 130112
    %v237 = vsel %vm236, %v235, %v233
    %v238 = vadd.s32 %v40, 4294967280
    %v239 = vperm.slane %v193, %v238
    %vm240 = vcmask 195712
    %v241 = vsel %vm240, %v239, %v237
    %v242 = vadd.s32 %v40, 4294967272
    %v243 = vperm.slane %v196, %v242
    %vm244 = vcmask 261312
    %v245 = vsel %vm244, %v243, %v241
    %v246 = vadd.s32 %v40, 4294967264
    %v247 = vperm.slane %v199, %v246
    %vm248 = vcmask 326912
    %v249 = vsel %vm248, %v247, %v245
    %v250 = vadd.s32 %v40, 4294967256
    %v251 = vperm.slane %v202, %v250
    %vm252 = vcmask 392512
    %v253 = vsel %vm252, %v251, %v249
    %v254 = vadd.s32 %v40, 4294967248
    %v255 = vperm.slane %v205, %v254
    %vm256 = vcmask 458112
    %v257 = vsel %vm256, %v255, %v253
    %v258 = vadd.s32 %v40, 4294967240
    %v259 = vperm.slane %v208, %v258
    %vm260 = vcmask 523712
    %v261 = vsel %vm260, %v259, %v257
    %v262 = vadd.s32 %v40, 4294967232
    %v263 = vperm.slane %v211, %v262
    %vm264 = vcmask 589312
    %v265 = vsel %vm264, %v263, %v261
    %v266 = vadd.s32 %v40, 4294967224
    %v267 = vperm.slane %v214, %v266
    %vm268 = vcmask 654912
    %v269 = vsel %vm268, %v267, %v265
    %v270 = vadd.s32 %v40, 4294967216
    %v271 = vperm.slane %v217, %v270
    %vm272 = vcmask 720512
    %v273 = vsel %vm272, %v271, %v269
    %v274 = vadd.s32 %v40, 4294967208
    %v275 = vperm.slane %v220, %v274
    %vm276 = vcmask 786112
    %v277 = vsel %vm276, %v275, %v273
    %v278 = vadd.s32 %v40, 4294967200
    %v279 = vperm.slane %v223, %v278
    %vm280 = vcmask 851712
    %v281 = vsel %vm280, %v279, %v277
    %v282 = vadd.s32 %v40, 4294967192
    %v283 = vperm.slane %v226, %v282
    %vm284 = vcmask 917312
    %v285 = vsel %vm284, %v283, %v281
    %v286 = vadd.s32 %v40, 4294967184
    %v287 = vperm.slane %v229, %v286
    %vm288 = vcmask 982912
    %v289 = vsel %vm288, %v287, %v285
    %v290 = vadd.s32 %v40, 4294967176
    %v291 = vperm.slane %v232, %v290
    %vm292 = vcmask 1048512
    %v293 = vsel %vm292, %v291, %v289
    %294 = vst [vmem:[#allocation2] sm:$0x1] %v293
    %vm295 = vcmp.eq.s32.totalorder %v40, %v187
    %vm296 = vcmp.eq.s32.totalorder %v40, %v190
    %vm297 = vcmp.eq.s32.totalorder %v40, %v193
    %vm298 = vcmp.eq.s32.totalorder %v40, %v196
    %vm299 = vcmp.eq.s32.totalorder %v40, %v199
    %vm300 = vcmp.eq.s32.totalorder %v40, %v202
    %vm301 = vcmp.eq.s32.totalorder %v40, %v205
    %vm302 = vcmp.eq.s32.totalorder %v40, %v208
    %vm303 = vcmp.eq.s32.totalorder %v40, %v211
    %vm304 = vcmp.eq.s32.totalorder %v40, %v214
    %vm305 = vcmp.eq.s32.totalorder %v40, %v217
    %vm306 = vcmp.eq.s32.totalorder %v40, %v220
    %vm307 = vcmp.eq.s32.totalorder %v40, %v223
    %vm308 = vcmp.eq.s32.totalorder %v40, %v226
    %vm309 = vcmp.eq.s32.totalorder %v40, %v229
    %vm310 = vcmp.eq.s32.totalorder %v40, %v232
    %v311 = vsel %vm295, 1, 0
    %v312 = vsel %vm296, 1, 0
    %v313 = vsel %vm297, 1, 0
    %v314 = vsel %vm298, 1, 0
    %v315 = vsel %vm299, 1, 0
    %v316 = vsel %vm300, 1, 0
    %v317 = vsel %vm301, 1, 0
    %v318 = vsel %vm302, 1, 0
    %v319 = vsel %vm303, 1, 0
    %v320 = vsel %vm304, 1, 0
    %v321 = vsel %vm305, 1, 0
    %v322 = vsel %vm306, 1, 0
    %v323 = vsel %vm307, 1, 0
    %v324 = vsel %vm308, 1, 0
    %v325 = vsel %vm309, 1, 0
    %v326 = vsel %vm310, 1, 0
    %v327 = vcvt.s32.f32 %v311
    %v328 = vcvt.s32.f32 %v312
    %v329 = vcvt.s32.f32 %v313
    %v330 = vcvt.s32.f32 %v314
    %v331 = vcvt.s32.f32 %v315
    %v332 = vcvt.s32.f32 %v316
    %v333 = vcvt.s32.f32 %v317
    %v334 = vcvt.s32.f32 %v318
    %v335 = vcvt.s32.f32 %v319
    %v336 = vcvt.s32.f32 %v320
    %v337 = vcvt.s32.f32 %v321
    %v338 = vcvt.s32.f32 %v322
    %v339 = vcvt.s32.f32 %v323
    %v340 = vcvt.s32.f32 %v324
    %v341 = vcvt.s32.f32 %v325
    %v342 = vcvt.s32.f32 %v326
    %v343 = vadd.f32 %v327, 0.0
    %v344 = vadd.f32 %v328, 0.0
    %v345 = vadd.f32 %v329, 0.0
    %v346 = vadd.f32 %v330, 0.0
    %v347 = vadd.f32 %v331, 0.0
    %v348 = vadd.f32 %v332, 0.0
    %v349 = vadd.f32 %v333, 0.0
    %v350 = vadd.f32 %v334, 0.0
    %v351 = vadd.f32 %v335, 0.0
    %v352 = vadd.f32 %v336, 0.0
    %v353 = vadd.f32 %v337, 0.0
    %v354 = vadd.f32 %v338, 0.0
    %v355 = vadd.f32 %v339, 0.0
    %v356 = vadd.f32 %v340, 0.0
    %v357 = vadd.f32 %v341, 0.0
    %v358 = vadd.f32 %v342, 0.0
    %375 = vrot.lane.b32.xlu0 %v169, 64
    %v376 = vpop.permute.xlu0 %375
    %377 = vrot.lane.b32.xlu0 %v170, 64
    %v378 = vpop.permute.xlu0 %377
    %379 = vrot.lane.b32.xlu0 %v171, 64
    %v380 = vpop.permute.xlu0 %379
    %381 = vrot.lane.b32.xlu0 %v172, 64
    %v382 = vpop.permute.xlu0 %381
    %383 = vrot.lane.b32.xlu0 %v173, 64
    %v384 = vpop.permute.xlu0 %383
    %385 = vrot.lane.b32.xlu0 %v174, 64
    %v386 = vpop.permute.xlu0 %385
    %387 = vrot.lane.b32.xlu0 %v175, 64
    %v388 = vpop.permute.xlu0 %387
    %389 = vrot.lane.b32.xlu0 %v176, 64
    %v390 = vpop.permute.xlu0 %389
    %391 = vrot.lane.b32.xlu0 %v177, 64
    %v392 = vpop.permute.xlu0 %391
    %393 = vrot.lane.b32.xlu0 %v178, 64
    %v394 = vpop.permute.xlu0 %393
    %395 = vrot.lane.b32.xlu0 %v179, 64
    %v396 = vpop.permute.xlu0 %395
    %397 = vrot.lane.b32.xlu0 %v180, 64
    %v398 = vpop.permute.xlu0 %397
    %399 = vrot.lane.b32.xlu0 %v181, 64
    %v400 = vpop.permute.xlu0 %399
    %401 = vrot.lane.b32.xlu0 %v182, 64
    %v402 = vpop.permute.xlu0 %401
    %403 = vrot.lane.b32.xlu0 %v183, 64
    %v404 = vpop.permute.xlu0 %403
    %405 = vrot.lane.b32.xlu0 %v184, 64
    %v406 = vpop.permute.xlu0 %405
    %v423 = vsel %vm51, %v376, inf
    %424 = vmin.index.xlane.f32.xlu0 %v423
    %v425 = vpop.xlane.xlu0 %424
    %v426 = vsel %vm51, %v378, inf
    %427 = vmin.index.xlane.f32.xlu0 %v426
    %v428 = vpop.xlane.xlu0 %427
    %v429 = vsel %vm51, %v380, inf
    %430 = vmin.index.xlane.f32.xlu0 %v429
    %v431 = vpop.xlane.xlu0 %430
    %v432 = vsel %vm51, %v382, inf
    %433 = vmin.index.xlane.f32.xlu0 %v432
    %v434 = vpop.xlane.xlu0 %433
    %v435 = vsel %vm51, %v384, inf
    %436 = vmin.index.xlane.f32.xlu0 %v435
    %v437 = vpop.xlane.xlu0 %436
    %v438 = vsel %vm51, %v386, inf
    %439 = vmin.index.xlane.f32.xlu0 %v438
    %v440 = vpop.xlane.xlu0 %439
    %v441 = vsel %vm51, %v388, inf
    %442 = vmin.index.xlane.f32.xlu0 %v441
    %v443 = vpop.xlane.xlu0 %442
    %v444 = vsel %vm51, %v390, inf
    %445 = vmin.index.xlane.f32.xlu0 %v444
    %v446 = vpop.xlane.xlu0 %445
    %v447 = vsel %vm51, %v392, inf
    %448 = vmin.index.xlane.f32.xlu0 %v447
    %v449 = vpop.xlane.xlu0 %448
    %v450 = vsel %vm51, %v394, inf
    %451 = vmin.index.xlane.f32.xlu0 %v450
    %v452 = vpop.xlane.xlu0 %451
    %v453 = vsel %vm51, %v396, inf
    %454 = vmin.index.xlane.f32.xlu0 %v453
    %v455 = vpop.xlane.xlu0 %454
    %v456 = vsel %vm51, %v398, inf
    %457 = vmin.index.xlane.f32.xlu0 %v456
    %v458 = vpop.xlane.xlu0 %457
    %v459 = vsel %vm51, %v400, inf
    %460 = vmin.index.xlane.f32.xlu0 %v459
    %v461 = vpop.xlane.xlu0 %460
    %v462 = vsel %vm51, %v402, inf
    %463 = vmin.index.xlane.f32.xlu0 %v462
    %v464 = vpop.xlane.xlu0 %463
    %v465 = vsel %vm51, %v404, inf
    %466 = vmin.index.xlane.f32.xlu0 %v465
    %v467 = vpop.xlane.xlu0 %466
    %v468 = vsel %vm51, %v406, inf
    %469 = vmin.index.xlane.f32.xlu0 %v468
    %v470 = vpop.xlane.xlu0 %469
    %v471 = vperm.slane %v425, %v40
    %v472 = vperm.slane %v428, %v234
    %v473 = vsel %vm236, %v472, %v471
    %v474 = vperm.slane %v431, %v238
    %v475 = vsel %vm240, %v474, %v473
    %v476 = vperm.slane %v434, %v242
    %v477 = vsel %vm244, %v476, %v475
    %v478 = vperm.slane %v437, %v246
    %v479 = vsel %vm248, %v478, %v477
    %v480 = vperm.slane %v440, %v250
    %v481 = vsel %vm252, %v480, %v479
    %v482 = vperm.slane %v443, %v254
    %v483 = vsel %vm256, %v482, %v481
    %v484 = vperm.slane %v446, %v258
    %v485 = vsel %vm260, %v484, %v483
    %v486 = vperm.slane %v449, %v262
    %v487 = vsel %vm264, %v486, %v485
    %v488 = vperm.slane %v452, %v266
    %v489 = vsel %vm268, %v488, %v487
    %v490 = vperm.slane %v455, %v270
    %v491 = vsel %vm272, %v490, %v489
    %v492 = vperm.slane %v458, %v274
    %v493 = vsel %vm276, %v492, %v491
    %v494 = vperm.slane %v461, %v278
    %v495 = vsel %vm280, %v494, %v493
    %v496 = vperm.slane %v464, %v282
    %v497 = vsel %vm284, %v496, %v495
    %v498 = vperm.slane %v467, %v286
    %v499 = vsel %vm288, %v498, %v497
    %v500 = vperm.slane %v470, %v290
    %v501 = vsel %vm292, %v500, %v499
    %502 = vst [vmem:[#allocation2 + $0x1] sm:$0x1] %v501
    %v503 = vadd.s32 %v425, 64
    %v504 = vadd.s32 %v428, 64
    %v505 = vadd.s32 %v431, 64
    %v506 = vadd.s32 %v434, 64
    %v507 = vadd.s32 %v437, 64
    %v508 = vadd.s32 %v440, 64
    %v509 = vadd.s32 %v443, 64
    %v510 = vadd.s32 %v446, 64
    %v511 = vadd.s32 %v449, 64
    %v512 = vadd.s32 %v452, 64
    %v513 = vadd.s32 %v455, 64
    %v514 = vadd.s32 %v458, 64
    %v515 = vadd.s32 %v461, 64
    %v516 = vadd.s32 %v464, 64
    %v517 = vadd.s32 %v467, 64
    %v518 = vadd.s32 %v470, 64
    %vm519 = vcmp.eq.s32.totalorder %v40, %v503
    %vm520 = vcmp.eq.s32.totalorder %v40, %v504
    %vm521 = vcmp.eq.s32.totalorder %v40, %v505
    %vm522 = vcmp.eq.s32.totalorder %v40, %v506
    %vm523 = vcmp.eq.s32.totalorder %v40, %v507
    %vm524 = vcmp.eq.s32.totalorder %v40, %v508
    %vm525 = vcmp.eq.s32.totalorder %v40, %v509
    %vm526 = vcmp.eq.s32.totalorder %v40, %v510
    %vm527 = vcmp.eq.s32.totalorder %v40, %v511
    %vm528 = vcmp.eq.s32.totalorder %v40, %v512
    %vm529 = vcmp.eq.s32.totalorder %v40, %v513
    %vm530 = vcmp.eq.s32.totalorder %v40, %v514
    %vm531 = vcmp.eq.s32.totalorder %v40, %v515
    %vm532 = vcmp.eq.s32.totalorder %v40, %v516
    %vm533 = vcmp.eq.s32.totalorder %v40, %v517
    %vm534 = vcmp.eq.s32.totalorder %v40, %v518
    %v535 = vsel %vm519, 1, 0
    %v536 = vsel %vm520, 1, 0
    %v537 = vsel %vm521, 1, 0
    %v538 = vsel %vm522, 1, 0
    %v539 = vsel %vm523, 1, 0
    %v540 = vsel %vm524, 1, 0
    %v541 = vsel %vm525, 1, 0
    %v542 = vsel %vm526, 1, 0
    %v543 = vsel %vm527, 1, 0
    %v544 = vsel %vm528, 1, 0
    %v545 = vsel %vm529, 1, 0
    %v546 = vsel %vm530, 1, 0
    %v547 = vsel %vm531, 1, 0
    %v548 = vsel %vm532, 1, 0
    %v549 = vsel %vm533, 1, 0
    %v550 = vsel %vm534, 1, 0
    %v551 = vcvt.s32.f32 %v535
    %v552 = vcvt.s32.f32 %v536
    %v553 = vcvt.s32.f32 %v537
    %v554 = vcvt.s32.f32 %v538
    %v555 = vcvt.s32.f32 %v539
    %v556 = vcvt.s32.f32 %v540
    %v557 = vcvt.s32.f32 %v541
    %v558 = vcvt.s32.f32 %v542
    %v559 = vcvt.s32.f32 %v543
    %v560 = vcvt.s32.f32 %v544
    %v561 = vcvt.s32.f32 %v545
    %v562 = vcvt.s32.f32 %v546
    %v563 = vcvt.s32.f32 %v547
    %v564 = vcvt.s32.f32 %v548
    %v565 = vcvt.s32.f32 %v549
    %v566 = vcvt.s32.f32 %v550
    %v567 = vadd.f32 %v343, %v551
    %v568 = vadd.f32 %v344, %v552
    %v569 = vadd.f32 %v345, %v553
    %v570 = vadd.f32 %v346, %v554
    %v571 = vadd.f32 %v347, %v555
    %v572 = vadd.f32 %v348, %v556
    %v573 = vadd.f32 %v349, %v557
    %v574 = vadd.f32 %v350, %v558
    %v575 = vadd.f32 %v351, %v559
    %v576 = vadd.f32 %v352, %v560
    %v577 = vadd.f32 %v353, %v561
    %v578 = vadd.f32 %v354, %v562
    %v579 = vadd.f32 %v355, %v563
    %v580 = vadd.f32 %v356, %v564
    %v581 = vadd.f32 %v357, %v565
    %v582 = vadd.f32 %v358, %v566
    %v583 = vld [vmem:[%s2] sm:$0xff]
    %v584 = vld [vmem:[%s2 + $0x8] sm:$0xff]
    %v585 = vld [vmem:[%s2 + $0x10] sm:$0xff]
    %v586 = vld [vmem:[%s2 + $0x18] sm:$0xff]
    %v587 = vld [vmem:[%s2 + $0x20] sm:$0xff]
    %v588 = vld [vmem:[%s2 + $0x28] sm:$0xff]
    %v589 = vld [vmem:[%s2 + $0x30] sm:$0xff]
    %v590 = vld [vmem:[%s2 + $0x38] sm:$0xff]
    %v591 = vld [vmem:[%s2 + $0x40] sm:$0xff]
    %v592 = vld [vmem:[%s2 + $0x48] sm:$0xff]
    %v593 = vld [vmem:[%s2 + $0x50] sm:$0xff]
    %v594 = vld [vmem:[%s2 + $0x58] sm:$0xff]
    %v595 = vld [vmem:[%s2 + $0x60] sm:$0xff]
    %v596 = vld [vmem:[%s2 + $0x68] sm:$0xff]
    %v597 = vld [vmem:[%s2 + $0x70] sm:$0xff]
    %v598 = vld [vmem:[%s2 + $0x78] sm:$0xff]
    %599 = vmatpush.msra.mxu0 %v598
    %600 = vmatpush.msra.mxu0 %v597
    %601 = vmatpush.msra.mxu0 %v596
    %602 = vmatpush.msra.mxu0 %v595
    %603 = vmatpush.msra.mxu0 %v594
    %604 = vmatpush.msra.mxu0 %v593
    %605 = vmatpush.msra.mxu0 %v592
    %606 = vmatpush.msra.mxu0 %v591
    %607 = vmatpush.msra.mxu0 %v590
    %608 = vmatpush.msra.mxu0 %v589
    %609 = vmatpush.msra.mxu0 %v588
    %610 = vmatpush.msra.mxu0 %v587
    %611 = vmatpush.msra.mxu0 %v586
    %612 = vmatpush.msra.mxu0 %v585
    %613 = vmatpush.msra.mxu0 %v584
    %614 = vmatpush.msra.mxu0 %v583
    %615 = vmatmul.f32.gmra.mxu0 %v567
    %v616 = vpop.f32.mrf.mxu0
    %v617 = vadd.f32 0.0, %v616
    %618 = vmatmul.f32.gmra.mxu0 %v568
    %v619 = vpop.f32.mrf.mxu0
    %v620 = vadd.f32 0.0, %v619
    %621 = vmatmul.f32.gmra.mxu0 %v569
    %v622 = vpop.f32.mrf.mxu0
    %v623 = vadd.f32 0.0, %v622
    %624 = vmatmul.f32.gmra.mxu0 %v570
    %v625 = vpop.f32.mrf.mxu0
    %v626 = vadd.f32 0.0, %v625
    %627 = vmatmul.f32.gmra.mxu0 %v571
    %v628 = vpop.f32.mrf.mxu0
    %v629 = vadd.f32 0.0, %v628
    %630 = vmatmul.f32.gmra.mxu0 %v572
    %v631 = vpop.f32.mrf.mxu0
    %v632 = vadd.f32 0.0, %v631
    %633 = vmatmul.f32.gmra.mxu0 %v573
    %v634 = vpop.f32.mrf.mxu0
    %v635 = vadd.f32 0.0, %v634
    %636 = vmatmul.f32.gmra.mxu0 %v574
    %v637 = vpop.f32.mrf.mxu0
    %v638 = vadd.f32 0.0, %v637
    %639 = vmatmul.f32.gmra.mxu0 %v575
    %v640 = vpop.f32.mrf.mxu0
    %v641 = vadd.f32 0.0, %v640
    %642 = vmatmul.f32.gmra.mxu0 %v576
    %v643 = vpop.f32.mrf.mxu0
    %v644 = vadd.f32 0.0, %v643
    %645 = vmatmul.f32.gmra.mxu0 %v577
    %v646 = vpop.f32.mrf.mxu0
    %v647 = vadd.f32 0.0, %v646
    %648 = vmatmul.f32.gmra.mxu0 %v578
    %v649 = vpop.f32.mrf.mxu0
    %v650 = vadd.f32 0.0, %v649
    %651 = vmatmul.f32.gmra.mxu0 %v579
    %v652 = vpop.f32.mrf.mxu0
    %v653 = vadd.f32 0.0, %v652
    %654 = vmatmul.f32.gmra.mxu0 %v580
    %v655 = vpop.f32.mrf.mxu0
    %v656 = vadd.f32 0.0, %v655
    %657 = vmatmul.f32.gmra.mxu0 %v581
    %v658 = vpop.f32.mrf.mxu0
    %v659 = vadd.f32 0.0, %v658
    %660 = vmatmul.f32.gmra.mxu0 %v582
    %v661 = vpop.f32.mrf.mxu0
    %v662 = vadd.f32 0.0, %v661
    %663 = vdwg.mxu0
    %v664 = vsub.f32 %v23, %v617
    %v665 = vsub.f32 %v24, %v620
    %v666 = vsub.f32 %v25, %v623
    %v667 = vsub.f32 %v26, %v626
    %v668 = vsub.f32 %v27, %v629
    %v669 = vsub.f32 %v28, %v632
    %v670 = vsub.f32 %v29, %v635
    %v671 = vsub.f32 %v30, %v638
    %v672 = vsub.f32 %v31, %v641
    %v673 = vsub.f32 %v32, %v644
    %v674 = vsub.f32 %v33, %v647
    %v675 = vsub.f32 %v34, %v650
    %v676 = vsub.f32 %v35, %v653
    %v677 = vsub.f32 %v36, %v656
    %v678 = vsub.f32 %v37, %v659
    %v679 = vsub.f32 %v38, %v662
    %v680 = vmul.f32 %v664, %v664
    %v681 = vmul.f32 %v665, %v665
    %v682 = vmul.f32 %v666, %v666
    %v683 = vmul.f32 %v667, %v667
    %v684 = vmul.f32 %v668, %v668
    %v685 = vmul.f32 %v669, %v669
    %v686 = vmul.f32 %v670, %v670
    %v687 = vmul.f32 %v671, %v671
    %v688 = vmul.f32 %v672, %v672
    %v689 = vmul.f32 %v673, %v673
    %v690 = vmul.f32 %v674, %v674
    %v691 = vmul.f32 %v675, %v675
    %v692 = vmul.f32 %v676, %v676
    %v693 = vmul.f32 %v677, %v677
    %v694 = vmul.f32 %v678, %v678
    %v695 = vmul.f32 %v679, %v679
    %vm696 = vcmask 261120
    %v697 = vsel %vm696, %v680, 0.0
    %v698 = vsel %vm696, %v681, 0.0
    %v699 = vadd.f32 %v697, %v698
    %v700 = vsel %vm696, %v682, 0.0
    %v701 = vadd.f32 %v699, %v700
    %v702 = vsel %vm696, %v683, 0.0
    %v703 = vadd.f32 %v701, %v702
    %v704 = vsel %vm696, %v684, 0.0
    %v705 = vadd.f32 %v703, %v704
    %v706 = vsel %vm696, %v685, 0.0
    %v707 = vadd.f32 %v705, %v706
    %v708 = vsel %vm696, %v686, 0.0
    %v709 = vadd.f32 %v707, %v708
    %v710 = vsel %vm696, %v687, 0.0
    %v711 = vadd.f32 %v709, %v710
    %v712 = vsel %vm696, %v688, 0.0
    %v713 = vadd.f32 %v711, %v712
    %v714 = vsel %vm696, %v689, 0.0
    %v715 = vadd.f32 %v713, %v714
    %v716 = vsel %vm696, %v690, 0.0
    %v717 = vadd.f32 %v715, %v716
    %v718 = vsel %vm696, %v691, 0.0
    %v719 = vadd.f32 %v717, %v718
    %v720 = vsel %vm696, %v692, 0.0
    %v721 = vadd.f32 %v719, %v720
    %v722 = vsel %vm696, %v693, 0.0
    %v723 = vadd.f32 %v721, %v722
    %v724 = vsel %vm696, %v694, 0.0
    %v725 = vadd.f32 %v723, %v724
    %v726 = vsel %vm696, %v695, 0.0
    %v727 = vadd.f32 %v725, %v726
    %728 = vadd.xlane.f32.xlu0 %v727
    %v729 = vpop.xlane.xlu0 %728
    %v730 = vrot.slane %v729, 4
    %v731 = vadd.f32 %v729, %v730
    %v732 = vrot.slane %v731, 2
    %v733 = vadd.f32 %v731, %v732
    %v734 = vrot.slane %v733, 1
    %v735 = vadd.f32 %v733, %v734
    %s736 = vtos %v735
    %vm737 = vcmp.eq.s32.totalorder %v42, 0
    %vm738 = vcmp.eq.s32.totalorder %v40, 0
    %vm739 = vmand %vm737, %vm738
    %v740 = vsel %vm739, 1, 0
    %v741 = vcvt.s32.f32 %v740
    %v742 = vstv %s736
    %v743 = vmul.f32 %v741, %v742
    %v744 = vadd.f32 %v743, 0.0
    %761 = vrot.lane.b32.xlu0 %v680, 96
    %v762 = vpop.permute.xlu0 %761
    %763 = vrot.lane.b32.xlu0 %v681, 96
    %v764 = vpop.permute.xlu0 %763
    %765 = vrot.lane.b32.xlu0 %v682, 96
    %v766 = vpop.permute.xlu0 %765
    %767 = vrot.lane.b32.xlu0 %v683, 96
    %v768 = vpop.permute.xlu0 %767
    %769 = vrot.lane.b32.xlu0 %v684, 96
    %v770 = vpop.permute.xlu0 %769
    %771 = vrot.lane.b32.xlu0 %v685, 96
    %v772 = vpop.permute.xlu0 %771
    %773 = vrot.lane.b32.xlu0 %v686, 96
    %v774 = vpop.permute.xlu0 %773
    %775 = vrot.lane.b32.xlu0 %v687, 96
    %v776 = vpop.permute.xlu0 %775
    %777 = vrot.lane.b32.xlu0 %v688, 96
    %v778 = vpop.permute.xlu0 %777
    %779 = vrot.lane.b32.xlu0 %v689, 96
    %v780 = vpop.permute.xlu0 %779
    %781 = vrot.lane.b32.xlu0 %v690, 96
    %v782 = vpop.permute.xlu0 %781
    %783 = vrot.lane.b32.xlu0 %v691, 96
    %v784 = vpop.permute.xlu0 %783
    %785 = vrot.lane.b32.xlu0 %v692, 96
    %v786 = vpop.permute.xlu0 %785
    %787 = vrot.lane.b32.xlu0 %v693, 96
    %v788 = vpop.permute.xlu0 %787
    %789 = vrot.lane.b32.xlu0 %v694, 96
    %v790 = vpop.permute.xlu0 %789
    %791 = vrot.lane.b32.xlu0 %v695, 96
    %v792 = vpop.permute.xlu0 %791
    %v809 = vsel %vm696, %v762, 0.0
    %v810 = vsel %vm696, %v764, 0.0
    %v811 = vadd.f32 %v809, %v810
    %v812 = vsel %vm696, %v766, 0.0
    %v813 = vadd.f32 %v811, %v812
    %v814 = vsel %vm696, %v768, 0.0
    %v815 = vadd.f32 %v813, %v814
    %v816 = vsel %vm696, %v770, 0.0
    %v817 = vadd.f32 %v815, %v816
    %v818 = vsel %vm696, %v772, 0.0
    %v819 = vadd.f32 %v817, %v818
    %v820 = vsel %vm696, %v774, 0.0
    %v821 = vadd.f32 %v819, %v820
    %v822 = vsel %vm696, %v776, 0.0
    %v823 = vadd.f32 %v821, %v822
    %v824 = vsel %vm696, %v778, 0.0
    %v825 = vadd.f32 %v823, %v824
    %v826 = vsel %vm696, %v780, 0.0
    %v827 = vadd.f32 %v825, %v826
    %v828 = vsel %vm696, %v782, 0.0
    %v829 = vadd.f32 %v827, %v828
    %v830 = vsel %vm696, %v784, 0.0
    %v831 = vadd.f32 %v829, %v830
    %v832 = vsel %vm696, %v786, 0.0
    %v833 = vadd.f32 %v831, %v832
    %v834 = vsel %vm696, %v788, 0.0
    %v835 = vadd.f32 %v833, %v834
    %v836 = vsel %vm696, %v790, 0.0
    %v837 = vadd.f32 %v835, %v836
    %v838 = vsel %vm696, %v792, 0.0
    %v839 = vadd.f32 %v837, %v838
    %840 = vadd.xlane.f32.xlu0 %v839
    %v841 = vpop.xlane.xlu0 %840
    %v842 = vrot.slane %v841, 4
    %v843 = vadd.f32 %v841, %v842
    %v844 = vrot.slane %v843, 2
    %v845 = vadd.f32 %v843, %v844
    %v846 = vrot.slane %v845, 1
    %v847 = vadd.f32 %v845, %v846
    %s848 = vtos %v847
    %vm849 = vcmp.eq.s32.totalorder %v40, 1
    %vm850 = vmand %vm737, %vm849
    %v851 = vsel %vm850, 1, 0
    %v852 = vcvt.s32.f32 %v851
    %v853 = vstv %s848
    %v854 = vmul.f32 %v852, %v853
    %v855 = vadd.f32 %v744, %v854
    %856 = vst.msk [vmem:[%s6] sm:$0xff] %vm51, %v664
    %857 = vst.msk [vmem:[%s6 + $0x8] sm:$0xff] %vm51, %v665
    %858 = vst.msk [vmem:[%s6 + $0x10] sm:$0xff] %vm51, %v666
    %859 = vst.msk [vmem:[%s6 + $0x18] sm:$0xff] %vm51, %v667
    %860 = vst.msk [vmem:[%s6 + $0x20] sm:$0xff] %vm51, %v668
    %861 = vst.msk [vmem:[%s6 + $0x28] sm:$0xff] %vm51, %v669
    %862 = vst.msk [vmem:[%s6 + $0x30] sm:$0xff] %vm51, %v670
    %863 = vst.msk [vmem:[%s6 + $0x38] sm:$0xff] %vm51, %v671
    %864 = vst.msk [vmem:[%s6 + $0x40] sm:$0xff] %vm51, %v672
    %865 = vst.msk [vmem:[%s6 + $0x48] sm:$0xff] %vm51, %v673
    %866 = vst.msk [vmem:[%s6 + $0x50] sm:$0xff] %vm51, %v674
    %867 = vst.msk [vmem:[%s6 + $0x58] sm:$0xff] %vm51, %v675
    %868 = vst.msk [vmem:[%s6 + $0x60] sm:$0xff] %vm51, %v676
    %869 = vst.msk [vmem:[%s6 + $0x68] sm:$0xff] %vm51, %v677
    %870 = vst.msk [vmem:[%s6 + $0x70] sm:$0xff] %vm51, %v678
    %871 = vst.msk [vmem:[%s6 + $0x78] sm:$0xff] %vm51, %v679
    %s872 = scalar_lea.vmem %s1, 64
    %v873 = vld [vmem:[%s872] sm:$0xff]
    %v874 = vld [vmem:[%s872 + $0x8] sm:$0xff]
    %v875 = vld [vmem:[%s872 + $0x10] sm:$0xff]
    %v876 = vld [vmem:[%s872 + $0x18] sm:$0xff]
    %v877 = vld [vmem:[%s872 + $0x20] sm:$0xff]
    %v878 = vld [vmem:[%s872 + $0x28] sm:$0xff]
    %v879 = vld [vmem:[%s872 + $0x30] sm:$0xff]
    %v880 = vld [vmem:[%s872 + $0x38] sm:$0xff]
    %v882 = vsel %vm51, %v664, 0
    %v885 = vsel %vm51, %v665, 0
    %v888 = vsel %vm51, %v666, 0
    %v891 = vsel %vm51, %v667, 0
    %v894 = vsel %vm51, %v668, 0
    %v897 = vsel %vm51, %v669, 0
    %v900 = vsel %vm51, %v670, 0
    %v903 = vsel %vm51, %v671, 0
    %v906 = vsel %vm51, %v672, 0
    %v909 = vsel %vm51, %v673, 0
    %v912 = vsel %vm51, %v674, 0
    %v915 = vsel %vm51, %v675, 0
    %v918 = vsel %vm51, %v676, 0
    %v921 = vsel %vm51, %v677, 0
    %v924 = vsel %vm51, %v678, 0
    %v927 = vsel %vm51, %v679, 0
    %929 = vmatpush.msra.mxu0 0.0
    %930 = vmatpush.msra.mxu0 0.0
    %931 = vmatpush.msra.mxu0 0.0
    %932 = vmatpush.msra.mxu0 0.0
    %933 = vmatpush.msra.mxu0 0.0
    %934 = vmatpush.msra.mxu0 0.0
    %935 = vmatpush.msra.mxu0 0.0
    %936 = vmatpush.msra.mxu0 0.0
    %937 = vmatpush.msra.mxu0 %v880
    %938 = vmatpush.msra.mxu0 %v879
    %939 = vmatpush.msra.mxu0 %v878
    %940 = vmatpush.msra.mxu0 %v877
    %941 = vmatpush.msra.mxu0 %v876
    %942 = vmatpush.msra.mxu0 %v875
    %943 = vmatpush.msra.mxu0 %v874
    %944 = vmatpush.msra.mxu0 %v873
    %945 = vmatmul.f32.gmra.mxu0 %v882
    %v946 = vpop.f32.mrf.mxu0
    %v947 = vadd.f32 0.0, %v946
    %948 = vmatmul.f32.gmra.mxu0 %v885
    %v949 = vpop.f32.mrf.mxu0
    %v950 = vadd.f32 0.0, %v949
    %951 = vmatmul.f32.gmra.mxu0 %v888
    %v952 = vpop.f32.mrf.mxu0
    %v953 = vadd.f32 0.0, %v952
    %954 = vmatmul.f32.gmra.mxu0 %v891
    %v955 = vpop.f32.mrf.mxu0
    %v956 = vadd.f32 0.0, %v955
    %957 = vmatmul.f32.gmra.mxu0 %v894
    %v958 = vpop.f32.mrf.mxu0
    %v959 = vadd.f32 0.0, %v958
    %960 = vmatmul.f32.gmra.mxu0 %v897
    %v961 = vpop.f32.mrf.mxu0
    %v962 = vadd.f32 0.0, %v961
    %963 = vmatmul.f32.gmra.mxu0 %v900
    %v964 = vpop.f32.mrf.mxu0
    %v965 = vadd.f32 0.0, %v964
    %966 = vmatmul.f32.gmra.mxu0 %v903
    %v967 = vpop.f32.mrf.mxu0
    %v968 = vadd.f32 0.0, %v967
    %969 = vmatmul.f32.gmra.mxu0 %v906
    %v970 = vpop.f32.mrf.mxu0
    %v971 = vadd.f32 0.0, %v970
    %972 = vmatmul.f32.gmra.mxu0 %v909
    %v973 = vpop.f32.mrf.mxu0
    %v974 = vadd.f32 0.0, %v973
    %975 = vmatmul.f32.gmra.mxu0 %v912
    %v976 = vpop.f32.mrf.mxu0
    %v977 = vadd.f32 0.0, %v976
    %978 = vmatmul.f32.gmra.mxu0 %v915
    %v979 = vpop.f32.mrf.mxu0
    %v980 = vadd.f32 0.0, %v979
    %981 = vmatmul.f32.gmra.mxu0 %v918
    %v982 = vpop.f32.mrf.mxu0
    %v983 = vadd.f32 0.0, %v982
    %984 = vmatmul.f32.gmra.mxu0 %v921
    %v985 = vpop.f32.mrf.mxu0
    %v986 = vadd.f32 0.0, %v985
    %987 = vmatmul.f32.gmra.mxu0 %v924
    %v988 = vpop.f32.mrf.mxu0
    %v989 = vadd.f32 0.0, %v988
    %990 = vmatmul.f32.gmra.mxu0 %v927
    %v991 = vpop.f32.mrf.mxu0
    %v992 = vadd.f32 0.0, %v991
    %993 = vdwg.mxu0
    %s994 = scalar_lea.vmem %s3, 1
    %v995 = vld [vmem:[%s994] sm:$0x1]
    %v997 = vperm.slane %v995, 0
    %v999 = vsub.f32 %v997, %v947
    %v1000 = vsub.f32 %v997, %v950
    %v1001 = vsub.f32 %v997, %v953
    %v1002 = vsub.f32 %v997, %v956
    %v1003 = vsub.f32 %v997, %v959
    %v1004 = vsub.f32 %v997, %v962
    %v1005 = vsub.f32 %v997, %v965
    %v1006 = vsub.f32 %v997, %v968
    %v1007 = vsub.f32 %v997, %v971
    %v1008 = vsub.f32 %v997, %v974
    %v1009 = vsub.f32 %v997, %v977
    %v1010 = vsub.f32 %v997, %v980
    %v1011 = vsub.f32 %v997, %v983
    %v1012 = vsub.f32 %v997, %v986
    %v1013 = vsub.f32 %v997, %v989
    %v1014 = vsub.f32 %v997, %v992
    %v1015 = vsel %vm51, %v999, inf
    %1016 = vmin.index.xlane.f32.xlu0 %v1015
    %v1017 = vpop.xlane.xlu0 %1016
    %v1018 = vsel %vm51, %v1000, inf
    %1019 = vmin.index.xlane.f32.xlu0 %v1018
    %v1020 = vpop.xlane.xlu0 %1019
    %v1021 = vsel %vm51, %v1001, inf
    %1022 = vmin.index.xlane.f32.xlu0 %v1021
    %v1023 = vpop.xlane.xlu0 %1022
    %v1024 = vsel %vm51, %v1002, inf
    %1025 = vmin.index.xlane.f32.xlu0 %v1024
    %v1026 = vpop.xlane.xlu0 %1025
    %v1027 = vsel %vm51, %v1003, inf
    %1028 = vmin.index.xlane.f32.xlu0 %v1027
    %v1029 = vpop.xlane.xlu0 %1028
    %v1030 = vsel %vm51, %v1004, inf
    %1031 = vmin.index.xlane.f32.xlu0 %v1030
    %v1032 = vpop.xlane.xlu0 %1031
    %v1033 = vsel %vm51, %v1005, inf
    %1034 = vmin.index.xlane.f32.xlu0 %v1033
    %v1035 = vpop.xlane.xlu0 %1034
    %v1036 = vsel %vm51, %v1006, inf
    %1037 = vmin.index.xlane.f32.xlu0 %v1036
    %v1038 = vpop.xlane.xlu0 %1037
    %v1039 = vsel %vm51, %v1007, inf
    %1040 = vmin.index.xlane.f32.xlu0 %v1039
    %v1041 = vpop.xlane.xlu0 %1040
    %v1042 = vsel %vm51, %v1008, inf
    %1043 = vmin.index.xlane.f32.xlu0 %v1042
    %v1044 = vpop.xlane.xlu0 %1043
    %v1045 = vsel %vm51, %v1009, inf
    %1046 = vmin.index.xlane.f32.xlu0 %v1045
    %v1047 = vpop.xlane.xlu0 %1046
    %v1048 = vsel %vm51, %v1010, inf
    %1049 = vmin.index.xlane.f32.xlu0 %v1048
    %v1050 = vpop.xlane.xlu0 %1049
    %v1051 = vsel %vm51, %v1011, inf
    %1052 = vmin.index.xlane.f32.xlu0 %v1051
    %v1053 = vpop.xlane.xlu0 %1052
    %v1054 = vsel %vm51, %v1012, inf
    %1055 = vmin.index.xlane.f32.xlu0 %v1054
    %v1056 = vpop.xlane.xlu0 %1055
    %v1057 = vsel %vm51, %v1013, inf
    %1058 = vmin.index.xlane.f32.xlu0 %v1057
    %v1059 = vpop.xlane.xlu0 %1058
    %v1060 = vsel %vm51, %v1014, inf
    %1061 = vmin.index.xlane.f32.xlu0 %v1060
    %v1062 = vpop.xlane.xlu0 %1061
    %v1063 = vperm.slane %v1017, %v40
    %v1064 = vperm.slane %v1020, %v234
    %v1065 = vsel %vm236, %v1064, %v1063
    %v1066 = vperm.slane %v1023, %v238
    %v1067 = vsel %vm240, %v1066, %v1065
    %v1068 = vperm.slane %v1026, %v242
    %v1069 = vsel %vm244, %v1068, %v1067
    %v1070 = vperm.slane %v1029, %v246
    %v1071 = vsel %vm248, %v1070, %v1069
    %v1072 = vperm.slane %v1032, %v250
    %v1073 = vsel %vm252, %v1072, %v1071
    %v1074 = vperm.slane %v1035, %v254
    %v1075 = vsel %vm256, %v1074, %v1073
    %v1076 = vperm.slane %v1038, %v258
    %v1077 = vsel %vm260, %v1076, %v1075
    %v1078 = vperm.slane %v1041, %v262
    %v1079 = vsel %vm264, %v1078, %v1077
    %v1080 = vperm.slane %v1044, %v266
    %v1081 = vsel %vm268, %v1080, %v1079
    %v1082 = vperm.slane %v1047, %v270
    %v1083 = vsel %vm272, %v1082, %v1081
    %v1084 = vperm.slane %v1050, %v274
    %v1085 = vsel %vm276, %v1084, %v1083
    %v1086 = vperm.slane %v1053, %v278
    %v1087 = vsel %vm280, %v1086, %v1085
    %v1088 = vperm.slane %v1056, %v282
    %v1089 = vsel %vm284, %v1088, %v1087
    %v1090 = vperm.slane %v1059, %v286
    %v1091 = vsel %vm288, %v1090, %v1089
    %v1092 = vperm.slane %v1062, %v290
    %v1093 = vsel %vm292, %v1092, %v1091
    %1094 = vst [vmem:[#allocation2 + $0x2] sm:$0x1] %v1093
    %vm1095 = vcmp.eq.s32.totalorder %v40, %v1017
    %vm1096 = vcmp.eq.s32.totalorder %v40, %v1020
    %vm1097 = vcmp.eq.s32.totalorder %v40, %v1023
    %vm1098 = vcmp.eq.s32.totalorder %v40, %v1026
    %vm1099 = vcmp.eq.s32.totalorder %v40, %v1029
    %vm1100 = vcmp.eq.s32.totalorder %v40, %v1032
    %vm1101 = vcmp.eq.s32.totalorder %v40, %v1035
    %vm1102 = vcmp.eq.s32.totalorder %v40, %v1038
    %vm1103 = vcmp.eq.s32.totalorder %v40, %v1041
    %vm1104 = vcmp.eq.s32.totalorder %v40, %v1044
    %vm1105 = vcmp.eq.s32.totalorder %v40, %v1047
    %vm1106 = vcmp.eq.s32.totalorder %v40, %v1050
    %vm1107 = vcmp.eq.s32.totalorder %v40, %v1053
    %vm1108 = vcmp.eq.s32.totalorder %v40, %v1056
    %vm1109 = vcmp.eq.s32.totalorder %v40, %v1059
    %vm1110 = vcmp.eq.s32.totalorder %v40, %v1062
    %v1111 = vsel %vm1095, 1, 0
    %v1112 = vsel %vm1096, 1, 0
    %v1113 = vsel %vm1097, 1, 0
    %v1114 = vsel %vm1098, 1, 0
    %v1115 = vsel %vm1099, 1, 0
    %v1116 = vsel %vm1100, 1, 0
    %v1117 = vsel %vm1101, 1, 0
    %v1118 = vsel %vm1102, 1, 0
    %v1119 = vsel %vm1103, 1, 0
    %v1120 = vsel %vm1104, 1, 0
    %v1121 = vsel %vm1105, 1, 0
    %v1122 = vsel %vm1106, 1, 0
    %v1123 = vsel %vm1107, 1, 0
    %v1124 = vsel %vm1108, 1, 0
    %v1125 = vsel %vm1109, 1, 0
    %v1126 = vsel %vm1110, 1, 0
    %v1127 = vcvt.s32.f32 %v1111
    %v1128 = vcvt.s32.f32 %v1112
    %v1129 = vcvt.s32.f32 %v1113
    %v1130 = vcvt.s32.f32 %v1114
    %v1131 = vcvt.s32.f32 %v1115
    %v1132 = vcvt.s32.f32 %v1116
    %v1133 = vcvt.s32.f32 %v1117
    %v1134 = vcvt.s32.f32 %v1118
    %v1135 = vcvt.s32.f32 %v1119
    %v1136 = vcvt.s32.f32 %v1120
    %v1137 = vcvt.s32.f32 %v1121
    %v1138 = vcvt.s32.f32 %v1122
    %v1139 = vcvt.s32.f32 %v1123
    %v1140 = vcvt.s32.f32 %v1124
    %v1141 = vcvt.s32.f32 %v1125
    %v1142 = vcvt.s32.f32 %v1126
    %v1143 = vadd.f32 %v1127, 0.0
    %v1144 = vadd.f32 %v1128, 0.0
    %v1145 = vadd.f32 %v1129, 0.0
    %v1146 = vadd.f32 %v1130, 0.0
    %v1147 = vadd.f32 %v1131, 0.0
    %v1148 = vadd.f32 %v1132, 0.0
    %v1149 = vadd.f32 %v1133, 0.0
    %v1150 = vadd.f32 %v1134, 0.0
    %v1151 = vadd.f32 %v1135, 0.0
    %v1152 = vadd.f32 %v1136, 0.0
    %v1153 = vadd.f32 %v1137, 0.0
    %v1154 = vadd.f32 %v1138, 0.0
    %v1155 = vadd.f32 %v1139, 0.0
    %v1156 = vadd.f32 %v1140, 0.0
    %v1157 = vadd.f32 %v1141, 0.0
    %v1158 = vadd.f32 %v1142, 0.0
    %1175 = vrot.lane.b32.xlu0 %v999, 64
    %v1176 = vpop.permute.xlu0 %1175
    %1177 = vrot.lane.b32.xlu0 %v1000, 64
    %v1178 = vpop.permute.xlu0 %1177
    %1179 = vrot.lane.b32.xlu0 %v1001, 64
    %v1180 = vpop.permute.xlu0 %1179
    %1181 = vrot.lane.b32.xlu0 %v1002, 64
    %v1182 = vpop.permute.xlu0 %1181
    %1183 = vrot.lane.b32.xlu0 %v1003, 64
    %v1184 = vpop.permute.xlu0 %1183
    %1185 = vrot.lane.b32.xlu0 %v1004, 64
    %v1186 = vpop.permute.xlu0 %1185
    %1187 = vrot.lane.b32.xlu0 %v1005, 64
    %v1188 = vpop.permute.xlu0 %1187
    %1189 = vrot.lane.b32.xlu0 %v1006, 64
    %v1190 = vpop.permute.xlu0 %1189
    %1191 = vrot.lane.b32.xlu0 %v1007, 64
    %v1192 = vpop.permute.xlu0 %1191
    %1193 = vrot.lane.b32.xlu0 %v1008, 64
    %v1194 = vpop.permute.xlu0 %1193
    %1195 = vrot.lane.b32.xlu0 %v1009, 64
    %v1196 = vpop.permute.xlu0 %1195
    %1197 = vrot.lane.b32.xlu0 %v1010, 64
    %v1198 = vpop.permute.xlu0 %1197
    %1199 = vrot.lane.b32.xlu0 %v1011, 64
    %v1200 = vpop.permute.xlu0 %1199
    %1201 = vrot.lane.b32.xlu0 %v1012, 64
    %v1202 = vpop.permute.xlu0 %1201
    %1203 = vrot.lane.b32.xlu0 %v1013, 64
    %v1204 = vpop.permute.xlu0 %1203
    %1205 = vrot.lane.b32.xlu0 %v1014, 64
    %v1206 = vpop.permute.xlu0 %1205
    %v1223 = vsel %vm51, %v1176, inf
    %1224 = vmin.index.xlane.f32.xlu0 %v1223
    %v1225 = vpop.xlane.xlu0 %1224
    %v1226 = vsel %vm51, %v1178, inf
    %1227 = vmin.index.xlane.f32.xlu0 %v1226
    %v1228 = vpop.xlane.xlu0 %1227
    %v1229 = vsel %vm51, %v1180, inf
    %1230 = vmin.index.xlane.f32.xlu0 %v1229
    %v1231 = vpop.xlane.xlu0 %1230
    %v1232 = vsel %vm51, %v1182, inf
    %1233 = vmin.index.xlane.f32.xlu0 %v1232
    %v1234 = vpop.xlane.xlu0 %1233
    %v1235 = vsel %vm51, %v1184, inf
    %1236 = vmin.index.xlane.f32.xlu0 %v1235
    %v1237 = vpop.xlane.xlu0 %1236
    %v1238 = vsel %vm51, %v1186, inf
    %1239 = vmin.index.xlane.f32.xlu0 %v1238
    %v1240 = vpop.xlane.xlu0 %1239
    %v1241 = vsel %vm51, %v1188, inf
    %1242 = vmin.index.xlane.f32.xlu0 %v1241
    %v1243 = vpop.xlane.xlu0 %1242
    %v1244 = vsel %vm51, %v1190, inf
    %1245 = vmin.index.xlane.f32.xlu0 %v1244
    %v1246 = vpop.xlane.xlu0 %1245
    %v1247 = vsel %vm51, %v1192, inf
    %1248 = vmin.index.xlane.f32.xlu0 %v1247
    %v1249 = vpop.xlane.xlu0 %1248
    %v1250 = vsel %vm51, %v1194, inf
    %1251 = vmin.index.xlane.f32.xlu0 %v1250
    %v1252 = vpop.xlane.xlu0 %1251
    %v1253 = vsel %vm51, %v1196, inf
    %1254 = vmin.index.xlane.f32.xlu0 %v1253
    %v1255 = vpop.xlane.xlu0 %1254
    %v1256 = vsel %vm51, %v1198, inf
    %1257 = vmin.index.xlane.f32.xlu0 %v1256
    %v1258 = vpop.xlane.xlu0 %1257
    %v1259 = vsel %vm51, %v1200, inf
    %1260 = vmin.index.xlane.f32.xlu0 %v1259
    %v1261 = vpop.xlane.xlu0 %1260
    %v1262 = vsel %vm51, %v1202, inf
    %1263 = vmin.index.xlane.f32.xlu0 %v1262
    %v1264 = vpop.xlane.xlu0 %1263
    %v1265 = vsel %vm51, %v1204, inf
    %1266 = vmin.index.xlane.f32.xlu0 %v1265
    %v1267 = vpop.xlane.xlu0 %1266
    %v1268 = vsel %vm51, %v1206, inf
    %1269 = vmin.index.xlane.f32.xlu0 %v1268
    %v1270 = vpop.xlane.xlu0 %1269
    %v1271 = vperm.slane %v1225, %v40
    %v1272 = vperm.slane %v1228, %v234
    %v1273 = vsel %vm236, %v1272, %v1271
    %v1274 = vperm.slane %v1231, %v238
    %v1275 = vsel %vm240, %v1274, %v1273
    %v1276 = vperm.slane %v1234, %v242
    %v1277 = vsel %vm244, %v1276, %v1275
    %v1278 = vperm.slane %v1237, %v246
    %v1279 = vsel %vm248, %v1278, %v1277
    %v1280 = vperm.slane %v1240, %v250
    %v1281 = vsel %vm252, %v1280, %v1279
    %v1282 = vperm.slane %v1243, %v254
    %v1283 = vsel %vm256, %v1282, %v1281
    %v1284 = vperm.slane %v1246, %v258
    %v1285 = vsel %vm260, %v1284, %v1283
    %v1286 = vperm.slane %v1249, %v262
    %v1287 = vsel %vm264, %v1286, %v1285
    %v1288 = vperm.slane %v1252, %v266
    %v1289 = vsel %vm268, %v1288, %v1287
    %v1290 = vperm.slane %v1255, %v270
    %v1291 = vsel %vm272, %v1290, %v1289
    %v1292 = vperm.slane %v1258, %v274
    %v1293 = vsel %vm276, %v1292, %v1291
    %v1294 = vperm.slane %v1261, %v278
    %v1295 = vsel %vm280, %v1294, %v1293
    %v1296 = vperm.slane %v1264, %v282
    %v1297 = vsel %vm284, %v1296, %v1295
    %v1298 = vperm.slane %v1267, %v286
    %v1299 = vsel %vm288, %v1298, %v1297
    %v1300 = vperm.slane %v1270, %v290
    %v1301 = vsel %vm292, %v1300, %v1299
    %1302 = vst [vmem:[#allocation2 + $0x3] sm:$0x1] %v1301
    %v1303 = vadd.s32 %v1225, 64
    %v1304 = vadd.s32 %v1228, 64
    %v1305 = vadd.s32 %v1231, 64
    %v1306 = vadd.s32 %v1234, 64
    %v1307 = vadd.s32 %v1237, 64
    %v1308 = vadd.s32 %v1240, 64
    %v1309 = vadd.s32 %v1243, 64
    %v1310 = vadd.s32 %v1246, 64
    %v1311 = vadd.s32 %v1249, 64
    %v1312 = vadd.s32 %v1252, 64
    %v1313 = vadd.s32 %v1255, 64
    %v1314 = vadd.s32 %v1258, 64
    %v1315 = vadd.s32 %v1261, 64
    %v1316 = vadd.s32 %v1264, 64
    %v1317 = vadd.s32 %v1267, 64
    %v1318 = vadd.s32 %v1270, 64
    %vm1319 = vcmp.eq.s32.totalorder %v40, %v1303
    %vm1320 = vcmp.eq.s32.totalorder %v40, %v1304
    %vm1321 = vcmp.eq.s32.totalorder %v40, %v1305
    %vm1322 = vcmp.eq.s32.totalorder %v40, %v1306
    %vm1323 = vcmp.eq.s32.totalorder %v40, %v1307
    %vm1324 = vcmp.eq.s32.totalorder %v40, %v1308
    %vm1325 = vcmp.eq.s32.totalorder %v40, %v1309
    %vm1326 = vcmp.eq.s32.totalorder %v40, %v1310
    %vm1327 = vcmp.eq.s32.totalorder %v40, %v1311
    %vm1328 = vcmp.eq.s32.totalorder %v40, %v1312
    %vm1329 = vcmp.eq.s32.totalorder %v40, %v1313
    %vm1330 = vcmp.eq.s32.totalorder %v40, %v1314
    %vm1331 = vcmp.eq.s32.totalorder %v40, %v1315
    %vm1332 = vcmp.eq.s32.totalorder %v40, %v1316
    %vm1333 = vcmp.eq.s32.totalorder %v40, %v1317
    %vm1334 = vcmp.eq.s32.totalorder %v40, %v1318
    %v1335 = vsel %vm1319, 1, 0
    %v1336 = vsel %vm1320, 1, 0
    %v1337 = vsel %vm1321, 1, 0
    %v1338 = vsel %vm1322, 1, 0
    %v1339 = vsel %vm1323, 1, 0
    %v1340 = vsel %vm1324, 1, 0
    %v1341 = vsel %vm1325, 1, 0
    %v1342 = vsel %vm1326, 1, 0
    %v1343 = vsel %vm1327, 1, 0
    %v1344 = vsel %vm1328, 1, 0
    %v1345 = vsel %vm1329, 1, 0
    %v1346 = vsel %vm1330, 1, 0
    %v1347 = vsel %vm1331, 1, 0
    %v1348 = vsel %vm1332, 1, 0
    %v1349 = vsel %vm1333, 1, 0
    %v1350 = vsel %vm1334, 1, 0
    %v1351 = vcvt.s32.f32 %v1335
    %v1352 = vcvt.s32.f32 %v1336
    %v1353 = vcvt.s32.f32 %v1337
    %v1354 = vcvt.s32.f32 %v1338
    %v1355 = vcvt.s32.f32 %v1339
    %v1356 = vcvt.s32.f32 %v1340
    %v1357 = vcvt.s32.f32 %v1341
    %v1358 = vcvt.s32.f32 %v1342
    %v1359 = vcvt.s32.f32 %v1343
    %v1360 = vcvt.s32.f32 %v1344
    %v1361 = vcvt.s32.f32 %v1345
    %v1362 = vcvt.s32.f32 %v1346
    %v1363 = vcvt.s32.f32 %v1347
    %v1364 = vcvt.s32.f32 %v1348
    %v1365 = vcvt.s32.f32 %v1349
    %v1366 = vcvt.s32.f32 %v1350
    %v1367 = vadd.f32 %v1143, %v1351
    %v1368 = vadd.f32 %v1144, %v1352
    %v1369 = vadd.f32 %v1145, %v1353
    %v1370 = vadd.f32 %v1146, %v1354
    %v1371 = vadd.f32 %v1147, %v1355
    %v1372 = vadd.f32 %v1148, %v1356
    %v1373 = vadd.f32 %v1149, %v1357
    %v1374 = vadd.f32 %v1150, %v1358
    %v1375 = vadd.f32 %v1151, %v1359
    %v1376 = vadd.f32 %v1152, %v1360
    %v1377 = vadd.f32 %v1153, %v1361
    %v1378 = vadd.f32 %v1154, %v1362
    %v1379 = vadd.f32 %v1155, %v1363
    %v1380 = vadd.f32 %v1156, %v1364
    %v1381 = vadd.f32 %v1157, %v1365
    %v1382 = vadd.f32 %v1158, %v1366
    %s1383 = scalar_lea.vmem %s2, 128
    %v1384 = vld [vmem:[%s1383] sm:$0xff]
    %v1385 = vld [vmem:[%s1383 + $0x8] sm:$0xff]
    %v1386 = vld [vmem:[%s1383 + $0x10] sm:$0xff]
    %v1387 = vld [vmem:[%s1383 + $0x18] sm:$0xff]
    %v1388 = vld [vmem:[%s1383 + $0x20] sm:$0xff]
    %v1389 = vld [vmem:[%s1383 + $0x28] sm:$0xff]
    %v1390 = vld [vmem:[%s1383 + $0x30] sm:$0xff]
    %v1391 = vld [vmem:[%s1383 + $0x38] sm:$0xff]
    %v1392 = vld [vmem:[%s1383 + $0x40] sm:$0xff]
    %v1393 = vld [vmem:[%s1383 + $0x48] sm:$0xff]
    %v1394 = vld [vmem:[%s1383 + $0x50] sm:$0xff]
    %v1395 = vld [vmem:[%s1383 + $0x58] sm:$0xff]
    %v1396 = vld [vmem:[%s1383 + $0x60] sm:$0xff]
    %v1397 = vld [vmem:[%s1383 + $0x68] sm:$0xff]
    %v1398 = vld [vmem:[%s1383 + $0x70] sm:$0xff]
    %v1399 = vld [vmem:[%s1383 + $0x78] sm:$0xff]
    %1400 = vmatpush.msra.mxu0 %v1399
    %1401 = vmatpush.msra.mxu0 %v1398
    %1402 = vmatpush.msra.mxu0 %v1397
    %1403 = vmatpush.msra.mxu0 %v1396
    %1404 = vmatpush.msra.mxu0 %v1395
    %1405 = vmatpush.msra.mxu0 %v1394
    %1406 = vmatpush.msra.mxu0 %v1393
    %1407 = vmatpush.msra.mxu0 %v1392
    %1408 = vmatpush.msra.mxu0 %v1391
    %1409 = vmatpush.msra.mxu0 %v1390
    %1410 = vmatpush.msra.mxu0 %v1389
    %1411 = vmatpush.msra.mxu0 %v1388
    %1412 = vmatpush.msra.mxu0 %v1387
    %1413 = vmatpush.msra.mxu0 %v1386
    %1414 = vmatpush.msra.mxu0 %v1385
    %1415 = vmatpush.msra.mxu0 %v1384
    %1416 = vmatmul.f32.gmra.mxu0 %v1367
    %v1417 = vpop.f32.mrf.mxu0
    %v1418 = vadd.f32 0.0, %v1417
    %1419 = vmatmul.f32.gmra.mxu0 %v1368
    %v1420 = vpop.f32.mrf.mxu0
    %v1421 = vadd.f32 0.0, %v1420
    %1422 = vmatmul.f32.gmra.mxu0 %v1369
    %v1423 = vpop.f32.mrf.mxu0
    %v1424 = vadd.f32 0.0, %v1423
    %1425 = vmatmul.f32.gmra.mxu0 %v1370
    %v1426 = vpop.f32.mrf.mxu0
    %v1427 = vadd.f32 0.0, %v1426
    %1428 = vmatmul.f32.gmra.mxu0 %v1371
    %v1429 = vpop.f32.mrf.mxu0
    %v1430 = vadd.f32 0.0, %v1429
    %1431 = vmatmul.f32.gmra.mxu0 %v1372
    %v1432 = vpop.f32.mrf.mxu0
    %v1433 = vadd.f32 0.0, %v1432
    %1434 = vmatmul.f32.gmra.mxu0 %v1373
    %v1435 = vpop.f32.mrf.mxu0
    %v1436 = vadd.f32 0.0, %v1435
    %1437 = vmatmul.f32.gmra.mxu0 %v1374
    %v1438 = vpop.f32.mrf.mxu0
    %v1439 = vadd.f32 0.0, %v1438
    %1440 = vmatmul.f32.gmra.mxu0 %v1375
    %v1441 = vpop.f32.mrf.mxu0
    %v1442 = vadd.f32 0.0, %v1441
    %1443 = vmatmul.f32.gmra.mxu0 %v1376
    %v1444 = vpop.f32.mrf.mxu0
    %v1445 = vadd.f32 0.0, %v1444
    %1446 = vmatmul.f32.gmra.mxu0 %v1377
    %v1447 = vpop.f32.mrf.mxu0
    %v1448 = vadd.f32 0.0, %v1447
    %1449 = vmatmul.f32.gmra.mxu0 %v1378
    %v1450 = vpop.f32.mrf.mxu0
    %v1451 = vadd.f32 0.0, %v1450
    %1452 = vmatmul.f32.gmra.mxu0 %v1379
    %v1453 = vpop.f32.mrf.mxu0
    %v1454 = vadd.f32 0.0, %v1453
    %1455 = vmatmul.f32.gmra.mxu0 %v1380
    %v1456 = vpop.f32.mrf.mxu0
    %v1457 = vadd.f32 0.0, %v1456
    %1458 = vmatmul.f32.gmra.mxu0 %v1381
    %v1459 = vpop.f32.mrf.mxu0
    %v1460 = vadd.f32 0.0, %v1459
    %1461 = vmatmul.f32.gmra.mxu0 %v1382
    %v1462 = vpop.f32.mrf.mxu0
    %v1463 = vadd.f32 0.0, %v1462
    %1464 = vdwg.mxu0
    %v1465 = vsub.f32 %v664, %v1418
    %v1466 = vsub.f32 %v665, %v1421
    %v1467 = vsub.f32 %v666, %v1424
    %v1468 = vsub.f32 %v667, %v1427
    %v1469 = vsub.f32 %v668, %v1430
    %v1470 = vsub.f32 %v669, %v1433
    %v1471 = vsub.f32 %v670, %v1436
    %v1472 = vsub.f32 %v671, %v1439
    %v1473 = vsub.f32 %v672, %v1442
    %v1474 = vsub.f32 %v673, %v1445
    %v1475 = vsub.f32 %v674, %v1448
    %v1476 = vsub.f32 %v675, %v1451
    %v1477 = vsub.f32 %v676, %v1454
    %v1478 = vsub.f32 %v677, %v1457
    %v1479 = vsub.f32 %v678, %v1460
    %v1480 = vsub.f32 %v679, %v1463
    %v1481 = vmul.f32 %v1465, %v1465
    %v1482 = vmul.f32 %v1466, %v1466
    %v1483 = vmul.f32 %v1467, %v1467
    %v1484 = vmul.f32 %v1468, %v1468
    %v1485 = vmul.f32 %v1469, %v1469
    %v1486 = vmul.f32 %v1470, %v1470
    %v1487 = vmul.f32 %v1471, %v1471
    %v1488 = vmul.f32 %v1472, %v1472
    %v1489 = vmul.f32 %v1473, %v1473
    %v1490 = vmul.f32 %v1474, %v1474
    %v1491 = vmul.f32 %v1475, %v1475
    %v1492 = vmul.f32 %v1476, %v1476
    %v1493 = vmul.f32 %v1477, %v1477
    %v1494 = vmul.f32 %v1478, %v1478
    %v1495 = vmul.f32 %v1479, %v1479
    %v1496 = vmul.f32 %v1480, %v1480
    %v1497 = vsel %vm696, %v1481, 0.0
    %v1498 = vsel %vm696, %v1482, 0.0
    %v1499 = vadd.f32 %v1497, %v1498
    %v1500 = vsel %vm696, %v1483, 0.0
    %v1501 = vadd.f32 %v1499, %v1500
    %v1502 = vsel %vm696, %v1484, 0.0
    %v1503 = vadd.f32 %v1501, %v1502
    %v1504 = vsel %vm696, %v1485, 0.0
    %v1505 = vadd.f32 %v1503, %v1504
    %v1506 = vsel %vm696, %v1486, 0.0
    %v1507 = vadd.f32 %v1505, %v1506
    %v1508 = vsel %vm696, %v1487, 0.0
    %v1509 = vadd.f32 %v1507, %v1508
    %v1510 = vsel %vm696, %v1488, 0.0
    %v1511 = vadd.f32 %v1509, %v1510
    %v1512 = vsel %vm696, %v1489, 0.0
    %v1513 = vadd.f32 %v1511, %v1512
    %v1514 = vsel %vm696, %v1490, 0.0
    %v1515 = vadd.f32 %v1513, %v1514
    %v1516 = vsel %vm696, %v1491, 0.0
    %v1517 = vadd.f32 %v1515, %v1516
    %v1518 = vsel %vm696, %v1492, 0.0
    %v1519 = vadd.f32 %v1517, %v1518
    %v1520 = vsel %vm696, %v1493, 0.0
    %v1521 = vadd.f32 %v1519, %v1520
    %v1522 = vsel %vm696, %v1494, 0.0
    %v1523 = vadd.f32 %v1521, %v1522
    %v1524 = vsel %vm696, %v1495, 0.0
    %v1525 = vadd.f32 %v1523, %v1524
    %v1526 = vsel %vm696, %v1496, 0.0
    %v1527 = vadd.f32 %v1525, %v1526
    %1528 = vadd.xlane.f32.xlu0 %v1527
    %v1529 = vpop.xlane.xlu0 %1528
    %v1530 = vrot.slane %v1529, 4
    %v1531 = vadd.f32 %v1529, %v1530
    %v1532 = vrot.slane %v1531, 2
    %v1533 = vadd.f32 %v1531, %v1532
    %v1534 = vrot.slane %v1533, 1
    %v1535 = vadd.f32 %v1533, %v1534
    %s1536 = vtos %v1535
    %vm1537 = vcmp.eq.s32.totalorder %v40, 2
    %vm1538 = vmand %vm737, %vm1537
    %v1539 = vsel %vm1538, 1, 0
    %v1540 = vcvt.s32.f32 %v1539
    %v1541 = vstv %s1536
    %v1542 = vmul.f32 %v1540, %v1541
    %v1543 = vadd.f32 %v855, %v1542
    %1560 = vrot.lane.b32.xlu0 %v1481, 96
    %v1561 = vpop.permute.xlu0 %1560
    %1562 = vrot.lane.b32.xlu0 %v1482, 96
    %v1563 = vpop.permute.xlu0 %1562
    %1564 = vrot.lane.b32.xlu0 %v1483, 96
    %v1565 = vpop.permute.xlu0 %1564
    %1566 = vrot.lane.b32.xlu0 %v1484, 96
    %v1567 = vpop.permute.xlu0 %1566
    %1568 = vrot.lane.b32.xlu0 %v1485, 96
    %v1569 = vpop.permute.xlu0 %1568
    %1570 = vrot.lane.b32.xlu0 %v1486, 96
    %v1571 = vpop.permute.xlu0 %1570
    %1572 = vrot.lane.b32.xlu0 %v1487, 96
    %v1573 = vpop.permute.xlu0 %1572
    %1574 = vrot.lane.b32.xlu0 %v1488, 96
    %v1575 = vpop.permute.xlu0 %1574
    %1576 = vrot.lane.b32.xlu0 %v1489, 96
    %v1577 = vpop.permute.xlu0 %1576
    %1578 = vrot.lane.b32.xlu0 %v1490, 96
    %v1579 = vpop.permute.xlu0 %1578
    %1580 = vrot.lane.b32.xlu0 %v1491, 96
    %v1581 = vpop.permute.xlu0 %1580
    %1582 = vrot.lane.b32.xlu0 %v1492, 96
    %v1583 = vpop.permute.xlu0 %1582
    %1584 = vrot.lane.b32.xlu0 %v1493, 96
    %v1585 = vpop.permute.xlu0 %1584
    %1586 = vrot.lane.b32.xlu0 %v1494, 96
    %v1587 = vpop.permute.xlu0 %1586
    %1588 = vrot.lane.b32.xlu0 %v1495, 96
    %v1589 = vpop.permute.xlu0 %1588
    %1590 = vrot.lane.b32.xlu0 %v1496, 96
    %v1591 = vpop.permute.xlu0 %1590
    %v1608 = vsel %vm696, %v1561, 0.0
    %v1609 = vsel %vm696, %v1563, 0.0
    %v1610 = vadd.f32 %v1608, %v1609
    %v1611 = vsel %vm696, %v1565, 0.0
    %v1612 = vadd.f32 %v1610, %v1611
    %v1613 = vsel %vm696, %v1567, 0.0
    %v1614 = vadd.f32 %v1612, %v1613
    %v1615 = vsel %vm696, %v1569, 0.0
    %v1616 = vadd.f32 %v1614, %v1615
    %v1617 = vsel %vm696, %v1571, 0.0
    %v1618 = vadd.f32 %v1616, %v1617
    %v1619 = vsel %vm696, %v1573, 0.0
    %v1620 = vadd.f32 %v1618, %v1619
    %v1621 = vsel %vm696, %v1575, 0.0
    %v1622 = vadd.f32 %v1620, %v1621
    %v1623 = vsel %vm696, %v1577, 0.0
    %v1624 = vadd.f32 %v1622, %v1623
    %v1625 = vsel %vm696, %v1579, 0.0
    %v1626 = vadd.f32 %v1624, %v1625
    %v1627 = vsel %vm696, %v1581, 0.0
    %v1628 = vadd.f32 %v1626, %v1627
    %v1629 = vsel %vm696, %v1583, 0.0
    %v1630 = vadd.f32 %v1628, %v1629
    %v1631 = vsel %vm696, %v1585, 0.0
    %v1632 = vadd.f32 %v1630, %v1631
    %v1633 = vsel %vm696, %v1587, 0.0
    %v1634 = vadd.f32 %v1632, %v1633
    %v1635 = vsel %vm696, %v1589, 0.0
    %v1636 = vadd.f32 %v1634, %v1635
    %v1637 = vsel %vm696, %v1591, 0.0
    %v1638 = vadd.f32 %v1636, %v1637
    %1639 = vadd.xlane.f32.xlu0 %v1638
    %v1640 = vpop.xlane.xlu0 %1639
    %v1641 = vrot.slane %v1640, 4
    %v1642 = vadd.f32 %v1640, %v1641
    %v1643 = vrot.slane %v1642, 2
    %v1644 = vadd.f32 %v1642, %v1643
    %v1645 = vrot.slane %v1644, 1
    %v1646 = vadd.f32 %v1644, %v1645
    %s1647 = vtos %v1646
    %vm1648 = vcmp.eq.s32.totalorder %v40, 3
    %vm1649 = vmand %vm737, %vm1648
    %v1650 = vsel %vm1649, 1, 0
    %v1651 = vcvt.s32.f32 %v1650
    %v1652 = vstv %s1647
    %v1653 = vmul.f32 %v1651, %v1652
    %v1654 = vadd.f32 %v1543, %v1653
    %v1655 = vsub.f32 %v23, %v1465
    %v1656 = vsub.f32 %v24, %v1466
    %v1657 = vsub.f32 %v25, %v1467
    %v1658 = vsub.f32 %v26, %v1468
    %v1659 = vsub.f32 %v27, %v1469
    %v1660 = vsub.f32 %v28, %v1470
    %v1661 = vsub.f32 %v29, %v1471
    %v1662 = vsub.f32 %v30, %v1472
    %v1663 = vsub.f32 %v31, %v1473
    %v1664 = vsub.f32 %v32, %v1474
    %v1665 = vsub.f32 %v33, %v1475
    %v1666 = vsub.f32 %v34, %v1476
    %v1667 = vsub.f32 %v35, %v1477
    %v1668 = vsub.f32 %v36, %v1478
    %v1669 = vsub.f32 %v37, %v1479
    %v1670 = vsub.f32 %v38, %v1480
    %1671 = vst.msk [vmem:[%s4] sm:$0xff] %vm51, %v1655
    %1672 = vst.msk [vmem:[%s4 + $0x8] sm:$0xff] %vm51, %v1656
    %1673 = vst.msk [vmem:[%s4 + $0x10] sm:$0xff] %vm51, %v1657
    %1674 = vst.msk [vmem:[%s4 + $0x18] sm:$0xff] %vm51, %v1658
    %1675 = vst.msk [vmem:[%s4 + $0x20] sm:$0xff] %vm51, %v1659
    %1676 = vst.msk [vmem:[%s4 + $0x28] sm:$0xff] %vm51, %v1660
    %1677 = vst.msk [vmem:[%s4 + $0x30] sm:$0xff] %vm51, %v1661
    %1678 = vst.msk [vmem:[%s4 + $0x38] sm:$0xff] %vm51, %v1662
    %1679 = vst.msk [vmem:[%s4 + $0x40] sm:$0xff] %vm51, %v1663
    %1680 = vst.msk [vmem:[%s4 + $0x48] sm:$0xff] %vm51, %v1664
    %1681 = vst.msk [vmem:[%s4 + $0x50] sm:$0xff] %vm51, %v1665
    %1682 = vst.msk [vmem:[%s4 + $0x58] sm:$0xff] %vm51, %v1666
    %1683 = vst.msk [vmem:[%s4 + $0x60] sm:$0xff] %vm51, %v1667
    %1684 = vst.msk [vmem:[%s4 + $0x68] sm:$0xff] %vm51, %v1668
    %1685 = vst.msk [vmem:[%s4 + $0x70] sm:$0xff] %vm51, %v1669
    %1686 = vst.msk [vmem:[%s4 + $0x78] sm:$0xff] %vm51, %v1670
    %1687 = vst [vmem:[#allocation4] sm:$0xff] %v1654
    // Predicated region
    $region18: #{tpu_custom_call.1} parent=1 // pred_check
      _
    $region19: #{tpu_custom_call.1} parent=1 // pred_check_branch
      %1689 = sbr.rel (0) target = $region21
    $region20: #{tpu_custom_call.1} parent=1 // pred_region
      _
    $region21: #{tpu_custom_call.1} parent=1 // pred_fallthru
      _
    // Predicated region
    $region22: #{tpu_custom_call.1} parent=1 // pred_check
      _
    $region23: #{tpu_custom_call.1} parent=1 // pred_check_branch
      %1691 = sbr.rel (0) target = $region25
    $region24: #{tpu_custom_call.1} parent=1 // pred_region
      %1693 = vsyncadd [#allocation3], 0
      %s1695 = sshll.u32 [#allocation2], 4
      %s1696 = int_to_ptr.vmem [resolvable:$true] %s1695
      %s1697 = sshll.u32 %s5, 4
      %s1698 = int_to_ptr.hbm [resolvable:$true] %s1697
      %1700 = dma.vmem_to_hbm [thread:$0]  %s1696, 64, %s1698, [#allocation3]
    $region25: #{tpu_custom_call.1} parent=1 // pred_fallthru
      _
    // Predicated region
    $region26: #{tpu_custom_call.1} parent=1 // pred_check
      _
    $region27: #{tpu_custom_call.1} parent=1 // pred_check_branch
      %1702 = sbr.rel (0) target = $region29
    $region28: #{tpu_custom_call.1} parent=1 // pred_region
      _
    $region29: #{tpu_custom_call.1} parent=1 // pred_fallthru
      _
    // Predicated region
    $region30: #{tpu_custom_call.1} parent=1 // pred_check
      _
    $region31: #{tpu_custom_call.1} parent=1 // pred_check_branch
      %1704 = sbr.rel (0) target = $region33
    $region32: #{tpu_custom_call.1} parent=1 // pred_region
      %1706 = vsyncadd [#allocation5], 0
      %s1708 = sshll.u32 [#allocation4], 4
      %s1709 = int_to_ptr.vmem [resolvable:$true] %s1708
      %s1710 = sshll.u32 %s7, 4
      %s1711 = int_to_ptr.hbm [resolvable:$true] %s1710
      %1713 = dma.vmem_to_hbm [thread:$0]  %s1709, 128, %s1711, [#allocation5]
    $region33: #{tpu_custom_call.1} parent=1 // pred_fallthru
      _
    // Predicated region
    $region34: #{tpu_custom_call.1} parent=1 // pred_check
      _
    $region35: #{tpu_custom_call.1} parent=1 // pred_check_branch
      %1715 = sbr.rel (0) target = $region37
    $region36: #{tpu_custom_call.1} parent=1 // pred_region
      _
    $region37: #{tpu_custom_call.1} parent=1 // pred_fallthru
      _
    // Predicated region
    $region38: #{tpu_custom_call.1} parent=1 // pred_check
      _
    $region39: #{tpu_custom_call.1} parent=1 // pred_check_branch
      %1717 = sbr.rel (0) target = $region41
    $region40: #{tpu_custom_call.1} parent=1 // pred_region
      %1719 = dma.done [#allocation3], 64
    $region41: #{tpu_custom_call.1} parent=1 // pred_fallthru
      _
    // Predicated region
    $region42: #{tpu_custom_call.1} parent=1 // pred_check
      _
    $region43: #{tpu_custom_call.1} parent=1 // pred_check_branch
      %1721 = sbr.rel (0) target = $region45
    $region44: #{tpu_custom_call.1} parent=1 // pred_region
      _
    $region45: #{tpu_custom_call.1} parent=1 // pred_fallthru
      _
    // Predicated region
    $region46: #{tpu_custom_call.1} parent=1 // pred_check
      _
    $region47: #{tpu_custom_call.1} parent=1 // pred_check_branch
      %1723 = sbr.rel (0) target = $region49
    $region48: #{tpu_custom_call.1} parent=1 // pred_region
      %1725 = dma.done [#allocation5], 128
    $region49: #{tpu_custom_call.1} parent=1 // pred_fallthru
      _
    %1726 = vsyncpa [#allocation3], 1
    %1727 = vsyncpa [#allocation5], 1

// kernel: tpu_custom_call.1
$region0: #{tpu_custom_call.1}
  #allocation0 [shape = 'u32[]', space=smem, size = 0x4, offset = 0x4, fixed_abs, tag = 'smem constant byte address 0x4 - core index']
  #allocation1 [shape = 'u32[72,128]{1,0:T(1,128)}', space=vmem, size = 0x9000, scoped, tag = 'internal scratch']
  %s0 = inlined_call_operand.vmem [shape: f32[128,64], index: 0, kind: input, shape index: {}]
  %s1 = inlined_call_operand.vmem [shape: f32[2,64,128], index: 1, kind: input, shape index: {}]
  %s2 = inlined_call_operand.vmem [shape: f32[2,128,64], index: 2, kind: input, shape index: {}]
  %s3 = inlined_call_operand.vmem [shape: f32[2,1,128], index: 3, kind: input, shape index: {}]
  %s4 = inlined_call_operand.vmem [shape: f32[128,64], index: 4, kind: output, shape index: {0}]
  %s5 = inlined_call_operand.hbm [shape: s32[4,128], index: 5, kind: output, shape index: {1}]
  %s6 = inlined_call_operand.vmem [shape: f32[1,128,64], index: 6, kind: output, shape index: {2}]
  %s7 = inlined_call_operand.hbm [shape: f32[1,8,128], index: 7, kind: output, shape index: {3}]
  %8 = xla_tuple %s4, %s5, %s6, %s7
  %s9 = sld [smem:[#allocation0]]
  $region50: #{tpu_custom_call.1} parent=0
    _
  %s11 = ssub.s32 1, %s9
  %s12 = scalar_select 0, %s11, %s9
  $region1: #{tpu_custom_call.1} parent=0
    #allocation2 [shape = 'u8[2048]{0}', space=vmem, size = 0x800, scoped, tag = 'output window, operand 1, single buffered']
    #allocation3 [shape = 's32[1]{0}', space=sflag, size = 0x4, scoped, tag = 'scoped memory for tpu_custom_call.1']
    #allocation4 [shape = 'u8[4096]{0}', space=vmem, size = 0x1000, scoped, tag = 'output window, operand 3, single buffered']
    #allocation5 [shape = 's32[1]{0}', space=sflag, size = 0x4, scoped, tag = 'scoped memory for tpu_custom_call.1']
    %13 = vsyncpa [#allocation3], 0
    %14 = vsyncpa [#allocation5], 0
    // Predicated region
    $region2: #{tpu_custom_call.1} parent=1 // pred_check
      _
    $region3: #{tpu_custom_call.1} parent=1 // pred_check_branch
      %16 = sbr.rel (0) target = $region5
    $region4: #{tpu_custom_call.1} parent=1 // pred_region
      _
    $region5: #{tpu_custom_call.1} parent=1 // pred_fallthru
      _
    // Predicated region
    $region6: #{tpu_custom_call.1} parent=1 // pred_check
      _
    $region7: #{tpu_custom_call.1} parent=1 // pred_check_branch
      %18 = sbr.rel (0) target = $region9
    $region8: #{tpu_custom_call.1} parent=1 // pred_region
      _
    $region9: #{tpu_custom_call.1} parent=1 // pred_fallthru
      _
    // Predicated region
    $region10: #{tpu_custom_call.1} parent=1 // pred_check
      _
    $region11: #{tpu_custom_call.1} parent=1 // pred_check_branch
      %20 = sbr.rel (0) target = $region13
    $region12: #{tpu_custom_call.1} parent=1 // pred_region
      _
    $region13: #{tpu_custom_call.1} parent=1 // pred_fallthru
      _
    // Predicated region
    $region14: #{tpu_custom_call.1} parent=1 // pred_check
      _
    $region15: #{tpu_custom_call.1} parent=1 // pred_check_branch
      %22 = sbr.rel (0) target = $region17
    $region16: #{tpu_custom_call.1} parent=1 // pred_region
      _
    $region17: #{tpu_custom_call.1} parent=1 // pred_fallthru
      _
    %v23 = vld [vmem:[%s0] sm:$0xff]
    %v24 = vld [vmem:[%s0 + $0x8] sm:$0xff]
    %v25 = vld [vmem:[%s0 + $0x10] sm:$0xff]
    %v26 = vld [vmem:[%s0 + $0x18] sm:$0xff]
    %v27 = vld [vmem:[%s0 + $0x20] sm:$0xff]
    %v28 = vld [vmem:[%s0 + $0x28] sm:$0xff]
    %v29 = vld [vmem:[%s0 + $0x30] sm:$0xff]
    %v30 = vld [vmem:[%s0 + $0x38] sm:$0xff]
    %v31 = vld [vmem:[%s0 + $0x40] sm:$0xff]
    %v32 = vld [vmem:[%s0 + $0x48] sm:$0xff]
    %v33 = vld [vmem:[%s0 + $0x50] sm:$0xff]
    %v34 = vld [vmem:[%s0 + $0x58] sm:$0xff]
    %v35 = vld [vmem:[%s0 + $0x60] sm:$0xff]
    %v36 = vld [vmem:[%s0 + $0x68] sm:$0xff]
    %v37 = vld [vmem:[%s0 + $0x70] sm:$0xff]
    %v38 = vld [vmem:[%s0 + $0x78] sm:$0xff]
    %v39 = vlaneseq
    %v40 = vand.u32 %v39, 127
    %v41 = vlaneseq
    %v42 = vshrl.u32 %v41, 7
    %v43 = vld [vmem:[%s1] sm:$0xff]
    %v44 = vld [vmem:[%s1 + $0x8] sm:$0xff]
    %v45 = vld [vmem:[%s1 + $0x10] sm:$0xff]
    %v46 = vld [vmem:[%s1 + $0x18] sm:$0xff]
    %v47 = vld [vmem:[%s1 + $0x20] sm:$0xff]
    %v48 = vld [vmem:[%s1 + $0x28] sm:$0xff]
    %v49 = vld [vmem:[%s1 + $0x30] sm:$0xff]
    %v50 = vld [vmem:[%s1 + $0x38] sm:$0xff]
    %vm51 = vcmask 523264
    %v53 = vsel %vm51, %v23, 0
    %v56 = vsel %vm51, %v24, 0
    %v59 = vsel %vm51, %v25, 0
    %v62 = vsel %vm51, %v26, 0
    %v65 = vsel %vm51, %v27, 0
    %v68 = vsel %vm51, %v28, 0
    %v71 = vsel %vm51, %v29, 0
    %v74 = vsel %vm51, %v30, 0
    %v77 = vsel %vm51, %v31, 0
    %v80 = vsel %vm51, %v32, 0
    %v83 = vsel %vm51, %v33, 0
    %v86 = vsel %vm51, %v34, 0
    %v89 = vsel %vm51, %v35, 0
    %v92 = vsel %vm51, %v36, 0
    %v95 = vsel %vm51, %v37, 0
    %v98 = vsel %vm51, %v38, 0
    %100 = vmatpush.msra.mxu0 0.0
    %101 = vmatpush.msra.mxu0 0.0
    %102 = vmatpush.msra.mxu0 0.0
    %103 = vmatpush.msra.mxu0 0.0
    %104 = vmatpush.msra.mxu0 0.0
    %105 = vmatpush.msra.mxu0 0.0
    %106 = vmatpush.msra.mxu0 0.0
    %107 = vmatpush.msra.mxu0 0.0
    %108 = vmatpush.msra.mxu0 %v50
    %109 = vmatpush.msra.mxu0 %v49
    %110 = vmatpush.msra.mxu0 %v48
    %111 = vmatpush.msra.mxu0 %v47
    %112 = vmatpush.msra.mxu0 %v46
    %113 = vmatpush.msra.mxu0 %v45
    %114 = vmatpush.msra.mxu0 %v44
    %115 = vmatpush.msra.mxu0 %v43
    %116 = vmatmul.f32.gmra.mxu0 %v53
    %v117 = vpop.f32.mrf.mxu0
    %v118 = vadd.f32 0.0, %v117
    %119 = vmatmul.f32.gmra.mxu0 %v56
    %v120 = vpop.f32.mrf.mxu0
    %v121 = vadd.f32 0.0, %v120
    %122 = vmatmul.f32.gmra.mxu0 %v59
    %v123 = vpop.f32.mrf.mxu0
    %v124 = vadd.f32 0.0, %v123
    %125 = vmatmul.f32.gmra.mxu0 %v62
    %v126 = vpop.f32.mrf.mxu0
    %v127 = vadd.f32 0.0, %v126
    %128 = vmatmul.f32.gmra.mxu0 %v65
    %v129 = vpop.f32.mrf.mxu0
    %v130 = vadd.f32 0.0, %v129
    %131 = vmatmul.f32.gmra.mxu0 %v68
    %v132 = vpop.f32.mrf.mxu0
    %v133 = vadd.f32 0.0, %v132
    %134 = vmatmul.f32.gmra.mxu0 %v71
    %v135 = vpop.f32.mrf.mxu0
    %v136 = vadd.f32 0.0, %v135
    %137 = vmatmul.f32.gmra.mxu0 %v74
    %v138 = vpop.f32.mrf.mxu0
    %v139 = vadd.f32 0.0, %v138
    %140 = vmatmul.f32.gmra.mxu0 %v77
    %v141 = vpop.f32.mrf.mxu0
    %v142 = vadd.f32 0.0, %v141
    %143 = vmatmul.f32.gmra.mxu0 %v80
    %v144 = vpop.f32.mrf.mxu0
    %v145 = vadd.f32 0.0, %v144
    %146 = vmatmul.f32.gmra.mxu0 %v83
    %v147 = vpop.f32.mrf.mxu0
    %v148 = vadd.f32 0.0, %v147
    %149 = vmatmul.f32.gmra.mxu0 %v86
    %v150 = vpop.f32.mrf.mxu0
    %v151 = vadd.f32 0.0, %v150
    %152 = vmatmul.f32.gmra.mxu0 %v89
    %v153 = vpop.f32.mrf.mxu0
    %v154 = vadd.f32 0.0, %v153
    %155 = vmatmul.f32.gmra.mxu0 %v92
    %v156 = vpop.f32.mrf.mxu0
    %v157 = vadd.f32 0.0, %v156
    %158 = vmatmul.f32.gmra.mxu0 %v95
    %v159 = vpop.f32.mrf.mxu0
    %v160 = vadd.f32 0.0, %v159
    %161 = vmatmul.f32.gmra.mxu0 %v98
    %v162 = vpop.f32.mrf.mxu0
    %v163 = vadd.f32 0.0, %v162
    %164 = vdwg.mxu0
    %v165 = vld [vmem:[%s3] sm:$0x1]
    %v167 = vperm.slane %v165, 0
    %v169 = vsub.f32 %v167, %v118
    %v170 = vsub.f32 %v167, %v121
    %v171 = vsub.f32 %v167, %v124
    %v172 = vsub.f32 %v167, %v127
    %v173 = vsub.f32 %v167, %v130
    %v174 = vsub.f32 %v167, %v133
    %v175 = vsub.f32 %v167, %v136
    %v176 = vsub.f32 %v167, %v139
    %v177 = vsub.f32 %v167, %v142
    %v178 = vsub.f32 %v167, %v145
    %v179 = vsub.f32 %v167, %v148
    %v180 = vsub.f32 %v167, %v151
    %v181 = vsub.f32 %v167, %v154
    %v182 = vsub.f32 %v167, %v157
    %v183 = vsub.f32 %v167, %v160
    %v184 = vsub.f32 %v167, %v163
    %v185 = vsel %vm51, %v169, inf
    %186 = vmin.index.xlane.f32.xlu0 %v185
    %v187 = vpop.xlane.xlu0 %186
    %v188 = vsel %vm51, %v170, inf
    %189 = vmin.index.xlane.f32.xlu0 %v188
    %v190 = vpop.xlane.xlu0 %189
    %v191 = vsel %vm51, %v171, inf
    %192 = vmin.index.xlane.f32.xlu0 %v191
    %v193 = vpop.xlane.xlu0 %192
    %v194 = vsel %vm51, %v172, inf
    %195 = vmin.index.xlane.f32.xlu0 %v194
    %v196 = vpop.xlane.xlu0 %195
    %v197 = vsel %vm51, %v173, inf
    %198 = vmin.index.xlane.f32.xlu0 %v197
    %v199 = vpop.xlane.xlu0 %198
    %v200 = vsel %vm51, %v174, inf
    %201 = vmin.index.xlane.f32.xlu0 %v200
    %v202 = vpop.xlane.xlu0 %201
    %v203 = vsel %vm51, %v175, inf
    %204 = vmin.index.xlane.f32.xlu0 %v203
    %v205 = vpop.xlane.xlu0 %204
    %v206 = vsel %vm51, %v176, inf
    %207 = vmin.index.xlane.f32.xlu0 %v206
    %v208 = vpop.xlane.xlu0 %207
    %v209 = vsel %vm51, %v177, inf
    %210 = vmin.index.xlane.f32.xlu0 %v209
    %v211 = vpop.xlane.xlu0 %210
    %v212 = vsel %vm51, %v178, inf
    %213 = vmin.index.xlane.f32.xlu0 %v212
    %v214 = vpop.xlane.xlu0 %213
    %v215 = vsel %vm51, %v179, inf
    %216 = vmin.index.xlane.f32.xlu0 %v215
    %v217 = vpop.xlane.xlu0 %216
    %v218 = vsel %vm51, %v180, inf
    %219 = vmin.index.xlane.f32.xlu0 %v218
    %v220 = vpop.xlane.xlu0 %219
    %v221 = vsel %vm51, %v181, inf
    %222 = vmin.index.xlane.f32.xlu0 %v221
    %v223 = vpop.xlane.xlu0 %222
    %v224 = vsel %vm51, %v182, inf
    %225 = vmin.index.xlane.f32.xlu0 %v224
    %v226 = vpop.xlane.xlu0 %225
    %v227 = vsel %vm51, %v183, inf
    %228 = vmin.index.xlane.f32.xlu0 %v227
    %v229 = vpop.xlane.xlu0 %228
    %v230 = vsel %vm51, %v184, inf
    %231 = vmin.index.xlane.f32.xlu0 %v230
    %v232 = vpop.xlane.xlu0 %231
    %v233 = vperm.slane %v187, %v40
    %v234 = vadd.s32 %v40, 4294967288
    %v235 = vperm.slane %v190, %v234
    %vm236 = vcmask 130112
    %v237 = vsel %vm236, %v235, %v233
    %v238 = vadd.s32 %v40, 4294967280
    %v239 = vperm.slane %v193, %v238
    %vm240 = vcmask 195712
    %v241 = vsel %vm240, %v239, %v237
    %v242 = vadd.s32 %v40, 4294967272
    %v243 = vperm.slane %v196, %v242
    %vm244 = vcmask 261312
    %v245 = vsel %vm244, %v243, %v241
    %v246 = vadd.s32 %v40, 4294967264
    %v247 = vperm.slane %v199, %v246
    %vm248 = vcmask 326912
    %v249 = vsel %vm248, %v247, %v245
    %v250 = vadd.s32 %v40, 4294967256
    %v251 = vperm.slane %v202, %v250
    %vm252 = vcmask 392512
    %v253 = vsel %vm252, %v251, %v249
    %v254 = vadd.s32 %v40, 4294967248
    %v255 = vperm.slane %v205, %v254
    %vm256 = vcmask 458112
    %v257 = vsel %vm256, %v255, %v253
    %v258 = vadd.s32 %v40, 4294967240
    %v259 = vperm.slane %v208, %v258
    %vm260 = vcmask 523712
    %v261 = vsel %vm260, %v259, %v257
    %v262 = vadd.s32 %v40, 4294967232
    %v263 = vperm.slane %v211, %v262
    %vm264 = vcmask 589312
    %v265 = vsel %vm264, %v263, %v261
    %v266 = vadd.s32 %v40, 4294967224
    %v267 = vperm.slane %v214, %v266
    %vm268 = vcmask 654912
    %v269 = vsel %vm268, %v267, %v265
    %v270 = vadd.s32 %v40, 4294967216
    %v271 = vperm.slane %v217, %v270
    %vm272 = vcmask 720512
    %v273 = vsel %vm272, %v271, %v269
    %v274 = vadd.s32 %v40, 4294967208
    %v275 = vperm.slane %v220, %v274
    %vm276 = vcmask 786112
    %v277 = vsel %vm276, %v275, %v273
    %v278 = vadd.s32 %v40, 4294967200
    %v279 = vperm.slane %v223, %v278
    %vm280 = vcmask 851712
    %v281 = vsel %vm280, %v279, %v277
    %v282 = vadd.s32 %v40, 4294967192
    %v283 = vperm.slane %v226, %v282
    %vm284 = vcmask 917312
    %v285 = vsel %vm284, %v283, %v281
    %v286 = vadd.s32 %v40, 4294967184
    %v287 = vperm.slane %v229, %v286
    %vm288 = vcmask 982912
    %v289 = vsel %vm288, %v287, %v285
    %v290 = vadd.s32 %v40, 4294967176
    %v291 = vperm.slane %v232, %v290
    %vm292 = vcmask 1048512
    %v293 = vsel %vm292, %v291, %v289
    %294 = vst [vmem:[#allocation2] sm:$0x1] %v293
    %vm295 = vcmp.eq.s32.totalorder %v40, %v187
    %vm296 = vcmp.eq.s32.totalorder %v40, %v190
    %vm297 = vcmp.eq.s32.totalorder %v40, %v193
    %vm298 = vcmp.eq.s32.totalorder %v40, %v196
    %vm299 = vcmp.eq.s32.totalorder %v40, %v199
    %vm300 = vcmp.eq.s32.totalorder %v40, %v202
    %vm301 = vcmp.eq.s32.totalorder %v40, %v205
    %vm302 = vcmp.eq.s32.totalorder %v40, %v208
    %vm303 = vcmp.eq.s32.totalorder %v40, %v211
    %vm304 = vcmp.eq.s32.totalorder %v40, %v214
    %vm305 = vcmp.eq.s32.totalorder %v40, %v217
    %vm306 = vcmp.eq.s32.totalorder %v40, %v220
    %vm307 = vcmp.eq.s32.totalorder %v40, %v223
    %vm308 = vcmp.eq.s32.totalorder %v40, %v226
    %vm309 = vcmp.eq.s32.totalorder %v40, %v229
    %vm310 = vcmp.eq.s32.totalorder %v40, %v232
    %v311 = vsel %vm295, 1, 0
    %v312 = vsel %vm296, 1, 0
    %v313 = vsel %vm297, 1, 0
    %v314 = vsel %vm298, 1, 0
    %v315 = vsel %vm299, 1, 0
    %v316 = vsel %vm300, 1, 0
    %v317 = vsel %vm301, 1, 0
    %v318 = vsel %vm302, 1, 0
    %v319 = vsel %vm303, 1, 0
    %v320 = vsel %vm304, 1, 0
    %v321 = vsel %vm305, 1, 0
    %v322 = vsel %vm306, 1, 0
    %v323 = vsel %vm307, 1, 0
    %v324 = vsel %vm308, 1, 0
    %v325 = vsel %vm309, 1, 0
    %v326 = vsel %vm310, 1, 0
    %v327 = vcvt.s32.f32 %v311
    %v328 = vcvt.s32.f32 %v312
    %v329 = vcvt.s32.f32 %v313
    %v330 = vcvt.s32.f32 %v314
    %v331 = vcvt.s32.f32 %v315
    %v332 = vcvt.s32.f32 %v316
    %v333 = vcvt.s32.f32 %v317
    %v334 = vcvt.s32.f32 %v318
    %v335 = vcvt.s32.f32 %v319
    %v336 = vcvt.s32.f32 %v320
    %v337 = vcvt.s32.f32 %v321
    %v338 = vcvt.s32.f32 %v322
    %v339 = vcvt.s32.f32 %v323
    %v340 = vcvt.s32.f32 %v324
    %v341 = vcvt.s32.f32 %v325
    %v342 = vcvt.s32.f32 %v326
    %v343 = vadd.f32 %v327, 0.0
    %v344 = vadd.f32 %v328, 0.0
    %v345 = vadd.f32 %v329, 0.0
    %v346 = vadd.f32 %v330, 0.0
    %v347 = vadd.f32 %v331, 0.0
    %v348 = vadd.f32 %v332, 0.0
    %v349 = vadd.f32 %v333, 0.0
    %v350 = vadd.f32 %v334, 0.0
    %v351 = vadd.f32 %v335, 0.0
    %v352 = vadd.f32 %v336, 0.0
    %v353 = vadd.f32 %v337, 0.0
    %v354 = vadd.f32 %v338, 0.0
    %v355 = vadd.f32 %v339, 0.0
    %v356 = vadd.f32 %v340, 0.0
    %v357 = vadd.f32 %v341, 0.0
    %v358 = vadd.f32 %v342, 0.0
    %375 = vrot.lane.b32.xlu0 %v169, 64
    %v376 = vpop.permute.xlu0 %375
    %377 = vrot.lane.b32.xlu0 %v170, 64
    %v378 = vpop.permute.xlu0 %377
    %379 = vrot.lane.b32.xlu0 %v171, 64
    %v380 = vpop.permute.xlu0 %379
    %381 = vrot.lane.b32.xlu0 %v172, 64
    %v382 = vpop.permute.xlu0 %381
    %383 = vrot.lane.b32.xlu0 %v173, 64
    %v384 = vpop.permute.xlu0 %383
    %385 = vrot.lane.b32.xlu0 %v174, 64
    %v386 = vpop.permute.xlu0 %385
    %387 = vrot.lane.b32.xlu0 %v175, 64
    %v388 = vpop.permute.xlu0 %387
    %389 = vrot.lane.b32.xlu0 %v176, 64
    %v390 = vpop.permute.xlu0 %389
    %391 = vrot.lane.b32.xlu0 %v177, 64
    %v392 = vpop.permute.xlu0 %391
    %393 = vrot.lane.b32.xlu0 %v178, 64
    %v394 = vpop.permute.xlu0 %393
    %395 = vrot.lane.b32.xlu0 %v179, 64
    %v396 = vpop.permute.xlu0 %395
    %397 = vrot.lane.b32.xlu0 %v180, 64
    %v398 = vpop.permute.xlu0 %397
    %399 = vrot.lane.b32.xlu0 %v181, 64
    %v400 = vpop.permute.xlu0 %399
    %401 = vrot.lane.b32.xlu0 %v182, 64
    %v402 = vpop.permute.xlu0 %401
    %403 = vrot.lane.b32.xlu0 %v183, 64
    %v404 = vpop.permute.xlu0 %403
    %405 = vrot.lane.b32.xlu0 %v184, 64
    %v406 = vpop.permute.xlu0 %405
    %v423 = vsel %vm51, %v376, inf
    %424 = vmin.index.xlane.f32.xlu0 %v423
    %v425 = vpop.xlane.xlu0 %424
    %v426 = vsel %vm51, %v378, inf
    %427 = vmin.index.xlane.f32.xlu0 %v426
    %v428 = vpop.xlane.xlu0 %427
    %v429 = vsel %vm51, %v380, inf
    %430 = vmin.index.xlane.f32.xlu0 %v429
    %v431 = vpop.xlane.xlu0 %430
    %v432 = vsel %vm51, %v382, inf
    %433 = vmin.index.xlane.f32.xlu0 %v432
    %v434 = vpop.xlane.xlu0 %433
    %v435 = vsel %vm51, %v384, inf
    %436 = vmin.index.xlane.f32.xlu0 %v435
    %v437 = vpop.xlane.xlu0 %436
    %v438 = vsel %vm51, %v386, inf
    %439 = vmin.index.xlane.f32.xlu0 %v438
    %v440 = vpop.xlane.xlu0 %439
    %v441 = vsel %vm51, %v388, inf
    %442 = vmin.index.xlane.f32.xlu0 %v441
    %v443 = vpop.xlane.xlu0 %442
    %v444 = vsel %vm51, %v390, inf
    %445 = vmin.index.xlane.f32.xlu0 %v444
    %v446 = vpop.xlane.xlu0 %445
    %v447 = vsel %vm51, %v392, inf
    %448 = vmin.index.xlane.f32.xlu0 %v447
    %v449 = vpop.xlane.xlu0 %448
    %v450 = vsel %vm51, %v394, inf
    %451 = vmin.index.xlane.f32.xlu0 %v450
    %v452 = vpop.xlane.xlu0 %451
    %v453 = vsel %vm51, %v396, inf
    %454 = vmin.index.xlane.f32.xlu0 %v453
    %v455 = vpop.xlane.xlu0 %454
    %v456 = vsel %vm51, %v398, inf
    %457 = vmin.index.xlane.f32.xlu0 %v456
    %v458 = vpop.xlane.xlu0 %457
    %v459 = vsel %vm51, %v400, inf
    %460 = vmin.index.xlane.f32.xlu0 %v459
    %v461 = vpop.xlane.xlu0 %460
    %v462 = vsel %vm51, %v402, inf
    %463 = vmin.index.xlane.f32.xlu0 %v462
    %v464 = vpop.xlane.xlu0 %463
    %v465 = vsel %vm51, %v404, inf
    %466 = vmin.index.xlane.f32.xlu0 %v465
    %v467 = vpop.xlane.xlu0 %466
    %v468 = vsel %vm51, %v406, inf
    %469 = vmin.index.xlane.f32.xlu0 %v468
    %v470 = vpop.xlane.xlu0 %469
    %v471 = vperm.slane %v425, %v40
    %v472 = vperm.slane %v428, %v234
    %v473 = vsel %vm236, %v472, %v471
    %v474 = vperm.slane %v431, %v238
    %v475 = vsel %vm240, %v474, %v473
    %v476 = vperm.slane %v434, %v242
    %v477 = vsel %vm244, %v476, %v475
    %v478 = vperm.slane %v437, %v246
    %v479 = vsel %vm248, %v478, %v477
    %v480 = vperm.slane %v440, %v250
    %v481 = vsel %vm252, %v480, %v479
    %v482 = vperm.slane %v443, %v254
    %v483 = vsel %vm256, %v482, %v481
    %v484 = vperm.slane %v446, %v258
    %v485 = vsel %vm260, %v484, %v483
    %v486 = vperm.slane %v449, %v262
    %v487 = vsel %vm264, %v486, %v485
    %v488 = vperm.slane %v452, %v266
    %v489 = vsel %vm268, %v488, %v487
    %v490 = vperm.slane %v455, %v270
    %v491 = vsel %vm272, %v490, %v489
    %v492 = vperm.slane %v458, %v274
    %v493 = vsel %vm276, %v492, %v491
    %v494 = vperm.slane %v461, %v278
    %v495 = vsel %vm280, %v494, %v493
    %v496 = vperm.slane %v464, %v282
    %v497 = vsel %vm284, %v496, %v495
    %v498 = vperm.slane %v467, %v286
    %v499 = vsel %vm288, %v498, %v497
    %v500 = vperm.slane %v470, %v290
    %v501 = vsel %vm292, %v500, %v499
    %502 = vst [vmem:[#allocation2 + $0x1] sm:$0x1] %v501
    %v503 = vadd.s32 %v425, 64
    %v504 = vadd.s32 %v428, 64
    %v505 = vadd.s32 %v431, 64
    %v506 = vadd.s32 %v434, 64
    %v507 = vadd.s32 %v437, 64
    %v508 = vadd.s32 %v440, 64
    %v509 = vadd.s32 %v443, 64
    %v510 = vadd.s32 %v446, 64
    %v511 = vadd.s32 %v449, 64
    %v512 = vadd.s32 %v452, 64
    %v513 = vadd.s32 %v455, 64
    %v514 = vadd.s32 %v458, 64
    %v515 = vadd.s32 %v461, 64
    %v516 = vadd.s32 %v464, 64
    %v517 = vadd.s32 %v467, 64
    %v518 = vadd.s32 %v470, 64
    %vm519 = vcmp.eq.s32.totalorder %v40, %v503
    %vm520 = vcmp.eq.s32.totalorder %v40, %v504
    %vm521 = vcmp.eq.s32.totalorder %v40, %v505
    %vm522 = vcmp.eq.s32.totalorder %v40, %v506
    %vm523 = vcmp.eq.s32.totalorder %v40, %v507
    %vm524 = vcmp.eq.s32.totalorder %v40, %v508
    %vm525 = vcmp.eq.s32.totalorder %v40, %v509
    %vm526 = vcmp.eq.s32.totalorder %v40, %v510
    %vm527 = vcmp.eq.s32.totalorder %v40, %v511
    %vm528 = vcmp.eq.s32.totalorder %v40, %v512
    %vm529 = vcmp.eq.s32.totalorder %v40, %v513
    %vm530 = vcmp.eq.s32.totalorder %v40, %v514
    %vm531 = vcmp.eq.s32.totalorder %v40, %v515
    %vm532 = vcmp.eq.s32.totalorder %v40, %v516
    %vm533 = vcmp.eq.s32.totalorder %v40, %v517
    %vm534 = vcmp.eq.s32.totalorder %v40, %v518
    %v535 = vsel %vm519, 1, 0
    %v536 = vsel %vm520, 1, 0
    %v537 = vsel %vm521, 1, 0
    %v538 = vsel %vm522, 1, 0
    %v539 = vsel %vm523, 1, 0
    %v540 = vsel %vm524, 1, 0
    %v541 = vsel %vm525, 1, 0
    %v542 = vsel %vm526, 1, 0
    %v543 = vsel %vm527, 1, 0
    %v544 = vsel %vm528, 1, 0
    %v545 = vsel %vm529, 1, 0
    %v546 = vsel %vm530, 1, 0
    %v547 = vsel %vm531, 1, 0
    %v548 = vsel %vm532, 1, 0
    %v549 = vsel %vm533, 1, 0
    %v550 = vsel %vm534, 1, 0
    %v551 = vcvt.s32.f32 %v535
    %v552 = vcvt.s32.f32 %v536
    %v553 = vcvt.s32.f32 %v537
    %v554 = vcvt.s32.f32 %v538
    %v555 = vcvt.s32.f32 %v539
    %v556 = vcvt.s32.f32 %v540
    %v557 = vcvt.s32.f32 %v541
    %v558 = vcvt.s32.f32 %v542
    %v559 = vcvt.s32.f32 %v543
    %v560 = vcvt.s32.f32 %v544
    %v561 = vcvt.s32.f32 %v545
    %v562 = vcvt.s32.f32 %v546
    %v563 = vcvt.s32.f32 %v547
    %v564 = vcvt.s32.f32 %v548
    %v565 = vcvt.s32.f32 %v549
    %v566 = vcvt.s32.f32 %v550
    %v567 = vadd.f32 %v343, %v551
    %v568 = vadd.f32 %v344, %v552
    %v569 = vadd.f32 %v345, %v553
    %v570 = vadd.f32 %v346, %v554
    %v571 = vadd.f32 %v347, %v555
    %v572 = vadd.f32 %v348, %v556
    %v573 = vadd.f32 %v349, %v557
    %v574 = vadd.f32 %v350, %v558
    %v575 = vadd.f32 %v351, %v559
    %v576 = vadd.f32 %v352, %v560
    %v577 = vadd.f32 %v353, %v561
    %v578 = vadd.f32 %v354, %v562
    %v579 = vadd.f32 %v355, %v563
    %v580 = vadd.f32 %v356, %v564
    %v581 = vadd.f32 %v357, %v565
    %v582 = vadd.f32 %v358, %v566
    %v583 = vld [vmem:[%s2] sm:$0xff]
    %v584 = vld [vmem:[%s2 + $0x8] sm:$0xff]
    %v585 = vld [vmem:[%s2 + $0x10] sm:$0xff]
    %v586 = vld [vmem:[%s2 + $0x18] sm:$0xff]
    %v587 = vld [vmem:[%s2 + $0x20] sm:$0xff]
    %v588 = vld [vmem:[%s2 + $0x28] sm:$0xff]
    %v589 = vld [vmem:[%s2 + $0x30] sm:$0xff]
    %v590 = vld [vmem:[%s2 + $0x38] sm:$0xff]
    %v591 = vld [vmem:[%s2 + $0x40] sm:$0xff]
    %v592 = vld [vmem:[%s2 + $0x48] sm:$0xff]
    %v593 = vld [vmem:[%s2 + $0x50] sm:$0xff]
    %v594 = vld [vmem:[%s2 + $0x58] sm:$0xff]
    %v595 = vld [vmem:[%s2 + $0x60] sm:$0xff]
    %v596 = vld [vmem:[%s2 + $0x68] sm:$0xff]
    %v597 = vld [vmem:[%s2 + $0x70] sm:$0xff]
    %v598 = vld [vmem:[%s2 + $0x78] sm:$0xff]
    %599 = vmatpush.msra.mxu0 %v598
    %600 = vmatpush.msra.mxu0 %v597
    %601 = vmatpush.msra.mxu0 %v596
    %602 = vmatpush.msra.mxu0 %v595
    %603 = vmatpush.msra.mxu0 %v594
    %604 = vmatpush.msra.mxu0 %v593
    %605 = vmatpush.msra.mxu0 %v592
    %606 = vmatpush.msra.mxu0 %v591
    %607 = vmatpush.msra.mxu0 %v590
    %608 = vmatpush.msra.mxu0 %v589
    %609 = vmatpush.msra.mxu0 %v588
    %610 = vmatpush.msra.mxu0 %v587
    %611 = vmatpush.msra.mxu0 %v586
    %612 = vmatpush.msra.mxu0 %v585
    %613 = vmatpush.msra.mxu0 %v584
    %614 = vmatpush.msra.mxu0 %v583
    %615 = vmatmul.f32.gmra.mxu0 %v567
    %v616 = vpop.f32.mrf.mxu0
    %v617 = vadd.f32 0.0, %v616
    %618 = vmatmul.f32.gmra.mxu0 %v568
    %v619 = vpop.f32.mrf.mxu0
    %v620 = vadd.f32 0.0, %v619
    %621 = vmatmul.f32.gmra.mxu0 %v569
    %v622 = vpop.f32.mrf.mxu0
    %v623 = vadd.f32 0.0, %v622
    %624 = vmatmul.f32.gmra.mxu0 %v570
    %v625 = vpop.f32.mrf.mxu0
    %v626 = vadd.f32 0.0, %v625
    %627 = vmatmul.f32.gmra.mxu0 %v571
    %v628 = vpop.f32.mrf.mxu0
    %v629 = vadd.f32 0.0, %v628
    %630 = vmatmul.f32.gmra.mxu0 %v572
    %v631 = vpop.f32.mrf.mxu0
    %v632 = vadd.f32 0.0, %v631
    %633 = vmatmul.f32.gmra.mxu0 %v573
    %v634 = vpop.f32.mrf.mxu0
    %v635 = vadd.f32 0.0, %v634
    %636 = vmatmul.f32.gmra.mxu0 %v574
    %v637 = vpop.f32.mrf.mxu0
    %v638 = vadd.f32 0.0, %v637
    %639 = vmatmul.f32.gmra.mxu0 %v575
    %v640 = vpop.f32.mrf.mxu0
    %v641 = vadd.f32 0.0, %v640
    %642 = vmatmul.f32.gmra.mxu0 %v576
    %v643 = vpop.f32.mrf.mxu0
    %v644 = vadd.f32 0.0, %v643
    %645 = vmatmul.f32.gmra.mxu0 %v577
    %v646 = vpop.f32.mrf.mxu0
    %v647 = vadd.f32 0.0, %v646
    %648 = vmatmul.f32.gmra.mxu0 %v578
    %v649 = vpop.f32.mrf.mxu0
    %v650 = vadd.f32 0.0, %v649
    %651 = vmatmul.f32.gmra.mxu0 %v579
    %v652 = vpop.f32.mrf.mxu0
    %v653 = vadd.f32 0.0, %v652
    %654 = vmatmul.f32.gmra.mxu0 %v580
    %v655 = vpop.f32.mrf.mxu0
    %v656 = vadd.f32 0.0, %v655
    %657 = vmatmul.f32.gmra.mxu0 %v581
    %v658 = vpop.f32.mrf.mxu0
    %v659 = vadd.f32 0.0, %v658
    %660 = vmatmul.f32.gmra.mxu0 %v582
    %v661 = vpop.f32.mrf.mxu0
    %v662 = vadd.f32 0.0, %v661
    %663 = vdwg.mxu0
    %v664 = vsub.f32 %v23, %v617
    %v665 = vsub.f32 %v24, %v620
    %v666 = vsub.f32 %v25, %v623
    %v667 = vsub.f32 %v26, %v626
    %v668 = vsub.f32 %v27, %v629
    %v669 = vsub.f32 %v28, %v632
    %v670 = vsub.f32 %v29, %v635
    %v671 = vsub.f32 %v30, %v638
    %v672 = vsub.f32 %v31, %v641
    %v673 = vsub.f32 %v32, %v644
    %v674 = vsub.f32 %v33, %v647
    %v675 = vsub.f32 %v34, %v650
    %v676 = vsub.f32 %v35, %v653
    %v677 = vsub.f32 %v36, %v656
    %v678 = vsub.f32 %v37, %v659
    %v679 = vsub.f32 %v38, %v662
    %v680 = vmul.f32 %v664, %v664
    %v681 = vmul.f32 %v665, %v665
    %v682 = vmul.f32 %v666, %v666
    %v683 = vmul.f32 %v667, %v667
    %v684 = vmul.f32 %v668, %v668
    %v685 = vmul.f32 %v669, %v669
    %v686 = vmul.f32 %v670, %v670
    %v687 = vmul.f32 %v671, %v671
    %v688 = vmul.f32 %v672, %v672
    %v689 = vmul.f32 %v673, %v673
    %v690 = vmul.f32 %v674, %v674
    %v691 = vmul.f32 %v675, %v675
    %v692 = vmul.f32 %v676, %v676
    %v693 = vmul.f32 %v677, %v677
    %v694 = vmul.f32 %v678, %v678
    %v695 = vmul.f32 %v679, %v679
    %vm696 = vcmask 261120
    %v697 = vsel %vm696, %v680, 0.0
    %v698 = vsel %vm696, %v681, 0.0
    %v699 = vadd.f32 %v697, %v698
    %v700 = vsel %vm696, %v682, 0.0
    %v701 = vadd.f32 %v699, %v700
    %v702 = vsel %vm696, %v683, 0.0
    %v703 = vadd.f32 %v701, %v702
    %v704 = vsel %vm696, %v684, 0.0
    %v705 = vadd.f32 %v703, %v704
    %v706 = vsel %vm696, %v685, 0.0
    %v707 = vadd.f32 %v705, %v706
    %v708 = vsel %vm696, %v686, 0.0
    %v709 = vadd.f32 %v707, %v708
    %v710 = vsel %vm696, %v687, 0.0
    %v711 = vadd.f32 %v709, %v710
    %v712 = vsel %vm696, %v688, 0.0
    %v713 = vadd.f32 %v711, %v712
    %v714 = vsel %vm696, %v689, 0.0
    %v715 = vadd.f32 %v713, %v714
    %v716 = vsel %vm696, %v690, 0.0
    %v717 = vadd.f32 %v715, %v716
    %v718 = vsel %vm696, %v691, 0.0
    %v719 = vadd.f32 %v717, %v718
    %v720 = vsel %vm696, %v692, 0.0
    %v721 = vadd.f32 %v719, %v720
    %v722 = vsel %vm696, %v693, 0.0
    %v723 = vadd.f32 %v721, %v722
    %v724 = vsel %vm696, %v694, 0.0
    %v725 = vadd.f32 %v723, %v724
    %v726 = vsel %vm696, %v695, 0.0
    %v727 = vadd.f32 %v725, %v726
    %728 = vadd.xlane.f32.xlu0 %v727
    %v729 = vpop.xlane.xlu0 %728
    %v730 = vrot.slane %v729, 4
    %v731 = vadd.f32 %v729, %v730
    %v732 = vrot.slane %v731, 2
    %v733 = vadd.f32 %v731, %v732
    %v734 = vrot.slane %v733, 1
    %v735 = vadd.f32 %v733, %v734
    %s736 = vtos %v735
    %vm737 = vcmp.eq.s32.totalorder %v42, 0
    %vm738 = vcmp.eq.s32.totalorder %v40, 0
    %vm739 = vmand %vm737, %vm738
    %v740 = vsel %vm739, 1, 0
    %v741 = vcvt.s32.f32 %v740
    %v742 = vstv %s736
    %v743 = vmul.f32 %v741, %v742
    %v744 = vadd.f32 %v743, 0.0
    %761 = vrot.lane.b32.xlu0 %v680, 96
    %v762 = vpop.permute.xlu0 %761
    %763 = vrot.lane.b32.xlu0 %v681, 96
    %v764 = vpop.permute.xlu0 %763
    %765 = vrot.lane.b32.xlu0 %v682, 96
    %v766 = vpop.permute.xlu0 %765
    %767 = vrot.lane.b32.xlu0 %v683, 96
    %v768 = vpop.permute.xlu0 %767
    %769 = vrot.lane.b32.xlu0 %v684, 96
    %v770 = vpop.permute.xlu0 %769
    %771 = vrot.lane.b32.xlu0 %v685, 96
    %v772 = vpop.permute.xlu0 %771
    %773 = vrot.lane.b32.xlu0 %v686, 96
    %v774 = vpop.permute.xlu0 %773
    %775 = vrot.lane.b32.xlu0 %v687, 96
    %v776 = vpop.permute.xlu0 %775
    %777 = vrot.lane.b32.xlu0 %v688, 96
    %v778 = vpop.permute.xlu0 %777
    %779 = vrot.lane.b32.xlu0 %v689, 96
    %v780 = vpop.permute.xlu0 %779
    %781 = vrot.lane.b32.xlu0 %v690, 96
    %v782 = vpop.permute.xlu0 %781
    %783 = vrot.lane.b32.xlu0 %v691, 96
    %v784 = vpop.permute.xlu0 %783
    %785 = vrot.lane.b32.xlu0 %v692, 96
    %v786 = vpop.permute.xlu0 %785
    %787 = vrot.lane.b32.xlu0 %v693, 96
    %v788 = vpop.permute.xlu0 %787
    %789 = vrot.lane.b32.xlu0 %v694, 96
    %v790 = vpop.permute.xlu0 %789
    %791 = vrot.lane.b32.xlu0 %v695, 96
    %v792 = vpop.permute.xlu0 %791
    %v809 = vsel %vm696, %v762, 0.0
    %v810 = vsel %vm696, %v764, 0.0
    %v811 = vadd.f32 %v809, %v810
    %v812 = vsel %vm696, %v766, 0.0
    %v813 = vadd.f32 %v811, %v812
    %v814 = vsel %vm696, %v768, 0.0
    %v815 = vadd.f32 %v813, %v814
    %v816 = vsel %vm696, %v770, 0.0
    %v817 = vadd.f32 %v815, %v816
    %v818 = vsel %vm696, %v772, 0.0
    %v819 = vadd.f32 %v817, %v818
    %v820 = vsel %vm696, %v774, 0.0
    %v821 = vadd.f32 %v819, %v820
    %v822 = vsel %vm696, %v776, 0.0
    %v823 = vadd.f32 %v821, %v822
    %v824 = vsel %vm696, %v778, 0.0
    %v825 = vadd.f32 %v823, %v824
    %v826 = vsel %vm696, %v780, 0.0
    %v827 = vadd.f32 %v825, %v826
    %v828 = vsel %vm696, %v782, 0.0
    %v829 = vadd.f32 %v827, %v828
    %v830 = vsel %vm696, %v784, 0.0
    %v831 = vadd.f32 %v829, %v830
    %v832 = vsel %vm696, %v786, 0.0
    %v833 = vadd.f32 %v831, %v832
    %v834 = vsel %vm696, %v788, 0.0
    %v835 = vadd.f32 %v833, %v834
    %v836 = vsel %vm696, %v790, 0.0
    %v837 = vadd.f32 %v835, %v836
    %v838 = vsel %vm696, %v792, 0.0
    %v839 = vadd.f32 %v837, %v838
    %840 = vadd.xlane.f32.xlu0 %v839
    %v841 = vpop.xlane.xlu0 %840
    %v842 = vrot.slane %v841, 4
    %v843 = vadd.f32 %v841, %v842
    %v844 = vrot.slane %v843, 2
    %v845 = vadd.f32 %v843, %v844
    %v846 = vrot.slane %v845, 1
    %v847 = vadd.f32 %v845, %v846
    %s848 = vtos %v847
    %vm849 = vcmp.eq.s32.totalorder %v40, 1
    %vm850 = vmand %vm737, %vm849
    %v851 = vsel %vm850, 1, 0
    %v852 = vcvt.s32.f32 %v851
    %v853 = vstv %s848
    %v854 = vmul.f32 %v852, %v853
    %v855 = vadd.f32 %v744, %v854
    %856 = vst.msk [vmem:[%s6] sm:$0xff] %vm51, %v664
    %857 = vst.msk [vmem:[%s6 + $0x8] sm:$0xff] %vm51, %v665
    %858 = vst.msk [vmem:[%s6 + $0x10] sm:$0xff] %vm51, %v666
    %859 = vst.msk [vmem:[%s6 + $0x18] sm:$0xff] %vm51, %v667
    %860 = vst.msk [vmem:[%s6 + $0x20] sm:$0xff] %vm51, %v668
    %861 = vst.msk [vmem:[%s6 + $0x28] sm:$0xff] %vm51, %v669
    %862 = vst.msk [vmem:[%s6 + $0x30] sm:$0xff] %vm51, %v670
    %863 = vst.msk [vmem:[%s6 + $0x38] sm:$0xff] %vm51, %v671
    %864 = vst.msk [vmem:[%s6 + $0x40] sm:$0xff] %vm51, %v672
    %865 = vst.msk [vmem:[%s6 + $0x48] sm:$0xff] %vm51, %v673
    %866 = vst.msk [vmem:[%s6 + $0x50] sm:$0xff] %vm51, %v674
    %867 = vst.msk [vmem:[%s6 + $0x58] sm:$0xff] %vm51, %v675
    %868 = vst.msk [vmem:[%s6 + $0x60] sm:$0xff] %vm51, %v676
    %869 = vst.msk [vmem:[%s6 + $0x68] sm:$0xff] %vm51, %v677
    %870 = vst.msk [vmem:[%s6 + $0x70] sm:$0xff] %vm51, %v678
    %871 = vst.msk [vmem:[%s6 + $0x78] sm:$0xff] %vm51, %v679
    %s872 = scalar_lea.vmem %s1, 64
    %v873 = vld [vmem:[%s872] sm:$0xff]
    %v874 = vld [vmem:[%s872 + $0x8] sm:$0xff]
    %v875 = vld [vmem:[%s872 + $0x10] sm:$0xff]
    %v876 = vld [vmem:[%s872 + $0x18] sm:$0xff]
    %v877 = vld [vmem:[%s872 + $0x20] sm:$0xff]
    %v878 = vld [vmem:[%s872 + $0x28] sm:$0xff]
    %v879 = vld [vmem:[%s872 + $0x30] sm:$0xff]
    %v880 = vld [vmem:[%s872 + $0x38] sm:$0xff]
    %v882 = vsel %vm51, %v664, 0
    %v885 = vsel %vm51, %v665, 0
    %v888 = vsel %vm51, %v666, 0
    %v891 = vsel %vm51, %v667, 0
    %v894 = vsel %vm51, %v668, 0
    %v897 = vsel %vm51, %v669, 0
    %v900 = vsel %vm51, %v670, 0
    %v903 = vsel %vm51, %v671, 0
    %v906 = vsel %vm51, %v672, 0
    %v909 = vsel %vm51, %v673, 0
    %v912 = vsel %vm51, %v674, 0
    %v915 = vsel %vm51, %v675, 0
    %v918 = vsel %vm51, %v676, 0
    %v921 = vsel %vm51, %v677, 0
    %v924 = vsel %vm51, %v678, 0
    %v927 = vsel %vm51, %v679, 0
    %929 = vmatpush.msra.mxu0 0.0
    %930 = vmatpush.msra.mxu0 0.0
    %931 = vmatpush.msra.mxu0 0.0
    %932 = vmatpush.msra.mxu0 0.0
    %933 = vmatpush.msra.mxu0 0.0
    %934 = vmatpush.msra.mxu0 0.0
    %935 = vmatpush.msra.mxu0 0.0
    %936 = vmatpush.msra.mxu0 0.0
    %937 = vmatpush.msra.mxu0 %v880
    %938 = vmatpush.msra.mxu0 %v879
    %939 = vmatpush.msra.mxu0 %v878
    %940 = vmatpush.msra.mxu0 %v877
    %941 = vmatpush.msra.mxu0 %v876
    %942 = vmatpush.msra.mxu0 %v875
    %943 = vmatpush.msra.mxu0 %v874
    %944 = vmatpush.msra.mxu0 %v873
    %945 = vmatmul.f32.gmra.mxu0 %v882
    %v946 = vpop.f32.mrf.mxu0
    %v947 = vadd.f32 0.0, %v946
    %948 = vmatmul.f32.gmra.mxu0 %v885
    %v949 = vpop.f32.mrf.mxu0
    %v950 = vadd.f32 0.0, %v949
    %951 = vmatmul.f32.gmra.mxu0 %v888
    %v952 = vpop.f32.mrf.mxu0
    %v953 = vadd.f32 0.0, %v952
    %954 = vmatmul.f32.gmra.mxu0 %v891
    %v955 = vpop.f32.mrf.mxu0
    %v956 = vadd.f32 0.0, %v955
    %957 = vmatmul.f32.gmra.mxu0 %v894
    %v958 = vpop.f32.mrf.mxu0
    %v959 = vadd.f32 0.0, %v958
    %960 = vmatmul.f32.gmra.mxu0 %v897
    %v961 = vpop.f32.mrf.mxu0
    %v962 = vadd.f32 0.0, %v961
    %963 = vmatmul.f32.gmra.mxu0 %v900
    %v964 = vpop.f32.mrf.mxu0
    %v965 = vadd.f32 0.0, %v964
    %966 = vmatmul.f32.gmra.mxu0 %v903
    %v967 = vpop.f32.mrf.mxu0
    %v968 = vadd.f32 0.0, %v967
    %969 = vmatmul.f32.gmra.mxu0 %v906
    %v970 = vpop.f32.mrf.mxu0
    %v971 = vadd.f32 0.0, %v970
    %972 = vmatmul.f32.gmra.mxu0 %v909
    %v973 = vpop.f32.mrf.mxu0
    %v974 = vadd.f32 0.0, %v973
    %975 = vmatmul.f32.gmra.mxu0 %v912
    %v976 = vpop.f32.mrf.mxu0
    %v977 = vadd.f32 0.0, %v976
    %978 = vmatmul.f32.gmra.mxu0 %v915
    %v979 = vpop.f32.mrf.mxu0
    %v980 = vadd.f32 0.0, %v979
    %981 = vmatmul.f32.gmra.mxu0 %v918
    %v982 = vpop.f32.mrf.mxu0
    %v983 = vadd.f32 0.0, %v982
    %984 = vmatmul.f32.gmra.mxu0 %v921
    %v985 = vpop.f32.mrf.mxu0
    %v986 = vadd.f32 0.0, %v985
    %987 = vmatmul.f32.gmra.mxu0 %v924
    %v988 = vpop.f32.mrf.mxu0
    %v989 = vadd.f32 0.0, %v988
    %990 = vmatmul.f32.gmra.mxu0 %v927
    %v991 = vpop.f32.mrf.mxu0
    %v992 = vadd.f32 0.0, %v991
    %993 = vdwg.mxu0
    %s994 = scalar_lea.vmem %s3, 1
    %v995 = vld [vmem:[%s994] sm:$0x1]
    %v997 = vperm.slane %v995, 0
    %v999 = vsub.f32 %v997, %v947
    %v1000 = vsub.f32 %v997, %v950
    %v1001 = vsub.f32 %v997, %v953
    %v1002 = vsub.f32 %v997, %v956
    %v1003 = vsub.f32 %v997, %v959
    %v1004 = vsub.f32 %v997, %v962
    %v1005 = vsub.f32 %v997, %v965
    %v1006 = vsub.f32 %v997, %v968
    %v1007 = vsub.f32 %v997, %v971
    %v1008 = vsub.f32 %v997, %v974
    %v1009 = vsub.f32 %v997, %v977
    %v1010 = vsub.f32 %v997, %v980
    %v1011 = vsub.f32 %v997, %v983
    %v1012 = vsub.f32 %v997, %v986
    %v1013 = vsub.f32 %v997, %v989
    %v1014 = vsub.f32 %v997, %v992
    %v1015 = vsel %vm51, %v999, inf
    %1016 = vmin.index.xlane.f32.xlu0 %v1015
    %v1017 = vpop.xlane.xlu0 %1016
    %v1018 = vsel %vm51, %v1000, inf
    %1019 = vmin.index.xlane.f32.xlu0 %v1018
    %v1020 = vpop.xlane.xlu0 %1019
    %v1021 = vsel %vm51, %v1001, inf
    %1022 = vmin.index.xlane.f32.xlu0 %v1021
    %v1023 = vpop.xlane.xlu0 %1022
    %v1024 = vsel %vm51, %v1002, inf
    %1025 = vmin.index.xlane.f32.xlu0 %v1024
    %v1026 = vpop.xlane.xlu0 %1025
    %v1027 = vsel %vm51, %v1003, inf
    %1028 = vmin.index.xlane.f32.xlu0 %v1027
    %v1029 = vpop.xlane.xlu0 %1028
    %v1030 = vsel %vm51, %v1004, inf
    %1031 = vmin.index.xlane.f32.xlu0 %v1030
    %v1032 = vpop.xlane.xlu0 %1031
    %v1033 = vsel %vm51, %v1005, inf
    %1034 = vmin.index.xlane.f32.xlu0 %v1033
    %v1035 = vpop.xlane.xlu0 %1034
    %v1036 = vsel %vm51, %v1006, inf
    %1037 = vmin.index.xlane.f32.xlu0 %v1036
    %v1038 = vpop.xlane.xlu0 %1037
    %v1039 = vsel %vm51, %v1007, inf
    %1040 = vmin.index.xlane.f32.xlu0 %v1039
    %v1041 = vpop.xlane.xlu0 %1040
    %v1042 = vsel %vm51, %v1008, inf
    %1043 = vmin.index.xlane.f32.xlu0 %v1042
    %v1044 = vpop.xlane.xlu0 %1043
    %v1045 = vsel %vm51, %v1009, inf
    %1046 = vmin.index.xlane.f32.xlu0 %v1045
    %v1047 = vpop.xlane.xlu0 %1046
    %v1048 = vsel %vm51, %v1010, inf
    %1049 = vmin.index.xlane.f32.xlu0 %v1048
    %v1050 = vpop.xlane.xlu0 %1049
    %v1051 = vsel %vm51, %v1011, inf
    %1052 = vmin.index.xlane.f32.xlu0 %v1051
    %v1053 = vpop.xlane.xlu0 %1052
    %v1054 = vsel %vm51, %v1012, inf
    %1055 = vmin.index.xlane.f32.xlu0 %v1054
    %v1056 = vpop.xlane.xlu0 %1055
    %v1057 = vsel %vm51, %v1013, inf
    %1058 = vmin.index.xlane.f32.xlu0 %v1057
    %v1059 = vpop.xlane.xlu0 %1058
    %v1060 = vsel %vm51, %v1014, inf
    %1061 = vmin.index.xlane.f32.xlu0 %v1060
    %v1062 = vpop.xlane.xlu0 %1061
    %v1063 = vperm.slane %v1017, %v40
    %v1064 = vperm.slane %v1020, %v234
    %v1065 = vsel %vm236, %v1064, %v1063
    %v1066 = vperm.slane %v1023, %v238
    %v1067 = vsel %vm240, %v1066, %v1065
    %v1068 = vperm.slane %v1026, %v242
    %v1069 = vsel %vm244, %v1068, %v1067
    %v1070 = vperm.slane %v1029, %v246
    %v1071 = vsel %vm248, %v1070, %v1069
    %v1072 = vperm.slane %v1032, %v250
    %v1073 = vsel %vm252, %v1072, %v1071
    %v1074 = vperm.slane %v1035, %v254
    %v1075 = vsel %vm256, %v1074, %v1073
    %v1076 = vperm.slane %v1038, %v258
    %v1077 = vsel %vm260, %v1076, %v1075
    %v1078 = vperm.slane %v1041, %v262
    %v1079 = vsel %vm264, %v1078, %v1077
    %v1080 = vperm.slane %v1044, %v266
    %v1081 = vsel %vm268, %v1080, %v1079
    %v1082 = vperm.slane %v1047, %v270
    %v1083 = vsel %vm272, %v1082, %v1081
    %v1084 = vperm.slane %v1050, %v274
    %v1085 = vsel %vm276, %v1084, %v1083
    %v1086 = vperm.slane %v1053, %v278
    %v1087 = vsel %vm280, %v1086, %v1085
    %v1088 = vperm.slane %v1056, %v282
    %v1089 = vsel %vm284, %v1088, %v1087
    %v1090 = vperm.slane %v1059, %v286
    %v1091 = vsel %vm288, %v1090, %v1089
    %v1092 = vperm.slane %v1062, %v290
    %v1093 = vsel %vm292, %v1092, %v1091
    %1094 = vst [vmem:[#allocation2 + $0x2] sm:$0x1] %v1093
    %vm1095 = vcmp.eq.s32.totalorder %v40, %v1017
    %vm1096 = vcmp.eq.s32.totalorder %v40, %v1020
    %vm1097 = vcmp.eq.s32.totalorder %v40, %v1023
    %vm1098 = vcmp.eq.s32.totalorder %v40, %v1026
    %vm1099 = vcmp.eq.s32.totalorder %v40, %v1029
    %vm1100 = vcmp.eq.s32.totalorder %v40, %v1032
    %vm1101 = vcmp.eq.s32.totalorder %v40, %v1035
    %vm1102 = vcmp.eq.s32.totalorder %v40, %v1038
    %vm1103 = vcmp.eq.s32.totalorder %v40, %v1041
    %vm1104 = vcmp.eq.s32.totalorder %v40, %v1044
    %vm1105 = vcmp.eq.s32.totalorder %v40, %v1047
    %vm1106 = vcmp.eq.s32.totalorder %v40, %v1050
    %vm1107 = vcmp.eq.s32.totalorder %v40, %v1053
    %vm1108 = vcmp.eq.s32.totalorder %v40, %v1056
    %vm1109 = vcmp.eq.s32.totalorder %v40, %v1059
    %vm1110 = vcmp.eq.s32.totalorder %v40, %v1062
    %v1111 = vsel %vm1095, 1, 0
    %v1112 = vsel %vm1096, 1, 0
    %v1113 = vsel %vm1097, 1, 0
    %v1114 = vsel %vm1098, 1, 0
    %v1115 = vsel %vm1099, 1, 0
    %v1116 = vsel %vm1100, 1, 0
    %v1117 = vsel %vm1101, 1, 0
    %v1118 = vsel %vm1102, 1, 0
    %v1119 = vsel %vm1103, 1, 0
    %v1120 = vsel %vm1104, 1, 0
    %v1121 = vsel %vm1105, 1, 0
    %v1122 = vsel %vm1106, 1, 0
    %v1123 = vsel %vm1107, 1, 0
    %v1124 = vsel %vm1108, 1, 0
    %v1125 = vsel %vm1109, 1, 0
    %v1126 = vsel %vm1110, 1, 0
    %v1127 = vcvt.s32.f32 %v1111
    %v1128 = vcvt.s32.f32 %v1112
    %v1129 = vcvt.s32.f32 %v1113
    %v1130 = vcvt.s32.f32 %v1114
    %v1131 = vcvt.s32.f32 %v1115
    %v1132 = vcvt.s32.f32 %v1116
    %v1133 = vcvt.s32.f32 %v1117
    %v1134 = vcvt.s32.f32 %v1118
    %v1135 = vcvt.s32.f32 %v1119
    %v1136 = vcvt.s32.f32 %v1120
    %v1137 = vcvt.s32.f32 %v1121
    %v1138 = vcvt.s32.f32 %v1122
    %v1139 = vcvt.s32.f32 %v1123
    %v1140 = vcvt.s32.f32 %v1124
    %v1141 = vcvt.s32.f32 %v1125
    %v1142 = vcvt.s32.f32 %v1126
    %v1143 = vadd.f32 %v1127, 0.0
    %v1144 = vadd.f32 %v1128, 0.0
    %v1145 = vadd.f32 %v1129, 0.0
    %v1146 = vadd.f32 %v1130, 0.0
    %v1147 = vadd.f32 %v1131, 0.0
    %v1148 = vadd.f32 %v1132, 0.0
    %v1149 = vadd.f32 %v1133, 0.0
    %v1150 = vadd.f32 %v1134, 0.0
    %v1151 = vadd.f32 %v1135, 0.0
    %v1152 = vadd.f32 %v1136, 0.0
    %v1153 = vadd.f32 %v1137, 0.0
    %v1154 = vadd.f32 %v1138, 0.0
    %v1155 = vadd.f32 %v1139, 0.0
    %v1156 = vadd.f32 %v1140, 0.0
    %v1157 = vadd.f32 %v1141, 0.0
    %v1158 = vadd.f32 %v1142, 0.0
    %1175 = vrot.lane.b32.xlu0 %v999, 64
    %v1176 = vpop.permute.xlu0 %1175
    %1177 = vrot.lane.b32.xlu0 %v1000, 64
    %v1178 = vpop.permute.xlu0 %1177
    %1179 = vrot.lane.b32.xlu0 %v1001, 64
    %v1180 = vpop.permute.xlu0 %1179
    %1181 = vrot.lane.b32.xlu0 %v1002, 64
    %v1182 = vpop.permute.xlu0 %1181
    %1183 = vrot.lane.b32.xlu0 %v1003, 64
    %v1184 = vpop.permute.xlu0 %1183
    %1185 = vrot.lane.b32.xlu0 %v1004, 64
    %v1186 = vpop.permute.xlu0 %1185
    %1187 = vrot.lane.b32.xlu0 %v1005, 64
    %v1188 = vpop.permute.xlu0 %1187
    %1189 = vrot.lane.b32.xlu0 %v1006, 64
    %v1190 = vpop.permute.xlu0 %1189
    %1191 = vrot.lane.b32.xlu0 %v1007, 64
    %v1192 = vpop.permute.xlu0 %1191
    %1193 = vrot.lane.b32.xlu0 %v1008, 64
    %v1194 = vpop.permute.xlu0 %1193
    %1195 = vrot.lane.b32.xlu0 %v1009, 64
    %v1196 = vpop.permute.xlu0 %1195
    %1197 = vrot.lane.b32.xlu0 %v1010, 64
    %v1198 = vpop.permute.xlu0 %1197
    %1199 = vrot.lane.b32.xlu0 %v1011, 64
    %v1200 = vpop.permute.xlu0 %1199
    %1201 = vrot.lane.b32.xlu0 %v1012, 64
    %v1202 = vpop.permute.xlu0 %1201
    %1203 = vrot.lane.b32.xlu0 %v1013, 64
    %v1204 = vpop.permute.xlu0 %1203
    %1205 = vrot.lane.b32.xlu0 %v1014, 64
    %v1206 = vpop.permute.xlu0 %1205
    %v1223 = vsel %vm51, %v1176, inf
    %1224 = vmin.index.xlane.f32.xlu0 %v1223
    %v1225 = vpop.xlane.xlu0 %1224
    %v1226 = vsel %vm51, %v1178, inf
    %1227 = vmin.index.xlane.f32.xlu0 %v1226
    %v1228 = vpop.xlane.xlu0 %1227
    %v1229 = vsel %vm51, %v1180, inf
    %1230 = vmin.index.xlane.f32.xlu0 %v1229
    %v1231 = vpop.xlane.xlu0 %1230
    %v1232 = vsel %vm51, %v1182, inf
    %1233 = vmin.index.xlane.f32.xlu0 %v1232
    %v1234 = vpop.xlane.xlu0 %1233
    %v1235 = vsel %vm51, %v1184, inf
    %1236 = vmin.index.xlane.f32.xlu0 %v1235
    %v1237 = vpop.xlane.xlu0 %1236
    %v1238 = vsel %vm51, %v1186, inf
    %1239 = vmin.index.xlane.f32.xlu0 %v1238
    %v1240 = vpop.xlane.xlu0 %1239
    %v1241 = vsel %vm51, %v1188, inf
    %1242 = vmin.index.xlane.f32.xlu0 %v1241
    %v1243 = vpop.xlane.xlu0 %1242
    %v1244 = vsel %vm51, %v1190, inf
    %1245 = vmin.index.xlane.f32.xlu0 %v1244
    %v1246 = vpop.xlane.xlu0 %1245
    %v1247 = vsel %vm51, %v1192, inf
    %1248 = vmin.index.xlane.f32.xlu0 %v1247
    %v1249 = vpop.xlane.xlu0 %1248
    %v1250 = vsel %vm51, %v1194, inf
    %1251 = vmin.index.xlane.f32.xlu0 %v1250
    %v1252 = vpop.xlane.xlu0 %1251
    %v1253 = vsel %vm51, %v1196, inf
    %1254 = vmin.index.xlane.f32.xlu0 %v1253
    %v1255 = vpop.xlane.xlu0 %1254
    %v1256 = vsel %vm51, %v1198, inf
    %1257 = vmin.index.xlane.f32.xlu0 %v1256
    %v1258 = vpop.xlane.xlu0 %1257
    %v1259 = vsel %vm51, %v1200, inf
    %1260 = vmin.index.xlane.f32.xlu0 %v1259
    %v1261 = vpop.xlane.xlu0 %1260
    %v1262 = vsel %vm51, %v1202, inf
    %1263 = vmin.index.xlane.f32.xlu0 %v1262
    %v1264 = vpop.xlane.xlu0 %1263
    %v1265 = vsel %vm51, %v1204, inf
    %1266 = vmin.index.xlane.f32.xlu0 %v1265
    %v1267 = vpop.xlane.xlu0 %1266
    %v1268 = vsel %vm51, %v1206, inf
    %1269 = vmin.index.xlane.f32.xlu0 %v1268
    %v1270 = vpop.xlane.xlu0 %1269
    %v1271 = vperm.slane %v1225, %v40
    %v1272 = vperm.slane %v1228, %v234
    %v1273 = vsel %vm236, %v1272, %v1271
    %v1274 = vperm.slane %v1231, %v238
    %v1275 = vsel %vm240, %v1274, %v1273
    %v1276 = vperm.slane %v1234, %v242
    %v1277 = vsel %vm244, %v1276, %v1275
    %v1278 = vperm.slane %v1237, %v246
    %v1279 = vsel %vm248, %v1278, %v1277
    %v1280 = vperm.slane %v1240, %v250
    %v1281 = vsel %vm252, %v1280, %v1279
    %v1282 = vperm.slane %v1243, %v254
    %v1283 = vsel %vm256, %v1282, %v1281
    %v1284 = vperm.slane %v1246, %v258
    %v1285 = vsel %vm260, %v1284, %v1283
    %v1286 = vperm.slane %v1249, %v262
    %v1287 = vsel %vm264, %v1286, %v1285
    %v1288 = vperm.slane %v1252, %v266
    %v1289 = vsel %vm268, %v1288, %v1287
    %v1290 = vperm.slane %v1255, %v270
    %v1291 = vsel %vm272, %v1290, %v1289
    %v1292 = vperm.slane %v1258, %v274
    %v1293 = vsel %vm276, %v1292, %v1291
    %v1294 = vperm.slane %v1261, %v278
    %v1295 = vsel %vm280, %v1294, %v1293
    %v1296 = vperm.slane %v1264, %v282
    %v1297 = vsel %vm284, %v1296, %v1295
    %v1298 = vperm.slane %v1267, %v286
    %v1299 = vsel %vm288, %v1298, %v1297
    %v1300 = vperm.slane %v1270, %v290
    %v1301 = vsel %vm292, %v1300, %v1299
    %1302 = vst [vmem:[#allocation2 + $0x3] sm:$0x1] %v1301
    %v1303 = vadd.s32 %v1225, 64
    %v1304 = vadd.s32 %v1228, 64
    %v1305 = vadd.s32 %v1231, 64
    %v1306 = vadd.s32 %v1234, 64
    %v1307 = vadd.s32 %v1237, 64
    %v1308 = vadd.s32 %v1240, 64
    %v1309 = vadd.s32 %v1243, 64
    %v1310 = vadd.s32 %v1246, 64
    %v1311 = vadd.s32 %v1249, 64
    %v1312 = vadd.s32 %v1252, 64
    %v1313 = vadd.s32 %v1255, 64
    %v1314 = vadd.s32 %v1258, 64
    %v1315 = vadd.s32 %v1261, 64
    %v1316 = vadd.s32 %v1264, 64
    %v1317 = vadd.s32 %v1267, 64
    %v1318 = vadd.s32 %v1270, 64
    %vm1319 = vcmp.eq.s32.totalorder %v40, %v1303
    %vm1320 = vcmp.eq.s32.totalorder %v40, %v1304
    %vm1321 = vcmp.eq.s32.totalorder %v40, %v1305
    %vm1322 = vcmp.eq.s32.totalorder %v40, %v1306
    %vm1323 = vcmp.eq.s32.totalorder %v40, %v1307
    %vm1324 = vcmp.eq.s32.totalorder %v40, %v1308
    %vm1325 = vcmp.eq.s32.totalorder %v40, %v1309
    %vm1326 = vcmp.eq.s32.totalorder %v40, %v1310
    %vm1327 = vcmp.eq.s32.totalorder %v40, %v1311
    %vm1328 = vcmp.eq.s32.totalorder %v40, %v1312
    %vm1329 = vcmp.eq.s32.totalorder %v40, %v1313
    %vm1330 = vcmp.eq.s32.totalorder %v40, %v1314
    %vm1331 = vcmp.eq.s32.totalorder %v40, %v1315
    %vm1332 = vcmp.eq.s32.totalorder %v40, %v1316
    %vm1333 = vcmp.eq.s32.totalorder %v40, %v1317
    %vm1334 = vcmp.eq.s32.totalorder %v40, %v1318
    %v1335 = vsel %vm1319, 1, 0
    %v1336 = vsel %vm1320, 1, 0
    %v1337 = vsel %vm1321, 1, 0
    %v1338 = vsel %vm1322, 1, 0
    %v1339 = vsel %vm1323, 1, 0
    %v1340 = vsel %vm1324, 1, 0
    %v1341 = vsel %vm1325, 1, 0
    %v1342 = vsel %vm1326, 1, 0
    %v1343 = vsel %vm1327, 1, 0
    %v1344 = vsel %vm1328, 1, 0
    %v1345 = vsel %vm1329, 1, 0
    %v1346 = vsel %vm1330, 1, 0
    %v1347 = vsel %vm1331, 1, 0
    %v1348 = vsel %vm1332, 1, 0
    %v1349 = vsel %vm1333, 1, 0
    %v1350 = vsel %vm1334, 1, 0
    %v1351 = vcvt.s32.f32 %v1335
    %v1352 = vcvt.s32.f32 %v1336
    %v1353 = vcvt.s32.f32 %v1337
    %v1354 = vcvt.s32.f32 %v1338
    %v1355 = vcvt.s32.f32 %v1339
    %v1356 = vcvt.s32.f32 %v1340
    %v1357 = vcvt.s32.f32 %v1341
    %v1358 = vcvt.s32.f32 %v1342
    %v1359 = vcvt.s32.f32 %v1343
    %v1360 = vcvt.s32.f32 %v1344
    %v1361 = vcvt.s32.f32 %v1345
    %v1362 = vcvt.s32.f32 %v1346
    %v1363 = vcvt.s32.f32 %v1347
    %v1364 = vcvt.s32.f32 %v1348
    %v1365 = vcvt.s32.f32 %v1349
    %v1366 = vcvt.s32.f32 %v1350
    %v1367 = vadd.f32 %v1143, %v1351
    %v1368 = vadd.f32 %v1144, %v1352
    %v1369 = vadd.f32 %v1145, %v1353
    %v1370 = vadd.f32 %v1146, %v1354
    %v1371 = vadd.f32 %v1147, %v1355
    %v1372 = vadd.f32 %v1148, %v1356
    %v1373 = vadd.f32 %v1149, %v1357
    %v1374 = vadd.f32 %v1150, %v1358
    %v1375 = vadd.f32 %v1151, %v1359
    %v1376 = vadd.f32 %v1152, %v1360
    %v1377 = vadd.f32 %v1153, %v1361
    %v1378 = vadd.f32 %v1154, %v1362
    %v1379 = vadd.f32 %v1155, %v1363
    %v1380 = vadd.f32 %v1156, %v1364
    %v1381 = vadd.f32 %v1157, %v1365
    %v1382 = vadd.f32 %v1158, %v1366
    %s1383 = scalar_lea.vmem %s2, 128
    %v1384 = vld [vmem:[%s1383] sm:$0xff]
    %v1385 = vld [vmem:[%s1383 + $0x8] sm:$0xff]
    %v1386 = vld [vmem:[%s1383 + $0x10] sm:$0xff]
    %v1387 = vld [vmem:[%s1383 + $0x18] sm:$0xff]
    %v1388 = vld [vmem:[%s1383 + $0x20] sm:$0xff]
    %v1389 = vld [vmem:[%s1383 + $0x28] sm:$0xff]
    %v1390 = vld [vmem:[%s1383 + $0x30] sm:$0xff]
    %v1391 = vld [vmem:[%s1383 + $0x38] sm:$0xff]
    %v1392 = vld [vmem:[%s1383 + $0x40] sm:$0xff]
    %v1393 = vld [vmem:[%s1383 + $0x48] sm:$0xff]
    %v1394 = vld [vmem:[%s1383 + $0x50] sm:$0xff]
    %v1395 = vld [vmem:[%s1383 + $0x58] sm:$0xff]
    %v1396 = vld [vmem:[%s1383 + $0x60] sm:$0xff]
    %v1397 = vld [vmem:[%s1383 + $0x68] sm:$0xff]
    %v1398 = vld [vmem:[%s1383 + $0x70] sm:$0xff]
    %v1399 = vld [vmem:[%s1383 + $0x78] sm:$0xff]
    %1400 = vmatpush.msra.mxu0 %v1399
    %1401 = vmatpush.msra.mxu0 %v1398
    %1402 = vmatpush.msra.mxu0 %v1397
    %1403 = vmatpush.msra.mxu0 %v1396
    %1404 = vmatpush.msra.mxu0 %v1395
    %1405 = vmatpush.msra.mxu0 %v1394
    %1406 = vmatpush.msra.mxu0 %v1393
    %1407 = vmatpush.msra.mxu0 %v1392
    %1408 = vmatpush.msra.mxu0 %v1391
    %1409 = vmatpush.msra.mxu0 %v1390
    %1410 = vmatpush.msra.mxu0 %v1389
    %1411 = vmatpush.msra.mxu0 %v1388
    %1412 = vmatpush.msra.mxu0 %v1387
    %1413 = vmatpush.msra.mxu0 %v1386
    %1414 = vmatpush.msra.mxu0 %v1385
    %1415 = vmatpush.msra.mxu0 %v1384
    %1416 = vmatmul.f32.gmra.mxu0 %v1367
    %v1417 = vpop.f32.mrf.mxu0
    %v1418 = vadd.f32 0.0, %v1417
    %1419 = vmatmul.f32.gmra.mxu0 %v1368
    %v1420 = vpop.f32.mrf.mxu0
    %v1421 = vadd.f32 0.0, %v1420
    %1422 = vmatmul.f32.gmra.mxu0 %v1369
    %v1423 = vpop.f32.mrf.mxu0
    %v1424 = vadd.f32 0.0, %v1423
    %1425 = vmatmul.f32.gmra.mxu0 %v1370
    %v1426 = vpop.f32.mrf.mxu0
    %v1427 = vadd.f32 0.0, %v1426
    %1428 = vmatmul.f32.gmra.mxu0 %v1371
    %v1429 = vpop.f32.mrf.mxu0
    %v1430 = vadd.f32 0.0, %v1429
    %1431 = vmatmul.f32.gmra.mxu0 %v1372
    %v1432 = vpop.f32.mrf.mxu0
    %v1433 = vadd.f32 0.0, %v1432
    %1434 = vmatmul.f32.gmra.mxu0 %v1373
    %v1435 = vpop.f32.mrf.mxu0
    %v1436 = vadd.f32 0.0, %v1435
    %1437 = vmatmul.f32.gmra.mxu0 %v1374
    %v1438 = vpop.f32.mrf.mxu0
    %v1439 = vadd.f32 0.0, %v1438
    %1440 = vmatmul.f32.gmra.mxu0 %v1375
    %v1441 = vpop.f32.mrf.mxu0
    %v1442 = vadd.f32 0.0, %v1441
    %1443 = vmatmul.f32.gmra.mxu0 %v1376
    %v1444 = vpop.f32.mrf.mxu0
    %v1445 = vadd.f32 0.0, %v1444
    %1446 = vmatmul.f32.gmra.mxu0 %v1377
    %v1447 = vpop.f32.mrf.mxu0
    %v1448 = vadd.f32 0.0, %v1447
    %1449 = vmatmul.f32.gmra.mxu0 %v1378
    %v1450 = vpop.f32.mrf.mxu0
    %v1451 = vadd.f32 0.0, %v1450
    %1452 = vmatmul.f32.gmra.mxu0 %v1379
    %v1453 = vpop.f32.mrf.mxu0
    %v1454 = vadd.f32 0.0, %v1453
    %1455 = vmatmul.f32.gmra.mxu0 %v1380
    %v1456 = vpop.f32.mrf.mxu0
    %v1457 = vadd.f32 0.0, %v1456
    %1458 = vmatmul.f32.gmra.mxu0 %v1381
    %v1459 = vpop.f32.mrf.mxu0
    %v1460 = vadd.f32 0.0, %v1459
    %1461 = vmatmul.f32.gmra.mxu0 %v1382
    %v1462 = vpop.f32.mrf.mxu0
    %v1463 = vadd.f32 0.0, %v1462
    %1464 = vdwg.mxu0
    %v1465 = vsub.f32 %v664, %v1418
    %v1466 = vsub.f32 %v665, %v1421
    %v1467 = vsub.f32 %v666, %v1424
    %v1468 = vsub.f32 %v667, %v1427
    %v1469 = vsub.f32 %v668, %v1430
    %v1470 = vsub.f32 %v669, %v1433
    %v1471 = vsub.f32 %v670, %v1436
    %v1472 = vsub.f32 %v671, %v1439
    %v1473 = vsub.f32 %v672, %v1442
    %v1474 = vsub.f32 %v673, %v1445
    %v1475 = vsub.f32 %v674, %v1448
    %v1476 = vsub.f32 %v675, %v1451
    %v1477 = vsub.f32 %v676, %v1454
    %v1478 = vsub.f32 %v677, %v1457
    %v1479 = vsub.f32 %v678, %v1460
    %v1480 = vsub.f32 %v679, %v1463
    %v1481 = vmul.f32 %v1465, %v1465
    %v1482 = vmul.f32 %v1466, %v1466
    %v1483 = vmul.f32 %v1467, %v1467
    %v1484 = vmul.f32 %v1468, %v1468
    %v1485 = vmul.f32 %v1469, %v1469
    %v1486 = vmul.f32 %v1470, %v1470
    %v1487 = vmul.f32 %v1471, %v1471
    %v1488 = vmul.f32 %v1472, %v1472
    %v1489 = vmul.f32 %v1473, %v1473
    %v1490 = vmul.f32 %v1474, %v1474
    %v1491 = vmul.f32 %v1475, %v1475
    %v1492 = vmul.f32 %v1476, %v1476
    %v1493 = vmul.f32 %v1477, %v1477
    %v1494 = vmul.f32 %v1478, %v1478
    %v1495 = vmul.f32 %v1479, %v1479
    %v1496 = vmul.f32 %v1480, %v1480
    %v1497 = vsel %vm696, %v1481, 0.0
    %v1498 = vsel %vm696, %v1482, 0.0
    %v1499 = vadd.f32 %v1497, %v1498
    %v1500 = vsel %vm696, %v1483, 0.0
    %v1501 = vadd.f32 %v1499, %v1500
    %v1502 = vsel %vm696, %v1484, 0.0
    %v1503 = vadd.f32 %v1501, %v1502
    %v1504 = vsel %vm696, %v1485, 0.0
    %v1505 = vadd.f32 %v1503, %v1504
    %v1506 = vsel %vm696, %v1486, 0.0
    %v1507 = vadd.f32 %v1505, %v1506
    %v1508 = vsel %vm696, %v1487, 0.0
    %v1509 = vadd.f32 %v1507, %v1508
    %v1510 = vsel %vm696, %v1488, 0.0
    %v1511 = vadd.f32 %v1509, %v1510
    %v1512 = vsel %vm696, %v1489, 0.0
    %v1513 = vadd.f32 %v1511, %v1512
    %v1514 = vsel %vm696, %v1490, 0.0
    %v1515 = vadd.f32 %v1513, %v1514
    %v1516 = vsel %vm696, %v1491, 0.0
    %v1517 = vadd.f32 %v1515, %v1516
    %v1518 = vsel %vm696, %v1492, 0.0
    %v1519 = vadd.f32 %v1517, %v1518
    %v1520 = vsel %vm696, %v1493, 0.0
    %v1521 = vadd.f32 %v1519, %v1520
    %v1522 = vsel %vm696, %v1494, 0.0
    %v1523 = vadd.f32 %v1521, %v1522
    %v1524 = vsel %vm696, %v1495, 0.0
    %v1525 = vadd.f32 %v1523, %v1524
    %v1526 = vsel %vm696, %v1496, 0.0
    %v1527 = vadd.f32 %v1525, %v1526
    %1528 = vadd.xlane.f32.xlu0 %v1527
    %v1529 = vpop.xlane.xlu0 %1528
    %v1530 = vrot.slane %v1529, 4
    %v1531 = vadd.f32 %v1529, %v1530
    %v1532 = vrot.slane %v1531, 2
    %v1533 = vadd.f32 %v1531, %v1532
    %v1534 = vrot.slane %v1533, 1
    %v1535 = vadd.f32 %v1533, %v1534
    %s1536 = vtos %v1535
    %vm1537 = vcmp.eq.s32.totalorder %v40, 2
    %vm1538 = vmand %vm737, %vm1537
    %v1539 = vsel %vm1538, 1, 0
    %v1540 = vcvt.s32.f32 %v1539
    %v1541 = vstv %s1536
    %v1542 = vmul.f32 %v1540, %v1541
    %v1543 = vadd.f32 %v855, %v1542
    %1560 = vrot.lane.b32.xlu0 %v1481, 96
    %v1561 = vpop.permute.xlu0 %1560
    %1562 = vrot.lane.b32.xlu0 %v1482, 96
    %v1563 = vpop.permute.xlu0 %1562
    %1564 = vrot.lane.b32.xlu0 %v1483, 96
    %v1565 = vpop.permute.xlu0 %1564
    %1566 = vrot.lane.b32.xlu0 %v1484, 96
    %v1567 = vpop.permute.xlu0 %1566
    %1568 = vrot.lane.b32.xlu0 %v1485, 96
    %v1569 = vpop.permute.xlu0 %1568
    %1570 = vrot.lane.b32.xlu0 %v1486, 96
    %v1571 = vpop.permute.xlu0 %1570
    %1572 = vrot.lane.b32.xlu0 %v1487, 96
    %v1573 = vpop.permute.xlu0 %1572
    %1574 = vrot.lane.b32.xlu0 %v1488, 96
    %v1575 = vpop.permute.xlu0 %1574
    %1576 = vrot.lane.b32.xlu0 %v1489, 96
    %v1577 = vpop.permute.xlu0 %1576
    %1578 = vrot.lane.b32.xlu0 %v1490, 96
    %v1579 = vpop.permute.xlu0 %1578
    %1580 = vrot.lane.b32.xlu0 %v1491, 96
    %v1581 = vpop.permute.xlu0 %1580
    %1582 = vrot.lane.b32.xlu0 %v1492, 96
    %v1583 = vpop.permute.xlu0 %1582
    %1584 = vrot.lane.b32.xlu0 %v1493, 96
    %v1585 = vpop.permute.xlu0 %1584
    %1586 = vrot.lane.b32.xlu0 %v1494, 96
    %v1587 = vpop.permute.xlu0 %1586
    %1588 = vrot.lane.b32.xlu0 %v1495, 96
    %v1589 = vpop.permute.xlu0 %1588
    %1590 = vrot.lane.b32.xlu0 %v1496, 96
    %v1591 = vpop.permute.xlu0 %1590
    %v1608 = vsel %vm696, %v1561, 0.0
    %v1609 = vsel %vm696, %v1563, 0.0
    %v1610 = vadd.f32 %v1608, %v1609
    %v1611 = vsel %vm696, %v1565, 0.0
    %v1612 = vadd.f32 %v1610, %v1611
    %v1613 = vsel %vm696, %v1567, 0.0
    %v1614 = vadd.f32 %v1612, %v1613
    %v1615 = vsel %vm696, %v1569, 0.0
    %v1616 = vadd.f32 %v1614, %v1615
    %v1617 = vsel %vm696, %v1571, 0.0
    %v1618 = vadd.f32 %v1616, %v1617
    %v1619 = vsel %vm696, %v1573, 0.0
    %v1620 = vadd.f32 %v1618, %v1619
    %v1621 = vsel %vm696, %v1575, 0.0
    %v1622 = vadd.f32 %v1620, %v1621
    %v1623 = vsel %vm696, %v1577, 0.0
    %v1624 = vadd.f32 %v1622, %v1623
    %v1625 = vsel %vm696, %v1579, 0.0
    %v1626 = vadd.f32 %v1624, %v1625
    %v1627 = vsel %vm696, %v1581, 0.0
    %v1628 = vadd.f32 %v1626, %v1627
    %v1629 = vsel %vm696, %v1583, 0.0
    %v1630 = vadd.f32 %v1628, %v1629
    %v1631 = vsel %vm696, %v1585, 0.0
    %v1632 = vadd.f32 %v1630, %v1631
    %v1633 = vsel %vm696, %v1587, 0.0
    %v1634 = vadd.f32 %v1632, %v1633
    %v1635 = vsel %vm696, %v1589, 0.0
    %v1636 = vadd.f32 %v1634, %v1635
    %v1637 = vsel %vm696, %v1591, 0.0
    %v1638 = vadd.f32 %v1636, %v1637
    %1639 = vadd.xlane.f32.xlu0 %v1638
    %v1640 = vpop.xlane.xlu0 %1639
    %v1641 = vrot.slane %v1640, 4
    %v1642 = vadd.f32 %v1640, %v1641
    %v1643 = vrot.slane %v1642, 2
    %v1644 = vadd.f32 %v1642, %v1643
    %v1645 = vrot.slane %v1644, 1
    %v1646 = vadd.f32 %v1644, %v1645
    %s1647 = vtos %v1646
    %vm1648 = vcmp.eq.s32.totalorder %v40, 3
    %vm1649 = vmand %vm737, %vm1648
    %v1650 = vsel %vm1649, 1, 0
    %v1651 = vcvt.s32.f32 %v1650
    %v1652 = vstv %s1647
    %v1653 = vmul.f32 %v1651, %v1652
    %v1654 = vadd.f32 %v1543, %v1653
    %v1655 = vsub.f32 %v23, %v1465
    %v1656 = vsub.f32 %v24, %v1466
    %v1657 = vsub.f32 %v25, %v1467
    %v1658 = vsub.f32 %v26, %v1468
    %v1659 = vsub.f32 %v27, %v1469
    %v1660 = vsub.f32 %v28, %v1470
    %v1661 = vsub.f32 %v29, %v1471
    %v1662 = vsub.f32 %v30, %v1472
    %v1663 = vsub.f32 %v31, %v1473
    %v1664 = vsub.f32 %v32, %v1474
    %v1665 = vsub.f32 %v33, %v1475
    %v1666 = vsub.f32 %v34, %v1476
    %v1667 = vsub.f32 %v35, %v1477
    %v1668 = vsub.f32 %v36, %v1478
    %v1669 = vsub.f32 %v37, %v1479
    %v1670 = vsub.f32 %v38, %v1480
    %1671 = vst.msk [vmem:[%s4] sm:$0xff] %vm51, %v1655
    %1672 = vst.msk [vmem:[%s4 + $0x8] sm:$0xff] %vm51, %v1656
    %1673 = vst.msk [vmem:[%s4 + $0x10] sm:$0xff] %vm51, %v1657
    %1674 = vst.msk [vmem:[%s4 + $0x18] sm:$0xff] %vm51, %v1658
    %1675 = vst.msk [vmem:[%s4 + $0x20] sm:$0xff] %vm51, %v1659
    %1676 = vst.msk [vmem:[%s4 + $0x28] sm:$0xff] %vm51, %v1660
    %1677 = vst.msk [vmem:[%s4 + $0x30] sm:$0xff] %vm51, %v1661
    %1678 = vst.msk [vmem:[%s4 + $0x38] sm:$0xff] %vm51, %v1662
    %1679 = vst.msk [vmem:[%s4 + $0x40] sm:$0xff] %vm51, %v1663
    %1680 = vst.msk [vmem:[%s4 + $0x48] sm:$0xff] %vm51, %v1664
    %1681 = vst.msk [vmem:[%s4 + $0x50] sm:$0xff] %vm51, %v1665
    %1682 = vst.msk [vmem:[%s4 + $0x58] sm:$0xff] %vm51, %v1666
    %1683 = vst.msk [vmem:[%s4 + $0x60] sm:$0xff] %vm51, %v1667
    %1684 = vst.msk [vmem:[%s4 + $0x68] sm:$0xff] %vm51, %v1668
    %1685 = vst.msk [vmem:[%s4 + $0x70] sm:$0xff] %vm51, %v1669
    %1686 = vst.msk [vmem:[%s4 + $0x78] sm:$0xff] %vm51, %v1670
    %1687 = vst [vmem:[#allocation4] sm:$0xff] %v1654
    // Predicated region
    $region18: #{tpu_custom_call.1} parent=1 // pred_check
      _
    $region19: #{tpu_custom_call.1} parent=1 // pred_check_branch
      %1689 = sbr.rel (0) target = $region21
    $region20: #{tpu_custom_call.1} parent=1 // pred_region
      _
    $region21: #{tpu_custom_call.1} parent=1 // pred_fallthru
      _
    // Predicated region
    $region22: #{tpu_custom_call.1} parent=1 // pred_check
      _
    $region23: #{tpu_custom_call.1} parent=1 // pred_check_branch
      %1691 = sbr.rel (0) target = $region25
    $region24: #{tpu_custom_call.1} parent=1 // pred_region
      %1693 = vsyncadd [#allocation3], 0
      %s1695 = sshll.u32 [#allocation2], 4
      %s1696 = int_to_ptr.vmem [resolvable:$true] %s1695
      %s1697 = sshll.u32 %s5, 4
      %s1698 = int_to_ptr.hbm [resolvable:$true] %s1697
      %1700 = dma.vmem_to_hbm [thread:$0]  %s1696, 64, %s1698, [#allocation3]
    $region25: #{tpu_custom_call.1} parent=1 // pred_fallthru
      _
    // Predicated region
    $region26: #{tpu_custom_call.1} parent=1 // pred_check
      _
    $region27: #{tpu_custom_call.1} parent=1 // pred_check_branch
      %1702 = sbr.rel (0) target = $region29
    $region28: #{tpu_custom_call.1} parent=1 // pred_region
      _
    $region29: #{tpu_custom_call.1} parent=1 // pred_fallthru
      _
    // Predicated region
    $region30: #{tpu_custom_call.1} parent=1 // pred_check
      _
    $region31: #{tpu_custom_call.1} parent=1 // pred_check_branch
      %1704 = sbr.rel (0) target = $region33
    $region32: #{tpu_custom_call.1} parent=1 // pred_region
      %1706 = vsyncadd [#allocation5], 0
      %s1708 = sshll.u32 [#allocation4], 4
      %s1709 = int_to_ptr.vmem [resolvable:$true] %s1708
      %s1710 = sshll.u32 %s7, 4
      %s1711 = int_to_ptr.hbm [resolvable:$true] %s1710
      %1713 = dma.vmem_to_hbm [thread:$0]  %s1709, 128, %s1711, [#allocation5]
    $region33: #{tpu_custom_call.1} parent=1 // pred_fallthru
      _
    // Predicated region
    $region34: #{tpu_custom_call.1} parent=1 // pred_check
      _
    $region35: #{tpu_custom_call.1} parent=1 // pred_check_branch
      %1715 = sbr.rel (0) target = $region37
    $region36: #{tpu_custom_call.1} parent=1 // pred_region
      _
    $region37: #{tpu_custom_call.1} parent=1 // pred_fallthru
      _
    // Predicated region
    $region38: #{tpu_custom_call.1} parent=1 // pred_check
      _
    $region39: #{tpu_custom_call.1} parent=1 // pred_check_branch
      %1717 = sbr.rel (0) target = $region41
    $region40: #{tpu_custom_call.1} parent=1 // pred_region
      %1719 = dma.done [#allocation3], 64
    $region41: #{tpu_custom_call.1} parent=1 // pred_fallthru
      _
    // Predicated region
    $region42: #{tpu_custom_call.1} parent=1 // pred_check
      _
    $region43: #{tpu_custom_call.1} parent=1 // pred_check_branch
      %1721 = sbr.rel (0) target = $region45
    $region44: #{tpu_custom_call.1} parent=1 // pred_region
      _
    $region45: #{tpu_custom_call.1} parent=1 // pred_fallthru
      _
    // Predicated region
    $region46: #{tpu_custom_call.1} parent=1 // pred_check
      _
    $region47: #{tpu_custom_call.1} parent=1 // pred_check_branch
      %1723 = sbr.rel (0) target = $region49
    $region48: #{tpu_custom_call.1} parent=1 // pred_region
      %1725 = dma.done [#allocation5], 128
    $region49: #{tpu_custom_call.1} parent=1 // pred_fallthru
      _
    %1726 = vsyncpa [#allocation3], 1
    %1727 = vsyncpa [#allocation5], 1

// kernel: tpu_custom_call.1
$region0: #{tpu_custom_call.1}
  #allocation0 [shape = 'u32[]', space=smem, size = 0x4, offset = 0x4, fixed_abs, tag = 'smem constant byte address 0x4 - core index']
  #allocation1 [shape = 'u32[72,128]{1,0:T(1,128)}', space=vmem, size = 0x9000, scoped, tag = 'internal scratch']
  %s0 = inlined_call_operand.vmem [shape: f32[128,64], index: 0, kind: input, shape index: {}]
  %s1 = inlined_call_operand.vmem [shape: f32[2,64,128], index: 1, kind: input, shape index: {}]
  %s2 = inlined_call_operand.vmem [shape: f32[2,128,64], index: 2, kind: input, shape index: {}]
  %s3 = inlined_call_operand.vmem [shape: f32[2,1,128], index: 3, kind: input, shape index: {}]
  %s4 = inlined_call_operand.vmem [shape: f32[128,64], index: 4, kind: output, shape index: {0}]
  %s5 = inlined_call_operand.vmem [shape: s32[128,4], index: 5, kind: output, shape index: {1}]
  %s6 = inlined_call_operand.vmem [shape: f32[1,128,64], index: 6, kind: output, shape index: {2}]
  %s7 = inlined_call_operand.hbm [shape: f32[1,8,128], index: 7, kind: output, shape index: {3}]
  %8 = xla_tuple %s4, %s5, %s6, %s7
  %s9 = sld [smem:[#allocation0]]
  $region50: #{tpu_custom_call.1} parent=0
    _
  %s11 = ssub.s32 1, %s9
  %s12 = scalar_select 0, %s11, %s9
  $region1: #{tpu_custom_call.1} parent=0
    #allocation2 [shape = 'u8[4096]{0}', space=vmem, size = 0x1000, scoped, tag = 'output window, operand 3, single buffered']
    #allocation3 [shape = 's32[1]{0}', space=sflag, size = 0x4, scoped, tag = 'scoped memory for tpu_custom_call.1']
    %13 = vsyncpa [#allocation3], 0
    // Predicated region
    $region2: #{tpu_custom_call.1} parent=1 // pred_check
      _
    $region3: #{tpu_custom_call.1} parent=1 // pred_check_branch
      %15 = sbr.rel (0) target = $region5
    $region4: #{tpu_custom_call.1} parent=1 // pred_region
      _
    $region5: #{tpu_custom_call.1} parent=1 // pred_fallthru
      _
    // Predicated region
    $region6: #{tpu_custom_call.1} parent=1 // pred_check
      _
    $region7: #{tpu_custom_call.1} parent=1 // pred_check_branch
      %17 = sbr.rel (0) target = $region9
    $region8: #{tpu_custom_call.1} parent=1 // pred_region
      _
    $region9: #{tpu_custom_call.1} parent=1 // pred_fallthru
      _
    // Predicated region
    $region10: #{tpu_custom_call.1} parent=1 // pred_check
      _
    $region11: #{tpu_custom_call.1} parent=1 // pred_check_branch
      %19 = sbr.rel (0) target = $region13
    $region12: #{tpu_custom_call.1} parent=1 // pred_region
      _
    $region13: #{tpu_custom_call.1} parent=1 // pred_fallthru
      _
    // Predicated region
    $region14: #{tpu_custom_call.1} parent=1 // pred_check
      _
    $region15: #{tpu_custom_call.1} parent=1 // pred_check_branch
      %21 = sbr.rel (0) target = $region17
    $region16: #{tpu_custom_call.1} parent=1 // pred_region
      _
    $region17: #{tpu_custom_call.1} parent=1 // pred_fallthru
      _
    %v22 = vld [vmem:[%s0] sm:$0xff]
    %v23 = vld [vmem:[%s0 + $0x8] sm:$0xff]
    %v24 = vld [vmem:[%s0 + $0x10] sm:$0xff]
    %v25 = vld [vmem:[%s0 + $0x18] sm:$0xff]
    %v26 = vld [vmem:[%s0 + $0x20] sm:$0xff]
    %v27 = vld [vmem:[%s0 + $0x28] sm:$0xff]
    %v28 = vld [vmem:[%s0 + $0x30] sm:$0xff]
    %v29 = vld [vmem:[%s0 + $0x38] sm:$0xff]
    %v30 = vld [vmem:[%s0 + $0x40] sm:$0xff]
    %v31 = vld [vmem:[%s0 + $0x48] sm:$0xff]
    %v32 = vld [vmem:[%s0 + $0x50] sm:$0xff]
    %v33 = vld [vmem:[%s0 + $0x58] sm:$0xff]
    %v34 = vld [vmem:[%s0 + $0x60] sm:$0xff]
    %v35 = vld [vmem:[%s0 + $0x68] sm:$0xff]
    %v36 = vld [vmem:[%s0 + $0x70] sm:$0xff]
    %v37 = vld [vmem:[%s0 + $0x78] sm:$0xff]
    %v38 = vlaneseq
    %v39 = vand.u32 %v38, 127
    %v40 = vlaneseq
    %v41 = vshrl.u32 %v40, 7
    %v42 = vld [vmem:[%s1] sm:$0xff]
    %v43 = vld [vmem:[%s1 + $0x8] sm:$0xff]
    %v44 = vld [vmem:[%s1 + $0x10] sm:$0xff]
    %v45 = vld [vmem:[%s1 + $0x18] sm:$0xff]
    %v46 = vld [vmem:[%s1 + $0x20] sm:$0xff]
    %v47 = vld [vmem:[%s1 + $0x28] sm:$0xff]
    %v48 = vld [vmem:[%s1 + $0x30] sm:$0xff]
    %v49 = vld [vmem:[%s1 + $0x38] sm:$0xff]
    %vm50 = vcmask 523264
    %v52 = vsel %vm50, %v22, 0
    %v55 = vsel %vm50, %v23, 0
    %v58 = vsel %vm50, %v24, 0
    %v61 = vsel %vm50, %v25, 0
    %v64 = vsel %vm50, %v26, 0
    %v67 = vsel %vm50, %v27, 0
    %v70 = vsel %vm50, %v28, 0
    %v73 = vsel %vm50, %v29, 0
    %v76 = vsel %vm50, %v30, 0
    %v79 = vsel %vm50, %v31, 0
    %v82 = vsel %vm50, %v32, 0
    %v85 = vsel %vm50, %v33, 0
    %v88 = vsel %vm50, %v34, 0
    %v91 = vsel %vm50, %v35, 0
    %v94 = vsel %vm50, %v36, 0
    %v97 = vsel %vm50, %v37, 0
    %99 = vmatpush.msra.mxu0 0.0
    %100 = vmatpush.msra.mxu0 0.0
    %101 = vmatpush.msra.mxu0 0.0
    %102 = vmatpush.msra.mxu0 0.0
    %103 = vmatpush.msra.mxu0 0.0
    %104 = vmatpush.msra.mxu0 0.0
    %105 = vmatpush.msra.mxu0 0.0
    %106 = vmatpush.msra.mxu0 0.0
    %107 = vmatpush.msra.mxu0 %v49
    %108 = vmatpush.msra.mxu0 %v48
    %109 = vmatpush.msra.mxu0 %v47
    %110 = vmatpush.msra.mxu0 %v46
    %111 = vmatpush.msra.mxu0 %v45
    %112 = vmatpush.msra.mxu0 %v44
    %113 = vmatpush.msra.mxu0 %v43
    %114 = vmatpush.msra.mxu0 %v42
    %115 = vmatmul.f32.gmra.mxu0 %v52
    %v116 = vpop.f32.mrf.mxu0
    %v117 = vadd.f32 0.0, %v116
    %118 = vmatmul.f32.gmra.mxu0 %v55
    %v119 = vpop.f32.mrf.mxu0
    %v120 = vadd.f32 0.0, %v119
    %121 = vmatmul.f32.gmra.mxu0 %v58
    %v122 = vpop.f32.mrf.mxu0
    %v123 = vadd.f32 0.0, %v122
    %124 = vmatmul.f32.gmra.mxu0 %v61
    %v125 = vpop.f32.mrf.mxu0
    %v126 = vadd.f32 0.0, %v125
    %127 = vmatmul.f32.gmra.mxu0 %v64
    %v128 = vpop.f32.mrf.mxu0
    %v129 = vadd.f32 0.0, %v128
    %130 = vmatmul.f32.gmra.mxu0 %v67
    %v131 = vpop.f32.mrf.mxu0
    %v132 = vadd.f32 0.0, %v131
    %133 = vmatmul.f32.gmra.mxu0 %v70
    %v134 = vpop.f32.mrf.mxu0
    %v135 = vadd.f32 0.0, %v134
    %136 = vmatmul.f32.gmra.mxu0 %v73
    %v137 = vpop.f32.mrf.mxu0
    %v138 = vadd.f32 0.0, %v137
    %139 = vmatmul.f32.gmra.mxu0 %v76
    %v140 = vpop.f32.mrf.mxu0
    %v141 = vadd.f32 0.0, %v140
    %142 = vmatmul.f32.gmra.mxu0 %v79
    %v143 = vpop.f32.mrf.mxu0
    %v144 = vadd.f32 0.0, %v143
    %145 = vmatmul.f32.gmra.mxu0 %v82
    %v146 = vpop.f32.mrf.mxu0
    %v147 = vadd.f32 0.0, %v146
    %148 = vmatmul.f32.gmra.mxu0 %v85
    %v149 = vpop.f32.mrf.mxu0
    %v150 = vadd.f32 0.0, %v149
    %151 = vmatmul.f32.gmra.mxu0 %v88
    %v152 = vpop.f32.mrf.mxu0
    %v153 = vadd.f32 0.0, %v152
    %154 = vmatmul.f32.gmra.mxu0 %v91
    %v155 = vpop.f32.mrf.mxu0
    %v156 = vadd.f32 0.0, %v155
    %157 = vmatmul.f32.gmra.mxu0 %v94
    %v158 = vpop.f32.mrf.mxu0
    %v159 = vadd.f32 0.0, %v158
    %160 = vmatmul.f32.gmra.mxu0 %v97
    %v161 = vpop.f32.mrf.mxu0
    %v162 = vadd.f32 0.0, %v161
    %163 = vdwg.mxu0
    %v164 = vld [vmem:[%s3] sm:$0x1]
    %v166 = vperm.slane %v164, 0
    %v168 = vsub.f32 %v166, %v117
    %v169 = vsub.f32 %v166, %v120
    %v170 = vsub.f32 %v166, %v123
    %v171 = vsub.f32 %v166, %v126
    %v172 = vsub.f32 %v166, %v129
    %v173 = vsub.f32 %v166, %v132
    %v174 = vsub.f32 %v166, %v135
    %v175 = vsub.f32 %v166, %v138
    %v176 = vsub.f32 %v166, %v141
    %v177 = vsub.f32 %v166, %v144
    %v178 = vsub.f32 %v166, %v147
    %v179 = vsub.f32 %v166, %v150
    %v180 = vsub.f32 %v166, %v153
    %v181 = vsub.f32 %v166, %v156
    %v182 = vsub.f32 %v166, %v159
    %v183 = vsub.f32 %v166, %v162
    %v184 = vsel %vm50, %v168, inf
    %185 = vmin.index.xlane.f32.xlu0 %v184
    %v186 = vpop.xlane.xlu0 %185
    %v187 = vsel %vm50, %v169, inf
    %188 = vmin.index.xlane.f32.xlu0 %v187
    %v189 = vpop.xlane.xlu0 %188
    %v190 = vsel %vm50, %v170, inf
    %191 = vmin.index.xlane.f32.xlu0 %v190
    %v192 = vpop.xlane.xlu0 %191
    %v193 = vsel %vm50, %v171, inf
    %194 = vmin.index.xlane.f32.xlu0 %v193
    %v195 = vpop.xlane.xlu0 %194
    %v196 = vsel %vm50, %v172, inf
    %197 = vmin.index.xlane.f32.xlu0 %v196
    %v198 = vpop.xlane.xlu0 %197
    %v199 = vsel %vm50, %v173, inf
    %200 = vmin.index.xlane.f32.xlu0 %v199
    %v201 = vpop.xlane.xlu0 %200
    %v202 = vsel %vm50, %v174, inf
    %203 = vmin.index.xlane.f32.xlu0 %v202
    %v204 = vpop.xlane.xlu0 %203
    %v205 = vsel %vm50, %v175, inf
    %206 = vmin.index.xlane.f32.xlu0 %v205
    %v207 = vpop.xlane.xlu0 %206
    %v208 = vsel %vm50, %v176, inf
    %209 = vmin.index.xlane.f32.xlu0 %v208
    %v210 = vpop.xlane.xlu0 %209
    %v211 = vsel %vm50, %v177, inf
    %212 = vmin.index.xlane.f32.xlu0 %v211
    %v213 = vpop.xlane.xlu0 %212
    %v214 = vsel %vm50, %v178, inf
    %215 = vmin.index.xlane.f32.xlu0 %v214
    %v216 = vpop.xlane.xlu0 %215
    %v217 = vsel %vm50, %v179, inf
    %218 = vmin.index.xlane.f32.xlu0 %v217
    %v219 = vpop.xlane.xlu0 %218
    %v220 = vsel %vm50, %v180, inf
    %221 = vmin.index.xlane.f32.xlu0 %v220
    %v222 = vpop.xlane.xlu0 %221
    %v223 = vsel %vm50, %v181, inf
    %224 = vmin.index.xlane.f32.xlu0 %v223
    %v225 = vpop.xlane.xlu0 %224
    %v226 = vsel %vm50, %v182, inf
    %227 = vmin.index.xlane.f32.xlu0 %v226
    %v228 = vpop.xlane.xlu0 %227
    %v229 = vsel %vm50, %v183, inf
    %230 = vmin.index.xlane.f32.xlu0 %v229
    %v231 = vpop.xlane.xlu0 %230
    %vm232 = vcmask 7168
    %233 = vst.msk [vmem:[%s5] sm:$0xff] %vm232, %v186
    %234 = vst.msk [vmem:[%s5 + $0x8] sm:$0xff] %vm232, %v189
    %235 = vst.msk [vmem:[%s5 + $0x10] sm:$0xff] %vm232, %v192
    %236 = vst.msk [vmem:[%s5 + $0x18] sm:$0xff] %vm232, %v195
    %237 = vst.msk [vmem:[%s5 + $0x20] sm:$0xff] %vm232, %v198
    %238 = vst.msk [vmem:[%s5 + $0x28] sm:$0xff] %vm232, %v201
    %239 = vst.msk [vmem:[%s5 + $0x30] sm:$0xff] %vm232, %v204
    %240 = vst.msk [vmem:[%s5 + $0x38] sm:$0xff] %vm232, %v207
    %241 = vst.msk [vmem:[%s5 + $0x40] sm:$0xff] %vm232, %v210
    %242 = vst.msk [vmem:[%s5 + $0x48] sm:$0xff] %vm232, %v213
    %243 = vst.msk [vmem:[%s5 + $0x50] sm:$0xff] %vm232, %v216
    %244 = vst.msk [vmem:[%s5 + $0x58] sm:$0xff] %vm232, %v219
    %245 = vst.msk [vmem:[%s5 + $0x60] sm:$0xff] %vm232, %v222
    %246 = vst.msk [vmem:[%s5 + $0x68] sm:$0xff] %vm232, %v225
    %247 = vst.msk [vmem:[%s5 + $0x70] sm:$0xff] %vm232, %v228
    %248 = vst.msk [vmem:[%s5 + $0x78] sm:$0xff] %vm232, %v231
    %vm249 = vcmp.eq.s32.totalorder %v39, %v186
    %vm250 = vcmp.eq.s32.totalorder %v39, %v189
    %vm251 = vcmp.eq.s32.totalorder %v39, %v192
    %vm252 = vcmp.eq.s32.totalorder %v39, %v195
    %vm253 = vcmp.eq.s32.totalorder %v39, %v198
    %vm254 = vcmp.eq.s32.totalorder %v39, %v201
    %vm255 = vcmp.eq.s32.totalorder %v39, %v204
    %vm256 = vcmp.eq.s32.totalorder %v39, %v207
    %vm257 = vcmp.eq.s32.totalorder %v39, %v210
    %vm258 = vcmp.eq.s32.totalorder %v39, %v213
    %vm259 = vcmp.eq.s32.totalorder %v39, %v216
    %vm260 = vcmp.eq.s32.totalorder %v39, %v219
    %vm261 = vcmp.eq.s32.totalorder %v39, %v222
    %vm262 = vcmp.eq.s32.totalorder %v39, %v225
    %vm263 = vcmp.eq.s32.totalorder %v39, %v228
    %vm264 = vcmp.eq.s32.totalorder %v39, %v231
    %v265 = vsel %vm249, 1, 0
    %v266 = vsel %vm250, 1, 0
    %v267 = vsel %vm251, 1, 0
    %v268 = vsel %vm252, 1, 0
    %v269 = vsel %vm253, 1, 0
    %v270 = vsel %vm254, 1, 0
    %v271 = vsel %vm255, 1, 0
    %v272 = vsel %vm256, 1, 0
    %v273 = vsel %vm257, 1, 0
    %v274 = vsel %vm258, 1, 0
    %v275 = vsel %vm259, 1, 0
    %v276 = vsel %vm260, 1, 0
    %v277 = vsel %vm261, 1, 0
    %v278 = vsel %vm262, 1, 0
    %v279 = vsel %vm263, 1, 0
    %v280 = vsel %vm264, 1, 0
    %v281 = vcvt.s32.f32 %v265
    %v282 = vcvt.s32.f32 %v266
    %v283 = vcvt.s32.f32 %v267
    %v284 = vcvt.s32.f32 %v268
    %v285 = vcvt.s32.f32 %v269
    %v286 = vcvt.s32.f32 %v270
    %v287 = vcvt.s32.f32 %v271
    %v288 = vcvt.s32.f32 %v272
    %v289 = vcvt.s32.f32 %v273
    %v290 = vcvt.s32.f32 %v274
    %v291 = vcvt.s32.f32 %v275
    %v292 = vcvt.s32.f32 %v276
    %v293 = vcvt.s32.f32 %v277
    %v294 = vcvt.s32.f32 %v278
    %v295 = vcvt.s32.f32 %v279
    %v296 = vcvt.s32.f32 %v280
    %v297 = vadd.f32 %v281, 0.0
    %v298 = vadd.f32 %v282, 0.0
    %v299 = vadd.f32 %v283, 0.0
    %v300 = vadd.f32 %v284, 0.0
    %v301 = vadd.f32 %v285, 0.0
    %v302 = vadd.f32 %v286, 0.0
    %v303 = vadd.f32 %v287, 0.0
    %v304 = vadd.f32 %v288, 0.0
    %v305 = vadd.f32 %v289, 0.0
    %v306 = vadd.f32 %v290, 0.0
    %v307 = vadd.f32 %v291, 0.0
    %v308 = vadd.f32 %v292, 0.0
    %v309 = vadd.f32 %v293, 0.0
    %v310 = vadd.f32 %v294, 0.0
    %v311 = vadd.f32 %v295, 0.0
    %v312 = vadd.f32 %v296, 0.0
    %329 = vrot.lane.b32.xlu0 %v168, 64
    %v330 = vpop.permute.xlu0 %329
    %331 = vrot.lane.b32.xlu0 %v169, 64
    %v332 = vpop.permute.xlu0 %331
    %333 = vrot.lane.b32.xlu0 %v170, 64
    %v334 = vpop.permute.xlu0 %333
    %335 = vrot.lane.b32.xlu0 %v171, 64
    %v336 = vpop.permute.xlu0 %335
    %337 = vrot.lane.b32.xlu0 %v172, 64
    %v338 = vpop.permute.xlu0 %337
    %339 = vrot.lane.b32.xlu0 %v173, 64
    %v340 = vpop.permute.xlu0 %339
    %341 = vrot.lane.b32.xlu0 %v174, 64
    %v342 = vpop.permute.xlu0 %341
    %343 = vrot.lane.b32.xlu0 %v175, 64
    %v344 = vpop.permute.xlu0 %343
    %345 = vrot.lane.b32.xlu0 %v176, 64
    %v346 = vpop.permute.xlu0 %345
    %347 = vrot.lane.b32.xlu0 %v177, 64
    %v348 = vpop.permute.xlu0 %347
    %349 = vrot.lane.b32.xlu0 %v178, 64
    %v350 = vpop.permute.xlu0 %349
    %351 = vrot.lane.b32.xlu0 %v179, 64
    %v352 = vpop.permute.xlu0 %351
    %353 = vrot.lane.b32.xlu0 %v180, 64
    %v354 = vpop.permute.xlu0 %353
    %355 = vrot.lane.b32.xlu0 %v181, 64
    %v356 = vpop.permute.xlu0 %355
    %357 = vrot.lane.b32.xlu0 %v182, 64
    %v358 = vpop.permute.xlu0 %357
    %359 = vrot.lane.b32.xlu0 %v183, 64
    %v360 = vpop.permute.xlu0 %359
    %v377 = vsel %vm50, %v330, inf
    %378 = vmin.index.xlane.f32.xlu0 %v377
    %v379 = vpop.xlane.xlu0 %378
    %v380 = vsel %vm50, %v332, inf
    %381 = vmin.index.xlane.f32.xlu0 %v380
    %v382 = vpop.xlane.xlu0 %381
    %v383 = vsel %vm50, %v334, inf
    %384 = vmin.index.xlane.f32.xlu0 %v383
    %v385 = vpop.xlane.xlu0 %384
    %v386 = vsel %vm50, %v336, inf
    %387 = vmin.index.xlane.f32.xlu0 %v386
    %v388 = vpop.xlane.xlu0 %387
    %v389 = vsel %vm50, %v338, inf
    %390 = vmin.index.xlane.f32.xlu0 %v389
    %v391 = vpop.xlane.xlu0 %390
    %v392 = vsel %vm50, %v340, inf
    %393 = vmin.index.xlane.f32.xlu0 %v392
    %v394 = vpop.xlane.xlu0 %393
    %v395 = vsel %vm50, %v342, inf
    %396 = vmin.index.xlane.f32.xlu0 %v395
    %v397 = vpop.xlane.xlu0 %396
    %v398 = vsel %vm50, %v344, inf
    %399 = vmin.index.xlane.f32.xlu0 %v398
    %v400 = vpop.xlane.xlu0 %399
    %v401 = vsel %vm50, %v346, inf
    %402 = vmin.index.xlane.f32.xlu0 %v401
    %v403 = vpop.xlane.xlu0 %402
    %v404 = vsel %vm50, %v348, inf
    %405 = vmin.index.xlane.f32.xlu0 %v404
    %v406 = vpop.xlane.xlu0 %405
    %v407 = vsel %vm50, %v350, inf
    %408 = vmin.index.xlane.f32.xlu0 %v407
    %v409 = vpop.xlane.xlu0 %408
    %v410 = vsel %vm50, %v352, inf
    %411 = vmin.index.xlane.f32.xlu0 %v410
    %v412 = vpop.xlane.xlu0 %411
    %v413 = vsel %vm50, %v354, inf
    %414 = vmin.index.xlane.f32.xlu0 %v413
    %v415 = vpop.xlane.xlu0 %414
    %v416 = vsel %vm50, %v356, inf
    %417 = vmin.index.xlane.f32.xlu0 %v416
    %v418 = vpop.xlane.xlu0 %417
    %v419 = vsel %vm50, %v358, inf
    %420 = vmin.index.xlane.f32.xlu0 %v419
    %v421 = vpop.xlane.xlu0 %420
    %v422 = vsel %vm50, %v360, inf
    %423 = vmin.index.xlane.f32.xlu0 %v422
    %v424 = vpop.xlane.xlu0 %423
    %vm425 = vcmask 15368
    %426 = vst.msk [vmem:[%s5] sm:$0xff] %vm425, %v379
    %427 = vst.msk [vmem:[%s5 + $0x8] sm:$0xff] %vm425, %v382
    %428 = vst.msk [vmem:[%s5 + $0x10] sm:$0xff] %vm425, %v385
    %429 = vst.msk [vmem:[%s5 + $0x18] sm:$0xff] %vm425, %v388
    %430 = vst.msk [vmem:[%s5 + $0x20] sm:$0xff] %vm425, %v391
    %431 = vst.msk [vmem:[%s5 + $0x28] sm:$0xff] %vm425, %v394
    %432 = vst.msk [vmem:[%s5 + $0x30] sm:$0xff] %vm425, %v397
    %433 = vst.msk [vmem:[%s5 + $0x38] sm:$0xff] %vm425, %v400
    %434 = vst.msk [vmem:[%s5 + $0x40] sm:$0xff] %vm425, %v403
    %435 = vst.msk [vmem:[%s5 + $0x48] sm:$0xff] %vm425, %v406
    %436 = vst.msk [vmem:[%s5 + $0x50] sm:$0xff] %vm425, %v409
    %437 = vst.msk [vmem:[%s5 + $0x58] sm:$0xff] %vm425, %v412
    %438 = vst.msk [vmem:[%s5 + $0x60] sm:$0xff] %vm425, %v415
    %439 = vst.msk [vmem:[%s5 + $0x68] sm:$0xff] %vm425, %v418
    %440 = vst.msk [vmem:[%s5 + $0x70] sm:$0xff] %vm425, %v421
    %441 = vst.msk [vmem:[%s5 + $0x78] sm:$0xff] %vm425, %v424
    %v442 = vadd.s32 %v379, 64
    %v443 = vadd.s32 %v382, 64
    %v444 = vadd.s32 %v385, 64
    %v445 = vadd.s32 %v388, 64
    %v446 = vadd.s32 %v391, 64
    %v447 = vadd.s32 %v394, 64
    %v448 = vadd.s32 %v397, 64
    %v449 = vadd.s32 %v400, 64
    %v450 = vadd.s32 %v403, 64
    %v451 = vadd.s32 %v406, 64
    %v452 = vadd.s32 %v409, 64
    %v453 = vadd.s32 %v412, 64
    %v454 = vadd.s32 %v415, 64
    %v455 = vadd.s32 %v418, 64
    %v456 = vadd.s32 %v421, 64
    %v457 = vadd.s32 %v424, 64
    %vm458 = vcmp.eq.s32.totalorder %v39, %v442
    %vm459 = vcmp.eq.s32.totalorder %v39, %v443
    %vm460 = vcmp.eq.s32.totalorder %v39, %v444
    %vm461 = vcmp.eq.s32.totalorder %v39, %v445
    %vm462 = vcmp.eq.s32.totalorder %v39, %v446
    %vm463 = vcmp.eq.s32.totalorder %v39, %v447
    %vm464 = vcmp.eq.s32.totalorder %v39, %v448
    %vm465 = vcmp.eq.s32.totalorder %v39, %v449
    %vm466 = vcmp.eq.s32.totalorder %v39, %v450
    %vm467 = vcmp.eq.s32.totalorder %v39, %v451
    %vm468 = vcmp.eq.s32.totalorder %v39, %v452
    %vm469 = vcmp.eq.s32.totalorder %v39, %v453
    %vm470 = vcmp.eq.s32.totalorder %v39, %v454
    %vm471 = vcmp.eq.s32.totalorder %v39, %v455
    %vm472 = vcmp.eq.s32.totalorder %v39, %v456
    %vm473 = vcmp.eq.s32.totalorder %v39, %v457
    %v474 = vsel %vm458, 1, 0
    %v475 = vsel %vm459, 1, 0
    %v476 = vsel %vm460, 1, 0
    %v477 = vsel %vm461, 1, 0
    %v478 = vsel %vm462, 1, 0
    %v479 = vsel %vm463, 1, 0
    %v480 = vsel %vm464, 1, 0
    %v481 = vsel %vm465, 1, 0
    %v482 = vsel %vm466, 1, 0
    %v483 = vsel %vm467, 1, 0
    %v484 = vsel %vm468, 1, 0
    %v485 = vsel %vm469, 1, 0
    %v486 = vsel %vm470, 1, 0
    %v487 = vsel %vm471, 1, 0
    %v488 = vsel %vm472, 1, 0
    %v489 = vsel %vm473, 1, 0
    %v490 = vcvt.s32.f32 %v474
    %v491 = vcvt.s32.f32 %v475
    %v492 = vcvt.s32.f32 %v476
    %v493 = vcvt.s32.f32 %v477
    %v494 = vcvt.s32.f32 %v478
    %v495 = vcvt.s32.f32 %v479
    %v496 = vcvt.s32.f32 %v480
    %v497 = vcvt.s32.f32 %v481
    %v498 = vcvt.s32.f32 %v482
    %v499 = vcvt.s32.f32 %v483
    %v500 = vcvt.s32.f32 %v484
    %v501 = vcvt.s32.f32 %v485
    %v502 = vcvt.s32.f32 %v486
    %v503 = vcvt.s32.f32 %v487
    %v504 = vcvt.s32.f32 %v488
    %v505 = vcvt.s32.f32 %v489
    %v506 = vadd.f32 %v297, %v490
    %v507 = vadd.f32 %v298, %v491
    %v508 = vadd.f32 %v299, %v492
    %v509 = vadd.f32 %v300, %v493
    %v510 = vadd.f32 %v301, %v494
    %v511 = vadd.f32 %v302, %v495
    %v512 = vadd.f32 %v303, %v496
    %v513 = vadd.f32 %v304, %v497
    %v514 = vadd.f32 %v305, %v498
    %v515 = vadd.f32 %v306, %v499
    %v516 = vadd.f32 %v307, %v500
    %v517 = vadd.f32 %v308, %v501
    %v518 = vadd.f32 %v309, %v502
    %v519 = vadd.f32 %v310, %v503
    %v520 = vadd.f32 %v311, %v504
    %v521 = vadd.f32 %v312, %v505
    %v522 = vld [vmem:[%s2] sm:$0xff]
    %v523 = vld [vmem:[%s2 + $0x8] sm:$0xff]
    %v524 = vld [vmem:[%s2 + $0x10] sm:$0xff]
    %v525 = vld [vmem:[%s2 + $0x18] sm:$0xff]
    %v526 = vld [vmem:[%s2 + $0x20] sm:$0xff]
    %v527 = vld [vmem:[%s2 + $0x28] sm:$0xff]
    %v528 = vld [vmem:[%s2 + $0x30] sm:$0xff]
    %v529 = vld [vmem:[%s2 + $0x38] sm:$0xff]
    %v530 = vld [vmem:[%s2 + $0x40] sm:$0xff]
    %v531 = vld [vmem:[%s2 + $0x48] sm:$0xff]
    %v532 = vld [vmem:[%s2 + $0x50] sm:$0xff]
    %v533 = vld [vmem:[%s2 + $0x58] sm:$0xff]
    %v534 = vld [vmem:[%s2 + $0x60] sm:$0xff]
    %v535 = vld [vmem:[%s2 + $0x68] sm:$0xff]
    %v536 = vld [vmem:[%s2 + $0x70] sm:$0xff]
    %v537 = vld [vmem:[%s2 + $0x78] sm:$0xff]
    %538 = vmatpush.msra.mxu0 %v537
    %539 = vmatpush.msra.mxu0 %v536
    %540 = vmatpush.msra.mxu0 %v535
    %541 = vmatpush.msra.mxu0 %v534
    %542 = vmatpush.msra.mxu0 %v533
    %543 = vmatpush.msra.mxu0 %v532
    %544 = vmatpush.msra.mxu0 %v531
    %545 = vmatpush.msra.mxu0 %v530
    %546 = vmatpush.msra.mxu0 %v529
    %547 = vmatpush.msra.mxu0 %v528
    %548 = vmatpush.msra.mxu0 %v527
    %549 = vmatpush.msra.mxu0 %v526
    %550 = vmatpush.msra.mxu0 %v525
    %551 = vmatpush.msra.mxu0 %v524
    %552 = vmatpush.msra.mxu0 %v523
    %553 = vmatpush.msra.mxu0 %v522
    %554 = vmatmul.f32.gmra.mxu0 %v506
    %v555 = vpop.f32.mrf.mxu0
    %v556 = vadd.f32 0.0, %v555
    %557 = vmatmul.f32.gmra.mxu0 %v507
    %v558 = vpop.f32.mrf.mxu0
    %v559 = vadd.f32 0.0, %v558
    %560 = vmatmul.f32.gmra.mxu0 %v508
    %v561 = vpop.f32.mrf.mxu0
    %v562 = vadd.f32 0.0, %v561
    %563 = vmatmul.f32.gmra.mxu0 %v509
    %v564 = vpop.f32.mrf.mxu0
    %v565 = vadd.f32 0.0, %v564
    %566 = vmatmul.f32.gmra.mxu0 %v510
    %v567 = vpop.f32.mrf.mxu0
    %v568 = vadd.f32 0.0, %v567
    %569 = vmatmul.f32.gmra.mxu0 %v511
    %v570 = vpop.f32.mrf.mxu0
    %v571 = vadd.f32 0.0, %v570
    %572 = vmatmul.f32.gmra.mxu0 %v512
    %v573 = vpop.f32.mrf.mxu0
    %v574 = vadd.f32 0.0, %v573
    %575 = vmatmul.f32.gmra.mxu0 %v513
    %v576 = vpop.f32.mrf.mxu0
    %v577 = vadd.f32 0.0, %v576
    %578 = vmatmul.f32.gmra.mxu0 %v514
    %v579 = vpop.f32.mrf.mxu0
    %v580 = vadd.f32 0.0, %v579
    %581 = vmatmul.f32.gmra.mxu0 %v515
    %v582 = vpop.f32.mrf.mxu0
    %v583 = vadd.f32 0.0, %v582
    %584 = vmatmul.f32.gmra.mxu0 %v516
    %v585 = vpop.f32.mrf.mxu0
    %v586 = vadd.f32 0.0, %v585
    %587 = vmatmul.f32.gmra.mxu0 %v517
    %v588 = vpop.f32.mrf.mxu0
    %v589 = vadd.f32 0.0, %v588
    %590 = vmatmul.f32.gmra.mxu0 %v518
    %v591 = vpop.f32.mrf.mxu0
    %v592 = vadd.f32 0.0, %v591
    %593 = vmatmul.f32.gmra.mxu0 %v519
    %v594 = vpop.f32.mrf.mxu0
    %v595 = vadd.f32 0.0, %v594
    %596 = vmatmul.f32.gmra.mxu0 %v520
    %v597 = vpop.f32.mrf.mxu0
    %v598 = vadd.f32 0.0, %v597
    %599 = vmatmul.f32.gmra.mxu0 %v521
    %v600 = vpop.f32.mrf.mxu0
    %v601 = vadd.f32 0.0, %v600
    %602 = vdwg.mxu0
    %v603 = vsub.f32 %v22, %v556
    %v604 = vsub.f32 %v23, %v559
    %v605 = vsub.f32 %v24, %v562
    %v606 = vsub.f32 %v25, %v565
    %v607 = vsub.f32 %v26, %v568
    %v608 = vsub.f32 %v27, %v571
    %v609 = vsub.f32 %v28, %v574
    %v610 = vsub.f32 %v29, %v577
    %v611 = vsub.f32 %v30, %v580
    %v612 = vsub.f32 %v31, %v583
    %v613 = vsub.f32 %v32, %v586
    %v614 = vsub.f32 %v33, %v589
    %v615 = vsub.f32 %v34, %v592
    %v616 = vsub.f32 %v35, %v595
    %v617 = vsub.f32 %v36, %v598
    %v618 = vsub.f32 %v37, %v601
    %v619 = vmul.f32 %v603, %v603
    %v620 = vmul.f32 %v604, %v604
    %v621 = vmul.f32 %v605, %v605
    %v622 = vmul.f32 %v606, %v606
    %v623 = vmul.f32 %v607, %v607
    %v624 = vmul.f32 %v608, %v608
    %v625 = vmul.f32 %v609, %v609
    %v626 = vmul.f32 %v610, %v610
    %v627 = vmul.f32 %v611, %v611
    %v628 = vmul.f32 %v612, %v612
    %v629 = vmul.f32 %v613, %v613
    %v630 = vmul.f32 %v614, %v614
    %v631 = vmul.f32 %v615, %v615
    %v632 = vmul.f32 %v616, %v616
    %v633 = vmul.f32 %v617, %v617
    %v634 = vmul.f32 %v618, %v618
    %vm635 = vcmask 261120
    %v636 = vsel %vm635, %v619, 0.0
    %v637 = vsel %vm635, %v620, 0.0
    %v638 = vadd.f32 %v636, %v637
    %v639 = vsel %vm635, %v621, 0.0
    %v640 = vadd.f32 %v638, %v639
    %v641 = vsel %vm635, %v622, 0.0
    %v642 = vadd.f32 %v640, %v641
    %v643 = vsel %vm635, %v623, 0.0
    %v644 = vadd.f32 %v642, %v643
    %v645 = vsel %vm635, %v624, 0.0
    %v646 = vadd.f32 %v644, %v645
    %v647 = vsel %vm635, %v625, 0.0
    %v648 = vadd.f32 %v646, %v647
    %v649 = vsel %vm635, %v626, 0.0
    %v650 = vadd.f32 %v648, %v649
    %v651 = vsel %vm635, %v627, 0.0
    %v652 = vadd.f32 %v650, %v651
    %v653 = vsel %vm635, %v628, 0.0
    %v654 = vadd.f32 %v652, %v653
    %v655 = vsel %vm635, %v629, 0.0
    %v656 = vadd.f32 %v654, %v655
    %v657 = vsel %vm635, %v630, 0.0
    %v658 = vadd.f32 %v656, %v657
    %v659 = vsel %vm635, %v631, 0.0
    %v660 = vadd.f32 %v658, %v659
    %v661 = vsel %vm635, %v632, 0.0
    %v662 = vadd.f32 %v660, %v661
    %v663 = vsel %vm635, %v633, 0.0
    %v664 = vadd.f32 %v662, %v663
    %v665 = vsel %vm635, %v634, 0.0
    %v666 = vadd.f32 %v664, %v665
    %667 = vadd.xlane.f32.xlu0 %v666
    %v668 = vpop.xlane.xlu0 %667
    %v669 = vrot.slane %v668, 4
    %v670 = vadd.f32 %v668, %v669
    %v671 = vrot.slane %v670, 2
    %v672 = vadd.f32 %v670, %v671
    %v673 = vrot.slane %v672, 1
    %v674 = vadd.f32 %v672, %v673
    %s675 = vtos %v674
    %vm676 = vcmp.eq.s32.totalorder %v41, 0
    %vm677 = vcmp.eq.s32.totalorder %v39, 0
    %vm678 = vmand %vm676, %vm677
    %v679 = vsel %vm678, 1, 0
    %v680 = vcvt.s32.f32 %v679
    %v681 = vstv %s675
    %v682 = vmul.f32 %v680, %v681
    %v683 = vadd.f32 %v682, 0.0
    %700 = vrot.lane.b32.xlu0 %v619, 96
    %v701 = vpop.permute.xlu0 %700
    %702 = vrot.lane.b32.xlu0 %v620, 96
    %v703 = vpop.permute.xlu0 %702
    %704 = vrot.lane.b32.xlu0 %v621, 96
    %v705 = vpop.permute.xlu0 %704
    %706 = vrot.lane.b32.xlu0 %v622, 96
    %v707 = vpop.permute.xlu0 %706
    %708 = vrot.lane.b32.xlu0 %v623, 96
    %v709 = vpop.permute.xlu0 %708
    %710 = vrot.lane.b32.xlu0 %v624, 96
    %v711 = vpop.permute.xlu0 %710
    %712 = vrot.lane.b32.xlu0 %v625, 96
    %v713 = vpop.permute.xlu0 %712
    %714 = vrot.lane.b32.xlu0 %v626, 96
    %v715 = vpop.permute.xlu0 %714
    %716 = vrot.lane.b32.xlu0 %v627, 96
    %v717 = vpop.permute.xlu0 %716
    %718 = vrot.lane.b32.xlu0 %v628, 96
    %v719 = vpop.permute.xlu0 %718
    %720 = vrot.lane.b32.xlu0 %v629, 96
    %v721 = vpop.permute.xlu0 %720
    %722 = vrot.lane.b32.xlu0 %v630, 96
    %v723 = vpop.permute.xlu0 %722
    %724 = vrot.lane.b32.xlu0 %v631, 96
    %v725 = vpop.permute.xlu0 %724
    %726 = vrot.lane.b32.xlu0 %v632, 96
    %v727 = vpop.permute.xlu0 %726
    %728 = vrot.lane.b32.xlu0 %v633, 96
    %v729 = vpop.permute.xlu0 %728
    %730 = vrot.lane.b32.xlu0 %v634, 96
    %v731 = vpop.permute.xlu0 %730
    %v748 = vsel %vm635, %v701, 0.0
    %v749 = vsel %vm635, %v703, 0.0
    %v750 = vadd.f32 %v748, %v749
    %v751 = vsel %vm635, %v705, 0.0
    %v752 = vadd.f32 %v750, %v751
    %v753 = vsel %vm635, %v707, 0.0
    %v754 = vadd.f32 %v752, %v753
    %v755 = vsel %vm635, %v709, 0.0
    %v756 = vadd.f32 %v754, %v755
    %v757 = vsel %vm635, %v711, 0.0
    %v758 = vadd.f32 %v756, %v757
    %v759 = vsel %vm635, %v713, 0.0
    %v760 = vadd.f32 %v758, %v759
    %v761 = vsel %vm635, %v715, 0.0
    %v762 = vadd.f32 %v760, %v761
    %v763 = vsel %vm635, %v717, 0.0
    %v764 = vadd.f32 %v762, %v763
    %v765 = vsel %vm635, %v719, 0.0
    %v766 = vadd.f32 %v764, %v765
    %v767 = vsel %vm635, %v721, 0.0
    %v768 = vadd.f32 %v766, %v767
    %v769 = vsel %vm635, %v723, 0.0
    %v770 = vadd.f32 %v768, %v769
    %v771 = vsel %vm635, %v725, 0.0
    %v772 = vadd.f32 %v770, %v771
    %v773 = vsel %vm635, %v727, 0.0
    %v774 = vadd.f32 %v772, %v773
    %v775 = vsel %vm635, %v729, 0.0
    %v776 = vadd.f32 %v774, %v775
    %v777 = vsel %vm635, %v731, 0.0
    %v778 = vadd.f32 %v776, %v777
    %779 = vadd.xlane.f32.xlu0 %v778
    %v780 = vpop.xlane.xlu0 %779
    %v781 = vrot.slane %v780, 4
    %v782 = vadd.f32 %v780, %v781
    %v783 = vrot.slane %v782, 2
    %v784 = vadd.f32 %v782, %v783
    %v785 = vrot.slane %v784, 1
    %v786 = vadd.f32 %v784, %v785
    %s787 = vtos %v786
    %vm788 = vcmp.eq.s32.totalorder %v39, 1
    %vm789 = vmand %vm676, %vm788
    %v790 = vsel %vm789, 1, 0
    %v791 = vcvt.s32.f32 %v790
    %v792 = vstv %s787
    %v793 = vmul.f32 %v791, %v792
    %v794 = vadd.f32 %v683, %v793
    %795 = vst.msk [vmem:[%s6] sm:$0xff] %vm50, %v603
    %796 = vst.msk [vmem:[%s6 + $0x8] sm:$0xff] %vm50, %v604
    %797 = vst.msk [vmem:[%s6 + $0x10] sm:$0xff] %vm50, %v605
    %798 = vst.msk [vmem:[%s6 + $0x18] sm:$0xff] %vm50, %v606
    %799 = vst.msk [vmem:[%s6 + $0x20] sm:$0xff] %vm50, %v607
    %800 = vst.msk [vmem:[%s6 + $0x28] sm:$0xff] %vm50, %v608
    %801 = vst.msk [vmem:[%s6 + $0x30] sm:$0xff] %vm50, %v609
    %802 = vst.msk [vmem:[%s6 + $0x38] sm:$0xff] %vm50, %v610
    %803 = vst.msk [vmem:[%s6 + $0x40] sm:$0xff] %vm50, %v611
    %804 = vst.msk [vmem:[%s6 + $0x48] sm:$0xff] %vm50, %v612
    %805 = vst.msk [vmem:[%s6 + $0x50] sm:$0xff] %vm50, %v613
    %806 = vst.msk [vmem:[%s6 + $0x58] sm:$0xff] %vm50, %v614
    %807 = vst.msk [vmem:[%s6 + $0x60] sm:$0xff] %vm50, %v615
    %808 = vst.msk [vmem:[%s6 + $0x68] sm:$0xff] %vm50, %v616
    %809 = vst.msk [vmem:[%s6 + $0x70] sm:$0xff] %vm50, %v617
    %810 = vst.msk [vmem:[%s6 + $0x78] sm:$0xff] %vm50, %v618
    %s811 = scalar_lea.vmem %s1, 64
    %v812 = vld [vmem:[%s811] sm:$0xff]
    %v813 = vld [vmem:[%s811 + $0x8] sm:$0xff]
    %v814 = vld [vmem:[%s811 + $0x10] sm:$0xff]
    %v815 = vld [vmem:[%s811 + $0x18] sm:$0xff]
    %v816 = vld [vmem:[%s811 + $0x20] sm:$0xff]
    %v817 = vld [vmem:[%s811 + $0x28] sm:$0xff]
    %v818 = vld [vmem:[%s811 + $0x30] sm:$0xff]
    %v819 = vld [vmem:[%s811 + $0x38] sm:$0xff]
    %v821 = vsel %vm50, %v603, 0
    %v824 = vsel %vm50, %v604, 0
    %v827 = vsel %vm50, %v605, 0
    %v830 = vsel %vm50, %v606, 0
    %v833 = vsel %vm50, %v607, 0
    %v836 = vsel %vm50, %v608, 0
    %v839 = vsel %vm50, %v609, 0
    %v842 = vsel %vm50, %v610, 0
    %v845 = vsel %vm50, %v611, 0
    %v848 = vsel %vm50, %v612, 0
    %v851 = vsel %vm50, %v613, 0
    %v854 = vsel %vm50, %v614, 0
    %v857 = vsel %vm50, %v615, 0
    %v860 = vsel %vm50, %v616, 0
    %v863 = vsel %vm50, %v617, 0
    %v866 = vsel %vm50, %v618, 0
    %868 = vmatpush.msra.mxu0 0.0
    %869 = vmatpush.msra.mxu0 0.0
    %870 = vmatpush.msra.mxu0 0.0
    %871 = vmatpush.msra.mxu0 0.0
    %872 = vmatpush.msra.mxu0 0.0
    %873 = vmatpush.msra.mxu0 0.0
    %874 = vmatpush.msra.mxu0 0.0
    %875 = vmatpush.msra.mxu0 0.0
    %876 = vmatpush.msra.mxu0 %v819
    %877 = vmatpush.msra.mxu0 %v818
    %878 = vmatpush.msra.mxu0 %v817
    %879 = vmatpush.msra.mxu0 %v816
    %880 = vmatpush.msra.mxu0 %v815
    %881 = vmatpush.msra.mxu0 %v814
    %882 = vmatpush.msra.mxu0 %v813
    %883 = vmatpush.msra.mxu0 %v812
    %884 = vmatmul.f32.gmra.mxu0 %v821
    %v885 = vpop.f32.mrf.mxu0
    %v886 = vadd.f32 0.0, %v885
    %887 = vmatmul.f32.gmra.mxu0 %v824
    %v888 = vpop.f32.mrf.mxu0
    %v889 = vadd.f32 0.0, %v888
    %890 = vmatmul.f32.gmra.mxu0 %v827
    %v891 = vpop.f32.mrf.mxu0
    %v892 = vadd.f32 0.0, %v891
    %893 = vmatmul.f32.gmra.mxu0 %v830
    %v894 = vpop.f32.mrf.mxu0
    %v895 = vadd.f32 0.0, %v894
    %896 = vmatmul.f32.gmra.mxu0 %v833
    %v897 = vpop.f32.mrf.mxu0
    %v898 = vadd.f32 0.0, %v897
    %899 = vmatmul.f32.gmra.mxu0 %v836
    %v900 = vpop.f32.mrf.mxu0
    %v901 = vadd.f32 0.0, %v900
    %902 = vmatmul.f32.gmra.mxu0 %v839
    %v903 = vpop.f32.mrf.mxu0
    %v904 = vadd.f32 0.0, %v903
    %905 = vmatmul.f32.gmra.mxu0 %v842
    %v906 = vpop.f32.mrf.mxu0
    %v907 = vadd.f32 0.0, %v906
    %908 = vmatmul.f32.gmra.mxu0 %v845
    %v909 = vpop.f32.mrf.mxu0
    %v910 = vadd.f32 0.0, %v909
    %911 = vmatmul.f32.gmra.mxu0 %v848
    %v912 = vpop.f32.mrf.mxu0
    %v913 = vadd.f32 0.0, %v912
    %914 = vmatmul.f32.gmra.mxu0 %v851
    %v915 = vpop.f32.mrf.mxu0
    %v916 = vadd.f32 0.0, %v915
    %917 = vmatmul.f32.gmra.mxu0 %v854
    %v918 = vpop.f32.mrf.mxu0
    %v919 = vadd.f32 0.0, %v918
    %920 = vmatmul.f32.gmra.mxu0 %v857
    %v921 = vpop.f32.mrf.mxu0
    %v922 = vadd.f32 0.0, %v921
    %923 = vmatmul.f32.gmra.mxu0 %v860
    %v924 = vpop.f32.mrf.mxu0
    %v925 = vadd.f32 0.0, %v924
    %926 = vmatmul.f32.gmra.mxu0 %v863
    %v927 = vpop.f32.mrf.mxu0
    %v928 = vadd.f32 0.0, %v927
    %929 = vmatmul.f32.gmra.mxu0 %v866
    %v930 = vpop.f32.mrf.mxu0
    %v931 = vadd.f32 0.0, %v930
    %932 = vdwg.mxu0
    %s933 = scalar_lea.vmem %s3, 1
    %v934 = vld [vmem:[%s933] sm:$0x1]
    %v936 = vperm.slane %v934, 0
    %v938 = vsub.f32 %v936, %v886
    %v939 = vsub.f32 %v936, %v889
    %v940 = vsub.f32 %v936, %v892
    %v941 = vsub.f32 %v936, %v895
    %v942 = vsub.f32 %v936, %v898
    %v943 = vsub.f32 %v936, %v901
    %v944 = vsub.f32 %v936, %v904
    %v945 = vsub.f32 %v936, %v907
    %v946 = vsub.f32 %v936, %v910
    %v947 = vsub.f32 %v936, %v913
    %v948 = vsub.f32 %v936, %v916
    %v949 = vsub.f32 %v936, %v919
    %v950 = vsub.f32 %v936, %v922
    %v951 = vsub.f32 %v936, %v925
    %v952 = vsub.f32 %v936, %v928
    %v953 = vsub.f32 %v936, %v931
    %v954 = vsel %vm50, %v938, inf
    %955 = vmin.index.xlane.f32.xlu0 %v954
    %v956 = vpop.xlane.xlu0 %955
    %v957 = vsel %vm50, %v939, inf
    %958 = vmin.index.xlane.f32.xlu0 %v957
    %v959 = vpop.xlane.xlu0 %958
    %v960 = vsel %vm50, %v940, inf
    %961 = vmin.index.xlane.f32.xlu0 %v960
    %v962 = vpop.xlane.xlu0 %961
    %v963 = vsel %vm50, %v941, inf
    %964 = vmin.index.xlane.f32.xlu0 %v963
    %v965 = vpop.xlane.xlu0 %964
    %v966 = vsel %vm50, %v942, inf
    %967 = vmin.index.xlane.f32.xlu0 %v966
    %v968 = vpop.xlane.xlu0 %967
    %v969 = vsel %vm50, %v943, inf
    %970 = vmin.index.xlane.f32.xlu0 %v969
    %v971 = vpop.xlane.xlu0 %970
    %v972 = vsel %vm50, %v944, inf
    %973 = vmin.index.xlane.f32.xlu0 %v972
    %v974 = vpop.xlane.xlu0 %973
    %v975 = vsel %vm50, %v945, inf
    %976 = vmin.index.xlane.f32.xlu0 %v975
    %v977 = vpop.xlane.xlu0 %976
    %v978 = vsel %vm50, %v946, inf
    %979 = vmin.index.xlane.f32.xlu0 %v978
    %v980 = vpop.xlane.xlu0 %979
    %v981 = vsel %vm50, %v947, inf
    %982 = vmin.index.xlane.f32.xlu0 %v981
    %v983 = vpop.xlane.xlu0 %982
    %v984 = vsel %vm50, %v948, inf
    %985 = vmin.index.xlane.f32.xlu0 %v984
    %v986 = vpop.xlane.xlu0 %985
    %v987 = vsel %vm50, %v949, inf
    %988 = vmin.index.xlane.f32.xlu0 %v987
    %v989 = vpop.xlane.xlu0 %988
    %v990 = vsel %vm50, %v950, inf
    %991 = vmin.index.xlane.f32.xlu0 %v990
    %v992 = vpop.xlane.xlu0 %991
    %v993 = vsel %vm50, %v951, inf
    %994 = vmin.index.xlane.f32.xlu0 %v993
    %v995 = vpop.xlane.xlu0 %994
    %v996 = vsel %vm50, %v952, inf
    %997 = vmin.index.xlane.f32.xlu0 %v996
    %v998 = vpop.xlane.xlu0 %997
    %v999 = vsel %vm50, %v953, inf
    %1000 = vmin.index.xlane.f32.xlu0 %v999
    %v1001 = vpop.xlane.xlu0 %1000
    %vm1002 = vcmask 23568
    %1003 = vst.msk [vmem:[%s5] sm:$0xff] %vm1002, %v956
    %1004 = vst.msk [vmem:[%s5 + $0x8] sm:$0xff] %vm1002, %v959
    %1005 = vst.msk [vmem:[%s5 + $0x10] sm:$0xff] %vm1002, %v962
    %1006 = vst.msk [vmem:[%s5 + $0x18] sm:$0xff] %vm1002, %v965
    %1007 = vst.msk [vmem:[%s5 + $0x20] sm:$0xff] %vm1002, %v968
    %1008 = vst.msk [vmem:[%s5 + $0x28] sm:$0xff] %vm1002, %v971
    %1009 = vst.msk [vmem:[%s5 + $0x30] sm:$0xff] %vm1002, %v974
    %1010 = vst.msk [vmem:[%s5 + $0x38] sm:$0xff] %vm1002, %v977
    %1011 = vst.msk [vmem:[%s5 + $0x40] sm:$0xff] %vm1002, %v980
    %1012 = vst.msk [vmem:[%s5 + $0x48] sm:$0xff] %vm1002, %v983
    %1013 = vst.msk [vmem:[%s5 + $0x50] sm:$0xff] %vm1002, %v986
    %1014 = vst.msk [vmem:[%s5 + $0x58] sm:$0xff] %vm1002, %v989
    %1015 = vst.msk [vmem:[%s5 + $0x60] sm:$0xff] %vm1002, %v992
    %1016 = vst.msk [vmem:[%s5 + $0x68] sm:$0xff] %vm1002, %v995
    %1017 = vst.msk [vmem:[%s5 + $0x70] sm:$0xff] %vm1002, %v998
    %1018 = vst.msk [vmem:[%s5 + $0x78] sm:$0xff] %vm1002, %v1001
    %vm1019 = vcmp.eq.s32.totalorder %v39, %v956
    %vm1020 = vcmp.eq.s32.totalorder %v39, %v959
    %vm1021 = vcmp.eq.s32.totalorder %v39, %v962
    %vm1022 = vcmp.eq.s32.totalorder %v39, %v965
    %vm1023 = vcmp.eq.s32.totalorder %v39, %v968
    %vm1024 = vcmp.eq.s32.totalorder %v39, %v971
    %vm1025 = vcmp.eq.s32.totalorder %v39, %v974
    %vm1026 = vcmp.eq.s32.totalorder %v39, %v977
    %vm1027 = vcmp.eq.s32.totalorder %v39, %v980
    %vm1028 = vcmp.eq.s32.totalorder %v39, %v983
    %vm1029 = vcmp.eq.s32.totalorder %v39, %v986
    %vm1030 = vcmp.eq.s32.totalorder %v39, %v989
    %vm1031 = vcmp.eq.s32.totalorder %v39, %v992
    %vm1032 = vcmp.eq.s32.totalorder %v39, %v995
    %vm1033 = vcmp.eq.s32.totalorder %v39, %v998
    %vm1034 = vcmp.eq.s32.totalorder %v39, %v1001
    %v1035 = vsel %vm1019, 1, 0
    %v1036 = vsel %vm1020, 1, 0
    %v1037 = vsel %vm1021, 1, 0
    %v1038 = vsel %vm1022, 1, 0
    %v1039 = vsel %vm1023, 1, 0
    %v1040 = vsel %vm1024, 1, 0
    %v1041 = vsel %vm1025, 1, 0
    %v1042 = vsel %vm1026, 1, 0
    %v1043 = vsel %vm1027, 1, 0
    %v1044 = vsel %vm1028, 1, 0
    %v1045 = vsel %vm1029, 1, 0
    %v1046 = vsel %vm1030, 1, 0
    %v1047 = vsel %vm1031, 1, 0
    %v1048 = vsel %vm1032, 1, 0
    %v1049 = vsel %vm1033, 1, 0
    %v1050 = vsel %vm1034, 1, 0
    %v1051 = vcvt.s32.f32 %v1035
    %v1052 = vcvt.s32.f32 %v1036
    %v1053 = vcvt.s32.f32 %v1037
    %v1054 = vcvt.s32.f32 %v1038
    %v1055 = vcvt.s32.f32 %v1039
    %v1056 = vcvt.s32.f32 %v1040
    %v1057 = vcvt.s32.f32 %v1041
    %v1058 = vcvt.s32.f32 %v1042
    %v1059 = vcvt.s32.f32 %v1043
    %v1060 = vcvt.s32.f32 %v1044
    %v1061 = vcvt.s32.f32 %v1045
    %v1062 = vcvt.s32.f32 %v1046
    %v1063 = vcvt.s32.f32 %v1047
    %v1064 = vcvt.s32.f32 %v1048
    %v1065 = vcvt.s32.f32 %v1049
    %v1066 = vcvt.s32.f32 %v1050
    %v1067 = vadd.f32 %v1051, 0.0
    %v1068 = vadd.f32 %v1052, 0.0
    %v1069 = vadd.f32 %v1053, 0.0
    %v1070 = vadd.f32 %v1054, 0.0
    %v1071 = vadd.f32 %v1055, 0.0
    %v1072 = vadd.f32 %v1056, 0.0
    %v1073 = vadd.f32 %v1057, 0.0
    %v1074 = vadd.f32 %v1058, 0.0
    %v1075 = vadd.f32 %v1059, 0.0
    %v1076 = vadd.f32 %v1060, 0.0
    %v1077 = vadd.f32 %v1061, 0.0
    %v1078 = vadd.f32 %v1062, 0.0
    %v1079 = vadd.f32 %v1063, 0.0
    %v1080 = vadd.f32 %v1064, 0.0
    %v1081 = vadd.f32 %v1065, 0.0
    %v1082 = vadd.f32 %v1066, 0.0
    %1099 = vrot.lane.b32.xlu0 %v938, 64
    %v1100 = vpop.permute.xlu0 %1099
    %1101 = vrot.lane.b32.xlu0 %v939, 64
    %v1102 = vpop.permute.xlu0 %1101
    %1103 = vrot.lane.b32.xlu0 %v940, 64
    %v1104 = vpop.permute.xlu0 %1103
    %1105 = vrot.lane.b32.xlu0 %v941, 64
    %v1106 = vpop.permute.xlu0 %1105
    %1107 = vrot.lane.b32.xlu0 %v942, 64
    %v1108 = vpop.permute.xlu0 %1107
    %1109 = vrot.lane.b32.xlu0 %v943, 64
    %v1110 = vpop.permute.xlu0 %1109
    %1111 = vrot.lane.b32.xlu0 %v944, 64
    %v1112 = vpop.permute.xlu0 %1111
    %1113 = vrot.lane.b32.xlu0 %v945, 64
    %v1114 = vpop.permute.xlu0 %1113
    %1115 = vrot.lane.b32.xlu0 %v946, 64
    %v1116 = vpop.permute.xlu0 %1115
    %1117 = vrot.lane.b32.xlu0 %v947, 64
    %v1118 = vpop.permute.xlu0 %1117
    %1119 = vrot.lane.b32.xlu0 %v948, 64
    %v1120 = vpop.permute.xlu0 %1119
    %1121 = vrot.lane.b32.xlu0 %v949, 64
    %v1122 = vpop.permute.xlu0 %1121
    %1123 = vrot.lane.b32.xlu0 %v950, 64
    %v1124 = vpop.permute.xlu0 %1123
    %1125 = vrot.lane.b32.xlu0 %v951, 64
    %v1126 = vpop.permute.xlu0 %1125
    %1127 = vrot.lane.b32.xlu0 %v952, 64
    %v1128 = vpop.permute.xlu0 %1127
    %1129 = vrot.lane.b32.xlu0 %v953, 64
    %v1130 = vpop.permute.xlu0 %1129
    %v1147 = vsel %vm50, %v1100, inf
    %1148 = vmin.index.xlane.f32.xlu0 %v1147
    %v1149 = vpop.xlane.xlu0 %1148
    %v1150 = vsel %vm50, %v1102, inf
    %1151 = vmin.index.xlane.f32.xlu0 %v1150
    %v1152 = vpop.xlane.xlu0 %1151
    %v1153 = vsel %vm50, %v1104, inf
    %1154 = vmin.index.xlane.f32.xlu0 %v1153
    %v1155 = vpop.xlane.xlu0 %1154
    %v1156 = vsel %vm50, %v1106, inf
    %1157 = vmin.index.xlane.f32.xlu0 %v1156
    %v1158 = vpop.xlane.xlu0 %1157
    %v1159 = vsel %vm50, %v1108, inf
    %1160 = vmin.index.xlane.f32.xlu0 %v1159
    %v1161 = vpop.xlane.xlu0 %1160
    %v1162 = vsel %vm50, %v1110, inf
    %1163 = vmin.index.xlane.f32.xlu0 %v1162
    %v1164 = vpop.xlane.xlu0 %1163
    %v1165 = vsel %vm50, %v1112, inf
    %1166 = vmin.index.xlane.f32.xlu0 %v1165
    %v1167 = vpop.xlane.xlu0 %1166
    %v1168 = vsel %vm50, %v1114, inf
    %1169 = vmin.index.xlane.f32.xlu0 %v1168
    %v1170 = vpop.xlane.xlu0 %1169
    %v1171 = vsel %vm50, %v1116, inf
    %1172 = vmin.index.xlane.f32.xlu0 %v1171
    %v1173 = vpop.xlane.xlu0 %1172
    %v1174 = vsel %vm50, %v1118, inf
    %1175 = vmin.index.xlane.f32.xlu0 %v1174
    %v1176 = vpop.xlane.xlu0 %1175
    %v1177 = vsel %vm50, %v1120, inf
    %1178 = vmin.index.xlane.f32.xlu0 %v1177
    %v1179 = vpop.xlane.xlu0 %1178
    %v1180 = vsel %vm50, %v1122, inf
    %1181 = vmin.index.xlane.f32.xlu0 %v1180
    %v1182 = vpop.xlane.xlu0 %1181
    %v1183 = vsel %vm50, %v1124, inf
    %1184 = vmin.index.xlane.f32.xlu0 %v1183
    %v1185 = vpop.xlane.xlu0 %1184
    %v1186 = vsel %vm50, %v1126, inf
    %1187 = vmin.index.xlane.f32.xlu0 %v1186
    %v1188 = vpop.xlane.xlu0 %1187
    %v1189 = vsel %vm50, %v1128, inf
    %1190 = vmin.index.xlane.f32.xlu0 %v1189
    %v1191 = vpop.xlane.xlu0 %1190
    %v1192 = vsel %vm50, %v1130, inf
    %1193 = vmin.index.xlane.f32.xlu0 %v1192
    %v1194 = vpop.xlane.xlu0 %1193
    %vm1195 = vcmask 31768
    %1196 = vst.msk [vmem:[%s5] sm:$0xff] %vm1195, %v1149
    %1197 = vst.msk [vmem:[%s5 + $0x8] sm:$0xff] %vm1195, %v1152
    %1198 = vst.msk [vmem:[%s5 + $0x10] sm:$0xff] %vm1195, %v1155
    %1199 = vst.msk [vmem:[%s5 + $0x18] sm:$0xff] %vm1195, %v1158
    %1200 = vst.msk [vmem:[%s5 + $0x20] sm:$0xff] %vm1195, %v1161
    %1201 = vst.msk [vmem:[%s5 + $0x28] sm:$0xff] %vm1195, %v1164
    %1202 = vst.msk [vmem:[%s5 + $0x30] sm:$0xff] %vm1195, %v1167
    %1203 = vst.msk [vmem:[%s5 + $0x38] sm:$0xff] %vm1195, %v1170
    %1204 = vst.msk [vmem:[%s5 + $0x40] sm:$0xff] %vm1195, %v1173
    %1205 = vst.msk [vmem:[%s5 + $0x48] sm:$0xff] %vm1195, %v1176
    %1206 = vst.msk [vmem:[%s5 + $0x50] sm:$0xff] %vm1195, %v1179
    %1207 = vst.msk [vmem:[%s5 + $0x58] sm:$0xff] %vm1195, %v1182
    %1208 = vst.msk [vmem:[%s5 + $0x60] sm:$0xff] %vm1195, %v1185
    %1209 = vst.msk [vmem:[%s5 + $0x68] sm:$0xff] %vm1195, %v1188
    %1210 = vst.msk [vmem:[%s5 + $0x70] sm:$0xff] %vm1195, %v1191
    %1211 = vst.msk [vmem:[%s5 + $0x78] sm:$0xff] %vm1195, %v1194
    %v1212 = vadd.s32 %v1149, 64
    %v1213 = vadd.s32 %v1152, 64
    %v1214 = vadd.s32 %v1155, 64
    %v1215 = vadd.s32 %v1158, 64
    %v1216 = vadd.s32 %v1161, 64
    %v1217 = vadd.s32 %v1164, 64
    %v1218 = vadd.s32 %v1167, 64
    %v1219 = vadd.s32 %v1170, 64
    %v1220 = vadd.s32 %v1173, 64
    %v1221 = vadd.s32 %v1176, 64
    %v1222 = vadd.s32 %v1179, 64
    %v1223 = vadd.s32 %v1182, 64
    %v1224 = vadd.s32 %v1185, 64
    %v1225 = vadd.s32 %v1188, 64
    %v1226 = vadd.s32 %v1191, 64
    %v1227 = vadd.s32 %v1194, 64
    %vm1228 = vcmp.eq.s32.totalorder %v39, %v1212
    %vm1229 = vcmp.eq.s32.totalorder %v39, %v1213
    %vm1230 = vcmp.eq.s32.totalorder %v39, %v1214
    %vm1231 = vcmp.eq.s32.totalorder %v39, %v1215
    %vm1232 = vcmp.eq.s32.totalorder %v39, %v1216
    %vm1233 = vcmp.eq.s32.totalorder %v39, %v1217
    %vm1234 = vcmp.eq.s32.totalorder %v39, %v1218
    %vm1235 = vcmp.eq.s32.totalorder %v39, %v1219
    %vm1236 = vcmp.eq.s32.totalorder %v39, %v1220
    %vm1237 = vcmp.eq.s32.totalorder %v39, %v1221
    %vm1238 = vcmp.eq.s32.totalorder %v39, %v1222
    %vm1239 = vcmp.eq.s32.totalorder %v39, %v1223
    %vm1240 = vcmp.eq.s32.totalorder %v39, %v1224
    %vm1241 = vcmp.eq.s32.totalorder %v39, %v1225
    %vm1242 = vcmp.eq.s32.totalorder %v39, %v1226
    %vm1243 = vcmp.eq.s32.totalorder %v39, %v1227
    %v1244 = vsel %vm1228, 1, 0
    %v1245 = vsel %vm1229, 1, 0
    %v1246 = vsel %vm1230, 1, 0
    %v1247 = vsel %vm1231, 1, 0
    %v1248 = vsel %vm1232, 1, 0
    %v1249 = vsel %vm1233, 1, 0
    %v1250 = vsel %vm1234, 1, 0
    %v1251 = vsel %vm1235, 1, 0
    %v1252 = vsel %vm1236, 1, 0
    %v1253 = vsel %vm1237, 1, 0
    %v1254 = vsel %vm1238, 1, 0
    %v1255 = vsel %vm1239, 1, 0
    %v1256 = vsel %vm1240, 1, 0
    %v1257 = vsel %vm1241, 1, 0
    %v1258 = vsel %vm1242, 1, 0
    %v1259 = vsel %vm1243, 1, 0
    %v1260 = vcvt.s32.f32 %v1244
    %v1261 = vcvt.s32.f32 %v1245
    %v1262 = vcvt.s32.f32 %v1246
    %v1263 = vcvt.s32.f32 %v1247
    %v1264 = vcvt.s32.f32 %v1248
    %v1265 = vcvt.s32.f32 %v1249
    %v1266 = vcvt.s32.f32 %v1250
    %v1267 = vcvt.s32.f32 %v1251
    %v1268 = vcvt.s32.f32 %v1252
    %v1269 = vcvt.s32.f32 %v1253
    %v1270 = vcvt.s32.f32 %v1254
    %v1271 = vcvt.s32.f32 %v1255
    %v1272 = vcvt.s32.f32 %v1256
    %v1273 = vcvt.s32.f32 %v1257
    %v1274 = vcvt.s32.f32 %v1258
    %v1275 = vcvt.s32.f32 %v1259
    %v1276 = vadd.f32 %v1067, %v1260
    %v1277 = vadd.f32 %v1068, %v1261
    %v1278 = vadd.f32 %v1069, %v1262
    %v1279 = vadd.f32 %v1070, %v1263
    %v1280 = vadd.f32 %v1071, %v1264
    %v1281 = vadd.f32 %v1072, %v1265
    %v1282 = vadd.f32 %v1073, %v1266
    %v1283 = vadd.f32 %v1074, %v1267
    %v1284 = vadd.f32 %v1075, %v1268
    %v1285 = vadd.f32 %v1076, %v1269
    %v1286 = vadd.f32 %v1077, %v1270
    %v1287 = vadd.f32 %v1078, %v1271
    %v1288 = vadd.f32 %v1079, %v1272
    %v1289 = vadd.f32 %v1080, %v1273
    %v1290 = vadd.f32 %v1081, %v1274
    %v1291 = vadd.f32 %v1082, %v1275
    %s1292 = scalar_lea.vmem %s2, 128
    %v1293 = vld [vmem:[%s1292] sm:$0xff]
    %v1294 = vld [vmem:[%s1292 + $0x8] sm:$0xff]
    %v1295 = vld [vmem:[%s1292 + $0x10] sm:$0xff]
    %v1296 = vld [vmem:[%s1292 + $0x18] sm:$0xff]
    %v1297 = vld [vmem:[%s1292 + $0x20] sm:$0xff]
    %v1298 = vld [vmem:[%s1292 + $0x28] sm:$0xff]
    %v1299 = vld [vmem:[%s1292 + $0x30] sm:$0xff]
    %v1300 = vld [vmem:[%s1292 + $0x38] sm:$0xff]
    %v1301 = vld [vmem:[%s1292 + $0x40] sm:$0xff]
    %v1302 = vld [vmem:[%s1292 + $0x48] sm:$0xff]
    %v1303 = vld [vmem:[%s1292 + $0x50] sm:$0xff]
    %v1304 = vld [vmem:[%s1292 + $0x58] sm:$0xff]
    %v1305 = vld [vmem:[%s1292 + $0x60] sm:$0xff]
    %v1306 = vld [vmem:[%s1292 + $0x68] sm:$0xff]
    %v1307 = vld [vmem:[%s1292 + $0x70] sm:$0xff]
    %v1308 = vld [vmem:[%s1292 + $0x78] sm:$0xff]
    %1309 = vmatpush.msra.mxu0 %v1308
    %1310 = vmatpush.msra.mxu0 %v1307
    %1311 = vmatpush.msra.mxu0 %v1306
    %1312 = vmatpush.msra.mxu0 %v1305
    %1313 = vmatpush.msra.mxu0 %v1304
    %1314 = vmatpush.msra.mxu0 %v1303
    %1315 = vmatpush.msra.mxu0 %v1302
    %1316 = vmatpush.msra.mxu0 %v1301
    %1317 = vmatpush.msra.mxu0 %v1300
    %1318 = vmatpush.msra.mxu0 %v1299
    %1319 = vmatpush.msra.mxu0 %v1298
    %1320 = vmatpush.msra.mxu0 %v1297
    %1321 = vmatpush.msra.mxu0 %v1296
    %1322 = vmatpush.msra.mxu0 %v1295
    %1323 = vmatpush.msra.mxu0 %v1294
    %1324 = vmatpush.msra.mxu0 %v1293
    %1325 = vmatmul.f32.gmra.mxu0 %v1276
    %v1326 = vpop.f32.mrf.mxu0
    %v1327 = vadd.f32 0.0, %v1326
    %1328 = vmatmul.f32.gmra.mxu0 %v1277
    %v1329 = vpop.f32.mrf.mxu0
    %v1330 = vadd.f32 0.0, %v1329
    %1331 = vmatmul.f32.gmra.mxu0 %v1278
    %v1332 = vpop.f32.mrf.mxu0
    %v1333 = vadd.f32 0.0, %v1332
    %1334 = vmatmul.f32.gmra.mxu0 %v1279
    %v1335 = vpop.f32.mrf.mxu0
    %v1336 = vadd.f32 0.0, %v1335
    %1337 = vmatmul.f32.gmra.mxu0 %v1280
    %v1338 = vpop.f32.mrf.mxu0
    %v1339 = vadd.f32 0.0, %v1338
    %1340 = vmatmul.f32.gmra.mxu0 %v1281
    %v1341 = vpop.f32.mrf.mxu0
    %v1342 = vadd.f32 0.0, %v1341
    %1343 = vmatmul.f32.gmra.mxu0 %v1282
    %v1344 = vpop.f32.mrf.mxu0
    %v1345 = vadd.f32 0.0, %v1344
    %1346 = vmatmul.f32.gmra.mxu0 %v1283
    %v1347 = vpop.f32.mrf.mxu0
    %v1348 = vadd.f32 0.0, %v1347
    %1349 = vmatmul.f32.gmra.mxu0 %v1284
    %v1350 = vpop.f32.mrf.mxu0
    %v1351 = vadd.f32 0.0, %v1350
    %1352 = vmatmul.f32.gmra.mxu0 %v1285
    %v1353 = vpop.f32.mrf.mxu0
    %v1354 = vadd.f32 0.0, %v1353
    %1355 = vmatmul.f32.gmra.mxu0 %v1286
    %v1356 = vpop.f32.mrf.mxu0
    %v1357 = vadd.f32 0.0, %v1356
    %1358 = vmatmul.f32.gmra.mxu0 %v1287
    %v1359 = vpop.f32.mrf.mxu0
    %v1360 = vadd.f32 0.0, %v1359
    %1361 = vmatmul.f32.gmra.mxu0 %v1288
    %v1362 = vpop.f32.mrf.mxu0
    %v1363 = vadd.f32 0.0, %v1362
    %1364 = vmatmul.f32.gmra.mxu0 %v1289
    %v1365 = vpop.f32.mrf.mxu0
    %v1366 = vadd.f32 0.0, %v1365
    %1367 = vmatmul.f32.gmra.mxu0 %v1290
    %v1368 = vpop.f32.mrf.mxu0
    %v1369 = vadd.f32 0.0, %v1368
    %1370 = vmatmul.f32.gmra.mxu0 %v1291
    %v1371 = vpop.f32.mrf.mxu0
    %v1372 = vadd.f32 0.0, %v1371
    %1373 = vdwg.mxu0
    %v1374 = vsub.f32 %v603, %v1327
    %v1375 = vsub.f32 %v604, %v1330
    %v1376 = vsub.f32 %v605, %v1333
    %v1377 = vsub.f32 %v606, %v1336
    %v1378 = vsub.f32 %v607, %v1339
    %v1379 = vsub.f32 %v608, %v1342
    %v1380 = vsub.f32 %v609, %v1345
    %v1381 = vsub.f32 %v610, %v1348
    %v1382 = vsub.f32 %v611, %v1351
    %v1383 = vsub.f32 %v612, %v1354
    %v1384 = vsub.f32 %v613, %v1357
    %v1385 = vsub.f32 %v614, %v1360
    %v1386 = vsub.f32 %v615, %v1363
    %v1387 = vsub.f32 %v616, %v1366
    %v1388 = vsub.f32 %v617, %v1369
    %v1389 = vsub.f32 %v618, %v1372
    %v1390 = vmul.f32 %v1374, %v1374
    %v1391 = vmul.f32 %v1375, %v1375
    %v1392 = vmul.f32 %v1376, %v1376
    %v1393 = vmul.f32 %v1377, %v1377
    %v1394 = vmul.f32 %v1378, %v1378
    %v1395 = vmul.f32 %v1379, %v1379
    %v1396 = vmul.f32 %v1380, %v1380
    %v1397 = vmul.f32 %v1381, %v1381
    %v1398 = vmul.f32 %v1382, %v1382
    %v1399 = vmul.f32 %v1383, %v1383
    %v1400 = vmul.f32 %v1384, %v1384
    %v1401 = vmul.f32 %v1385, %v1385
    %v1402 = vmul.f32 %v1386, %v1386
    %v1403 = vmul.f32 %v1387, %v1387
    %v1404 = vmul.f32 %v1388, %v1388
    %v1405 = vmul.f32 %v1389, %v1389
    %v1406 = vsel %vm635, %v1390, 0.0
    %v1407 = vsel %vm635, %v1391, 0.0
    %v1408 = vadd.f32 %v1406, %v1407
    %v1409 = vsel %vm635, %v1392, 0.0
    %v1410 = vadd.f32 %v1408, %v1409
    %v1411 = vsel %vm635, %v1393, 0.0
    %v1412 = vadd.f32 %v1410, %v1411
    %v1413 = vsel %vm635, %v1394, 0.0
    %v1414 = vadd.f32 %v1412, %v1413
    %v1415 = vsel %vm635, %v1395, 0.0
    %v1416 = vadd.f32 %v1414, %v1415
    %v1417 = vsel %vm635, %v1396, 0.0
    %v1418 = vadd.f32 %v1416, %v1417
    %v1419 = vsel %vm635, %v1397, 0.0
    %v1420 = vadd.f32 %v1418, %v1419
    %v1421 = vsel %vm635, %v1398, 0.0
    %v1422 = vadd.f32 %v1420, %v1421
    %v1423 = vsel %vm635, %v1399, 0.0
    %v1424 = vadd.f32 %v1422, %v1423
    %v1425 = vsel %vm635, %v1400, 0.0
    %v1426 = vadd.f32 %v1424, %v1425
    %v1427 = vsel %vm635, %v1401, 0.0
    %v1428 = vadd.f32 %v1426, %v1427
    %v1429 = vsel %vm635, %v1402, 0.0
    %v1430 = vadd.f32 %v1428, %v1429
    %v1431 = vsel %vm635, %v1403, 0.0
    %v1432 = vadd.f32 %v1430, %v1431
    %v1433 = vsel %vm635, %v1404, 0.0
    %v1434 = vadd.f32 %v1432, %v1433
    %v1435 = vsel %vm635, %v1405, 0.0
    %v1436 = vadd.f32 %v1434, %v1435
    %1437 = vadd.xlane.f32.xlu0 %v1436
    %v1438 = vpop.xlane.xlu0 %1437
    %v1439 = vrot.slane %v1438, 4
    %v1440 = vadd.f32 %v1438, %v1439
    %v1441 = vrot.slane %v1440, 2
    %v1442 = vadd.f32 %v1440, %v1441
    %v1443 = vrot.slane %v1442, 1
    %v1444 = vadd.f32 %v1442, %v1443
    %s1445 = vtos %v1444
    %vm1446 = vcmp.eq.s32.totalorder %v39, 2
    %vm1447 = vmand %vm676, %vm1446
    %v1448 = vsel %vm1447, 1, 0
    %v1449 = vcvt.s32.f32 %v1448
    %v1450 = vstv %s1445
    %v1451 = vmul.f32 %v1449, %v1450
    %v1452 = vadd.f32 %v794, %v1451
    %1469 = vrot.lane.b32.xlu0 %v1390, 96
    %v1470 = vpop.permute.xlu0 %1469
    %1471 = vrot.lane.b32.xlu0 %v1391, 96
    %v1472 = vpop.permute.xlu0 %1471
    %1473 = vrot.lane.b32.xlu0 %v1392, 96
    %v1474 = vpop.permute.xlu0 %1473
    %1475 = vrot.lane.b32.xlu0 %v1393, 96
    %v1476 = vpop.permute.xlu0 %1475
    %1477 = vrot.lane.b32.xlu0 %v1394, 96
    %v1478 = vpop.permute.xlu0 %1477
    %1479 = vrot.lane.b32.xlu0 %v1395, 96
    %v1480 = vpop.permute.xlu0 %1479
    %1481 = vrot.lane.b32.xlu0 %v1396, 96
    %v1482 = vpop.permute.xlu0 %1481
    %1483 = vrot.lane.b32.xlu0 %v1397, 96
    %v1484 = vpop.permute.xlu0 %1483
    %1485 = vrot.lane.b32.xlu0 %v1398, 96
    %v1486 = vpop.permute.xlu0 %1485
    %1487 = vrot.lane.b32.xlu0 %v1399, 96
    %v1488 = vpop.permute.xlu0 %1487
    %1489 = vrot.lane.b32.xlu0 %v1400, 96
    %v1490 = vpop.permute.xlu0 %1489
    %1491 = vrot.lane.b32.xlu0 %v1401, 96
    %v1492 = vpop.permute.xlu0 %1491
    %1493 = vrot.lane.b32.xlu0 %v1402, 96
    %v1494 = vpop.permute.xlu0 %1493
    %1495 = vrot.lane.b32.xlu0 %v1403, 96
    %v1496 = vpop.permute.xlu0 %1495
    %1497 = vrot.lane.b32.xlu0 %v1404, 96
    %v1498 = vpop.permute.xlu0 %1497
    %1499 = vrot.lane.b32.xlu0 %v1405, 96
    %v1500 = vpop.permute.xlu0 %1499
    %v1517 = vsel %vm635, %v1470, 0.0
    %v1518 = vsel %vm635, %v1472, 0.0
    %v1519 = vadd.f32 %v1517, %v1518
    %v1520 = vsel %vm635, %v1474, 0.0
    %v1521 = vadd.f32 %v1519, %v1520
    %v1522 = vsel %vm635, %v1476, 0.0
    %v1523 = vadd.f32 %v1521, %v1522
    %v1524 = vsel %vm635, %v1478, 0.0
    %v1525 = vadd.f32 %v1523, %v1524
    %v1526 = vsel %vm635, %v1480, 0.0
    %v1527 = vadd.f32 %v1525, %v1526
    %v1528 = vsel %vm635, %v1482, 0.0
    %v1529 = vadd.f32 %v1527, %v1528
    %v1530 = vsel %vm635, %v1484, 0.0
    %v1531 = vadd.f32 %v1529, %v1530
    %v1532 = vsel %vm635, %v1486, 0.0
    %v1533 = vadd.f32 %v1531, %v1532
    %v1534 = vsel %vm635, %v1488, 0.0
    %v1535 = vadd.f32 %v1533, %v1534
    %v1536 = vsel %vm635, %v1490, 0.0
    %v1537 = vadd.f32 %v1535, %v1536
    %v1538 = vsel %vm635, %v1492, 0.0
    %v1539 = vadd.f32 %v1537, %v1538
    %v1540 = vsel %vm635, %v1494, 0.0
    %v1541 = vadd.f32 %v1539, %v1540
    %v1542 = vsel %vm635, %v1496, 0.0
    %v1543 = vadd.f32 %v1541, %v1542
    %v1544 = vsel %vm635, %v1498, 0.0
    %v1545 = vadd.f32 %v1543, %v1544
    %v1546 = vsel %vm635, %v1500, 0.0
    %v1547 = vadd.f32 %v1545, %v1546
    %1548 = vadd.xlane.f32.xlu0 %v1547
    %v1549 = vpop.xlane.xlu0 %1548
    %v1550 = vrot.slane %v1549, 4
    %v1551 = vadd.f32 %v1549, %v1550
    %v1552 = vrot.slane %v1551, 2
    %v1553 = vadd.f32 %v1551, %v1552
    %v1554 = vrot.slane %v1553, 1
    %v1555 = vadd.f32 %v1553, %v1554
    %s1556 = vtos %v1555
    %vm1557 = vcmp.eq.s32.totalorder %v39, 3
    %vm1558 = vmand %vm676, %vm1557
    %v1559 = vsel %vm1558, 1, 0
    %v1560 = vcvt.s32.f32 %v1559
    %v1561 = vstv %s1556
    %v1562 = vmul.f32 %v1560, %v1561
    %v1563 = vadd.f32 %v1452, %v1562
    %v1564 = vsub.f32 %v22, %v1374
    %v1565 = vsub.f32 %v23, %v1375
    %v1566 = vsub.f32 %v24, %v1376
    %v1567 = vsub.f32 %v25, %v1377
    %v1568 = vsub.f32 %v26, %v1378
    %v1569 = vsub.f32 %v27, %v1379
    %v1570 = vsub.f32 %v28, %v1380
    %v1571 = vsub.f32 %v29, %v1381
    %v1572 = vsub.f32 %v30, %v1382
    %v1573 = vsub.f32 %v31, %v1383
    %v1574 = vsub.f32 %v32, %v1384
    %v1575 = vsub.f32 %v33, %v1385
    %v1576 = vsub.f32 %v34, %v1386
    %v1577 = vsub.f32 %v35, %v1387
    %v1578 = vsub.f32 %v36, %v1388
    %v1579 = vsub.f32 %v37, %v1389
    %1580 = vst.msk [vmem:[%s4] sm:$0xff] %vm50, %v1564
    %1581 = vst.msk [vmem:[%s4 + $0x8] sm:$0xff] %vm50, %v1565
    %1582 = vst.msk [vmem:[%s4 + $0x10] sm:$0xff] %vm50, %v1566
    %1583 = vst.msk [vmem:[%s4 + $0x18] sm:$0xff] %vm50, %v1567
    %1584 = vst.msk [vmem:[%s4 + $0x20] sm:$0xff] %vm50, %v1568
    %1585 = vst.msk [vmem:[%s4 + $0x28] sm:$0xff] %vm50, %v1569
    %1586 = vst.msk [vmem:[%s4 + $0x30] sm:$0xff] %vm50, %v1570
    %1587 = vst.msk [vmem:[%s4 + $0x38] sm:$0xff] %vm50, %v1571
    %1588 = vst.msk [vmem:[%s4 + $0x40] sm:$0xff] %vm50, %v1572
    %1589 = vst.msk [vmem:[%s4 + $0x48] sm:$0xff] %vm50, %v1573
    %1590 = vst.msk [vmem:[%s4 + $0x50] sm:$0xff] %vm50, %v1574
    %1591 = vst.msk [vmem:[%s4 + $0x58] sm:$0xff] %vm50, %v1575
    %1592 = vst.msk [vmem:[%s4 + $0x60] sm:$0xff] %vm50, %v1576
    %1593 = vst.msk [vmem:[%s4 + $0x68] sm:$0xff] %vm50, %v1577
    %1594 = vst.msk [vmem:[%s4 + $0x70] sm:$0xff] %vm50, %v1578
    %1595 = vst.msk [vmem:[%s4 + $0x78] sm:$0xff] %vm50, %v1579
    %1596 = vst [vmem:[#allocation2] sm:$0xff] %v1563
    // Predicated region
    $region18: #{tpu_custom_call.1} parent=1 // pred_check
      _
    $region19: #{tpu_custom_call.1} parent=1 // pred_check_branch
      %1598 = sbr.rel (0) target = $region21
    $region20: #{tpu_custom_call.1} parent=1 // pred_region
      _
    $region21: #{tpu_custom_call.1} parent=1 // pred_fallthru
      _
    // Predicated region
    $region22: #{tpu_custom_call.1} parent=1 // pred_check
      _
    $region23: #{tpu_custom_call.1} parent=1 // pred_check_branch
      %1600 = sbr.rel (0) target = $region25
    $region24: #{tpu_custom_call.1} parent=1 // pred_region
      _
    $region25: #{tpu_custom_call.1} parent=1 // pred_fallthru
      _
    // Predicated region
    $region26: #{tpu_custom_call.1} parent=1 // pred_check
      _
    $region27: #{tpu_custom_call.1} parent=1 // pred_check_branch
      %1602 = sbr.rel (0) target = $region29
    $region28: #{tpu_custom_call.1} parent=1 // pred_region
      _
    $region29: #{tpu_custom_call.1} parent=1 // pred_fallthru
      _
    // Predicated region
    $region30: #{tpu_custom_call.1} parent=1 // pred_check
      _
    $region31: #{tpu_custom_call.1} parent=1 // pred_check_branch
      %1604 = sbr.rel (0) target = $region33
    $region32: #{tpu_custom_call.1} parent=1 // pred_region
      %1606 = vsyncadd [#allocation3], 0
      %s1608 = sshll.u32 [#allocation2], 4
      %s1609 = int_to_ptr.vmem [resolvable:$true] %s1608
      %s1610 = sshll.u32 %s7, 4
      %s1611 = int_to_ptr.hbm [resolvable:$true] %s1610
      %1613 = dma.vmem_to_hbm [thread:$0]  %s1609, 128, %s1611, [#allocation3]
    $region33: #{tpu_custom_call.1} parent=1 // pred_fallthru
      _
    // Predicated region
    $region34: #{tpu_custom_call.1} parent=1 // pred_check
      _
    $region35: #{tpu_custom_call.1} parent=1 // pred_check_branch
      %1615 = sbr.rel (0) target = $region37
    $region36: #{tpu_custom_call.1} parent=1 // pred_region
      _
    $region37: #{tpu_custom_call.1} parent=1 // pred_fallthru
      _
    // Predicated region
    $region38: #{tpu_custom_call.1} parent=1 // pred_check
      _
    $region39: #{tpu_custom_call.1} parent=1 // pred_check_branch
      %1617 = sbr.rel (0) target = $region41
    $region40: #{tpu_custom_call.1} parent=1 // pred_region
      _
    $region41: #{tpu_custom_call.1} parent=1 // pred_fallthru
      _
    // Predicated region
    $region42: #{tpu_custom_call.1} parent=1 // pred_check
      _
    $region43: #{tpu_custom_call.1} parent=1 // pred_check_branch
      %1619 = sbr.rel (0) target = $region45
    $region44: #{tpu_custom_call.1} parent=1 // pred_region
      _
    $region45: #{tpu_custom_call.1} parent=1 // pred_fallthru
      _
    // Predicated region
    $region46: #{tpu_custom_call.1} parent=1 // pred_check
      _
    $region47: #{tpu_custom_call.1} parent=1 // pred_check_branch
      %1621 = sbr.rel (0) target = $region49
    $region48: #{tpu_custom_call.1} parent=1 // pred_region
      %1623 = dma.done [#allocation3], 128
    $region49: #{tpu_custom_call.1} parent=1 // pred_fallthru
      _
    %1624 = vsyncpa [#allocation3], 1

</llo_original>
